<compile_context>
chip_gen: v6e
topology: v6e:2x2x1
jax: 0.10.0
libtpu: 0.0.40
codegen_flags: <defaults>
</compile_context>

<pallas_src>
import jax
import jax.numpy as jnp
from jax.experimental import pallas as pl
from jax.experimental.pallas import tpu as pltpu


# ------------------------------ shape algebra --------------------------------

def _derive_shapes(hin, win):
    CIN, C1, C2 = 3, 16, 8
    K1, K2, K3 = 3, 3, 5
    h1, w1 = hin - K1 + 1, win - K1 + 1          # conv_regular output
    p1, q1 = h1 // 2, w1 // 2                    # after MaxPool2d(2)
    pad = K2 - 1
    wp = q1 + 2 * pad                            # width-zero-padded pool output
    h2, w2 = p1 + pad, q1 + pad                  # conv_transpose output
    h3, w3 = h2 - K3 + 1, w2 - K3 + 1            # first depthwise output
    h4, w4 = h3 - K3 + 1, w3 - K3 + 1            # second depthwise output
    assert min(h1, w1, p1, q1, h3, w3, h4, w4) > 0, "input spatial size too small"
    return dict(CIN=CIN, C1=C1, C2=C2, K1=K1, K2=K2, K3=K3, HIN=hin, WIN=win,
                H1=h1, W1=w1, P1=p1, Q1=q1, PAD=pad, WP=wp,
                H2=h2, W2=w2, H3=h3, W3=w3, H4=h4, W4=w4)


# -------------------------- offline weight folding ---------------------------

def _row_band_matrices(w_eff, p_rows, h_pad):
    """Fold the kernel-row taps (and the channel contraction) of a valid 2-D
    conv into one banded matrix per kernel column dj.

      w_eff : (Co, Ci, Kh, Kw) effective valid-conv kernel
      p_rows: stored input rows (H extent, unpadded)
      h_pad : implicit zero padding on the H axis (both sides)

    Returns (Kw, Hout*Co, p_rows*Ci) with Hout = p_rows + 2*h_pad - Kh + 1 so
    that   out2d = sum_dj M[dj] @ x2d[:, dj:dj+Wout]
    computes the conv with both arrays laid out as (row, channel)-major rows.
    """
    co, ci, kh, kw = w_eff.shape
    h_out = p_rows + 2 * h_pad - kh + 1
    mats = []
    for dj in range(kw):
        m = jnp.zeros((h_out, co, p_rows, ci), jnp.float32)
        for di in range(kh):
            band = jnp.eye(h_out, p_rows, k=di - h_pad, dtype=jnp.float32)
            m = m + band[:, None, :, None] * w_eff[:, :, di, dj][None, :, None, :]
        mats.append(m.reshape(h_out * co, p_rows * ci))
    return jnp.stack(mats)


def init_params(key):
    ks = jax.random.split(key, 8)
    return {
        "w1": jax.random.normal(ks[0], (16, 3, 3, 3), jnp.float32) * 0.1,  # Conv2d(3,16,3)
        "b1": jax.random.normal(ks[1], (16,), jnp.float32) * 0.1,
        "w2": jax.random.normal(ks[2], (16, 8, 3, 3), jnp.float32) * 0.1,  # ConvTranspose2d(16,8,3)
        "b2": jax.random.normal(ks[3], (8,), jnp.float32) * 0.1,
        "w3": jax.random.normal(ks[4], (8, 1, 5, 5), jnp.float32) * 0.1,   # Conv2d(8,8,5,groups=8)
        "b3": jax.random.normal(ks[5], (8,), jnp.float32) * 0.1,
        "w4": jax.random.normal(ks[6], (8, 8), jnp.float32) * 0.1,         # Linear(8,8)
        "b4": jax.random.normal(ks[7], (8,), jnp.float32) * 0.1,
    }


def prepare_params(params, hin=24, win=24):
    """One-time weight preprocessing into kernel-ready banded/selection matrices."""
    f32 = jnp.float32
    s = _derive_shapes(hin, win)
    w1 = params["w1"].astype(f32)                                   # (16, 3, 3, 3)
    w2 = params["w2"].astype(f32)                                   # (16, 8, 3, 3) (Cin,Cout,kh,kw)
    w3 = params["w3"].astype(f32)                                   # (8, 1, 5, 5)

    # x.transpose_(2,3) is folded into every downstream kernel (swap kh/kw).
    # Stride-1 ConvTranspose == valid conv of the (K-1)-padded input with the
    # spatially flipped, in/out-channel-swapped kernel.
    wc_eff = jnp.flip(w2, axis=(2, 3)).transpose(1, 0, 3, 2)        # (8, 16, 3, 3)
    w3_sw = w3[:, 0].transpose(0, 2, 1)                             # (8, 5, 5) spatially swapped
    w3_dense = jnp.eye(s["C2"], dtype=f32)[:, :, None, None] * w3_sw[:, None]  # groups=8 -> dense

    m1 = _row_band_matrices(w1, p_rows=s["HIN"], h_pad=0)           # (3, H1*C1, HIN*CIN)
    mc = _row_band_matrices(wc_eff, p_rows=s["P1"], h_pad=s["PAD"])  # (3, H2*C2, P1*C1)
    md1 = _row_band_matrices(w3_dense, p_rows=s["H2"], h_pad=0)     # (5, H3*C2, H2*C2)
    md2 = _row_band_matrices(w3_dense, p_rows=s["H3"], h_pad=0)     # (5, H4*C2, H3*C2)

    # MaxPool width-compaction selection matrix: [even | odd] columns (constant).
    w_idx = jnp.arange(s["W1"])[:, None]
    q_idx = jnp.arange(s["Q1"])[None, :]
    sel = jnp.concatenate([w_idx == 2 * q_idx, w_idx == 2 * q_idx + 1],
                          axis=1).astype(f32)                       # (W1, 2*Q1)

    def tile_bias(b, h):                                            # rows ordered (h, c)
        return jnp.tile(b.astype(f32).reshape(1, -1), (h, 1)).reshape(-1, 1)

    return {
        "m1": m1, "b1": tile_bias(params["b1"], s["H1"]),
        "sel": sel,
        "mc": mc, "b2": tile_bias(params["b2"], s["H2"]),
        "md1": md1, "b3": tile_bias(params["b3"], s["H3"]),
        "md2": md2,
        "w4": params["w4"].astype(f32),
        "b4": params["b4"].astype(f32).reshape(-1, 1),
    }


# ------------------------------ fused kernel ---------------------------------

def _make_kernel(s):
    C1, C2 = s["C1"], s["C2"]
    K1, K2, K3 = s["K1"], s["K2"], s["K3"]
    H1, W1, P1, Q1 = s["H1"], s["W1"], s["P1"], s["Q1"]
    PAD, WP = s["PAD"], s["WP"]
    W2, W3, W4 = s["W2"], s["W3"], s["W4"]
    H2, H3, H4 = s["H2"], s["H3"], s["H4"]

    def kernel(x_ref, m1_ref, b1_ref, sel_ref, mc_ref, b2_ref, md1_ref, b3_ref,
               md2_ref, w4_ref, b4_ref, o_ref, a1_ref, xp_ref, x2_ref, d1_ref):
        f32 = jnp.float32

        # --- conv_regular Conv2d(3,16,3): banded matmuls, VMEM-scratch accumulate
        a1_ref[...] = jnp.dot(m1_ref[0], x_ref[:, 0:W1], preferred_element_type=f32)
        for dj in range(1, K1):
            a1_ref[...] += jnp.dot(m1_ref[dj], x_ref[:, dj:dj + W1],
                                   preferred_element_type=f32)

        # --- bias + ReLU + MaxPool2d(2), fully batched
        #     (x.transpose_(2,3) is folded into the downstream weights)
        act = jnp.maximum(a1_ref[...] + b1_ref[...], 0.0)              # (H1*C1, W1)
        act = act[: 2 * P1 * C1].reshape(P1, 2 * C1, W1)
        rmax = jnp.maximum(act[:, :C1], act[:, C1:2 * C1])             # row-pair max
        rmax = rmax.reshape(P1 * C1, W1)
        pp = jnp.dot(rmax, sel_ref[...], preferred_element_type=f32)   # (P1*C1, 2*Q1)
        pooled = jnp.maximum(pp[:, :Q1], pp[:, Q1:2 * Q1])             # column-pair max

        xp_ref[...] = jnp.zeros((P1 * C1, WP), f32)                    # width zero-pad
        xp_ref[:, PAD:PAD + Q1] = pooled

        # --- y + z = 2 * conv_transpose(x) + bias  (shared weight): banded matmuls
        acc = jnp.dot(mc_ref[0], xp_ref[:, 0:W2], preferred_element_type=f32)
        for dj in range(1, K2):
            acc = acc + jnp.dot(mc_ref[dj], xp_ref[:, dj:dj + W2],
                                preferred_element_type=f32)
        x2_ref[...] = 2.0 * acc + b2_ref[...]                          # (H2*C2, W2)

        # --- conv_depthwise Conv2d(8,8,5,groups=8) + bias
        acc = jnp.dot(md1_ref[0], x2_ref[:, 0:W3], preferred_element_type=f32)
        for dj in range(1, K3):
            acc = acc + jnp.dot(md1_ref[dj], x2_ref[:, dj:dj + W3],
                                preferred_element_type=f32)
        d1_ref[...] = acc + b3_ref[...]                                # (H3*C2, W3)

        # --- F.conv2d(x, depthwise W, groups=8) (no bias), fused with x += 1
        acc = jnp.dot(md2_ref[0], d1_ref[:, 0:W4], preferred_element_type=f32)
        for dj in range(1, K3):
            acc = acc + jnp.dot(md2_ref[dj], d1_ref[:, dj:dj + W4],
                                preferred_element_type=f32)
        d2 = acc + 1.0                                                 # (H4*C2, W4)

        # --- adaptive_avg_pool2d(1) + Linear(8, 8)
        d2 = d2.reshape(H4, C2, W4)
        csum = jnp.sum(jnp.sum(d2, axis=0), axis=1, keepdims=True)     # (C2, 1)
        pooled_vec = csum * (1.0 / float(H4 * W4))
        o_ref[...] = jnp.dot(w4_ref[...], pooled_vec,
                             preferred_element_type=f32) + b4_ref[...]

    scratch = [
        pltpu.VMEM((H1 * C1, W1), jnp.float32),   # conv1 pre-activation accumulator
        pltpu.VMEM((P1 * C1, WP), jnp.float32),   # width-zero-padded pool output
        pltpu.VMEM((H2 * C2, W2), jnp.float32),   # conv_transpose (y + z) output
        pltpu.VMEM((H3 * C2, W3), jnp.float32),   # first depthwise output
    ]
    return kernel, scratch


def _full_block(shape):
    return pl.BlockSpec(shape, lambda i, _n=len(shape): (0,) * _n)


# --------------------------------- forward -----------------------------------

@jax.jit
def convolution_model_forward(x_nchw, prepped):
    x = x_nchw.astype(jnp.float32)
    assert x.shape[0] == 1, "torch model flattens into Linear(8,8); batch must be 1"
    _, cin, hin, win = x.shape
    s = _derive_shapes(hin, win)
    assert cin == s["CIN"]
    assert prepped["m1"].shape == (s["K1"], s["H1"] * s["C1"], s["HIN"] * s["CIN"])

    # (1, 3, H, W) -> (H*Cin, W): width lane-dense, rows ordered (row, channel).
    x2d = jnp.transpose(x[0], (1, 0, 2)).reshape(hin * cin, win)

    kernel, scratch = _make_kernel(s)
    operands = (x2d, prepped["m1"], prepped["b1"], prepped["sel"],
                prepped["mc"], prepped["b2"], prepped["md1"], prepped["b3"],
                prepped["md2"], prepped["w4"], prepped["b4"])

    out = pl.pallas_call(
        kernel,
        out_shape=jax.ShapeDtypeStruct((8, 1), jnp.float32),
        grid=(1,),
        in_specs=[_full_block(op.shape) for op in operands],
        out_specs=_full_block((8, 1)),
        scratch_shapes=scratch,
        compiler_params=pltpu.CompilerParams(dimension_semantics=("arbitrary",)),
    )(*operands)
    return out.reshape(8)


# --------------------- pure-JAX reference (torch semantics) ------------------

@jax.jit
def _reference_forward(x_nchw, params):
    f32 = jnp.float32
    x = x_nchw.astype(f32)[0]                                       # (3, H, W)
    w1, b1 = params["w1"].astype(f32), params["b1"].astype(f32)
    w2, b2 = params["w2"].astype(f32), params["b2"].astype(f32)
    w3, b3 = params["w3"].astype(f32), params["b3"].astype(f32)
    w4, b4 = params["w4"].astype(f32), params["b4"].astype(f32)

    def conv_valid(inp, w):
        co, ci, kh, kw = w.shape
        H, W = inp.shape[1] - kh + 1, inp.shape[2] - kw + 1
        out = jnp.zeros((co, H, W), f32)
        for di in range(kh):
            for dj in range(kw):
                out = out + jnp.einsum('oc,chw->ohw', w[:, :, di, dj],
                                       inp[:, di:di + H, dj:dj + W])
        return out

    a = jnp.maximum(conv_valid(x, w1) + b1[:, None, None], 0.0)
    a = jnp.transpose(a, (0, 2, 1))                                 # x.transpose_(2,3)
    C, H, W = a.shape
    P, Q = H // 2, W // 2
    a = a[:, :2 * P, :2 * Q].reshape(C, P, 2, Q, 2).max(axis=(2, 4))  # MaxPool2d(2)

    k = w2.shape[2]
    ap = jnp.pad(a, ((0, 0), (k - 1, k - 1), (k - 1, k - 1)))
    wt = jnp.flip(w2, axis=(2, 3)).transpose(1, 0, 2, 3)            # convT -> valid conv
    y = conv_valid(ap, wt) + b2[:, None, None]
    z = conv_valid(ap, wt)
    xx = y + z

    wd = w3[:, 0]

    def dwconv(inp, w):
        c, kh, kw = w.shape
        H, W = inp.shape[1] - kh + 1, inp.shape[2] - kw + 1
        out = jnp.zeros((c, H, W), f32)
        for di in range(kh):
            for dj in range(kw):
                out = out + w[:, di, dj][:, None, None] * inp[:, di:di + H, dj:dj + W]
        return out

    xx = dwconv(xx, wd) + b3[:, None, None]
    xx = dwconv(xx, wd)
    xx = xx + 1.0
    pooled = jnp.mean(xx, axis=(1, 2))                              # (8,)
    return w4 @ pooled + b4


if __name__ == "__main__":
    key = jax.random.PRNGKey(0)
    k_in, k_par = jax.random.split(key)
    # batch must be 1 (torch flatten feeds Linear(8,8)); spatial 24 keeps all convs valid
    x = jax.random.normal(k_in, (1, 3, 24, 24), jnp.float32)
    params = init_params(k_par)
    prepped = prepare_params(params, hin=24, win=24)

    result = convolution_model_forward(x, prepped)
    result = jax.block_until_ready(result)

    assert result.shape == (8,), result.shape
    assert bool(jnp.all(jnp.isfinite(result)))

    ref = jax.block_until_ready(_reference_forward(x, params))
    max_err = float(jnp.max(jnp.abs(result - ref)))
    assert max_err < 3e-2, f"kernel deviates from reference: max_err={max_err}"

    print("KERNEL_OK")
</pallas_src>

<mosaic_0001>
module attributes {stable_mosaic.version = 11 : i64} {
  func.func @kernel(%arg0: i32, %arg1: memref<72x24xf32, #tpu.memory_space<vmem>>, %arg2: memref<3x352x72xf32, #tpu.memory_space<vmem>>, %arg3: memref<352x1xf32, #tpu.memory_space<vmem>>, %arg4: memref<22x22xf32, #tpu.memory_space<vmem>>, %arg5: memref<3x104x176xf32, #tpu.memory_space<vmem>>, %arg6: memref<104x1xf32, #tpu.memory_space<vmem>>, %arg7: memref<5x72x104xf32, #tpu.memory_space<vmem>>, %arg8: memref<72x1xf32, #tpu.memory_space<vmem>>, %arg9: memref<5x40x72xf32, #tpu.memory_space<vmem>>, %arg10: memref<8x8xf32, #tpu.memory_space<vmem>>, %arg11: memref<8x1xf32, #tpu.memory_space<vmem>>, %arg12: memref<8x1xf32, #tpu.memory_space<vmem>>, %arg13: memref<352x22xf32, #tpu.memory_space<vmem>>, %arg14: memref<176x15xf32, #tpu.memory_space<vmem>>, %arg15: memref<104x13xf32, #tpu.memory_space<vmem>>, %arg16: memref<72x9xf32, #tpu.memory_space<vmem>>) attributes {dimension_semantics = [#tpu.dimension_semantics<arbitrary>], iteration_bounds = array<i64: 1>, scalar_prefetch = 0 : i64, scratch_operands = 4 : i64, tpu.core_type = #tpu.core_type<tc>, window_params = [{pipeline_mode = #tpu.pipeline_mode<synchronous>, transform_indices = @transform_0, window_bounds = array<i64: 72, 24>}, {pipeline_mode = #tpu.pipeline_mode<synchronous>, transform_indices = @transform_1, window_bounds = array<i64: 3, 352, 72>}, {pipeline_mode = #tpu.pipeline_mode<synchronous>, transform_indices = @transform_2, window_bounds = array<i64: 352, 1>}, {pipeline_mode = #tpu.pipeline_mode<synchronous>, transform_indices = @transform_3, window_bounds = array<i64: 22, 22>}, {pipeline_mode = #tpu.pipeline_mode<synchronous>, transform_indices = @transform_4, window_bounds = array<i64: 3, 104, 176>}, {pipeline_mode = #tpu.pipeline_mode<synchronous>, transform_indices = @transform_5, window_bounds = array<i64: 104, 1>}, {pipeline_mode = #tpu.pipeline_mode<synchronous>, transform_indices = @transform_6, window_bounds = array<i64: 5, 72, 104>}, {pipeline_mode = #tpu.pipeline_mode<synchronous>, transform_indices = @transform_7, window_bounds = array<i64: 72, 1>}, {pipeline_mode = #tpu.pipeline_mode<synchronous>, transform_indices = @transform_8, window_bounds = array<i64: 5, 40, 72>}, {pipeline_mode = #tpu.pipeline_mode<synchronous>, transform_indices = @transform_9, window_bounds = array<i64: 8, 8>}, {pipeline_mode = #tpu.pipeline_mode<synchronous>, transform_indices = @transform_10, window_bounds = array<i64: 8, 1>}, {pipeline_mode = #tpu.pipeline_mode<synchronous>, transform_indices = @transform_11, window_bounds = array<i64: 8, 1>}]} {
    %c0 = arith.constant 0 : index
    %c0_0 = arith.constant 0 : index
    %c0_1 = arith.constant 0 : index
    %0 = vector.load %arg2[%c0, %c0_0, %c0_1] : memref<3x352x72xf32, #tpu.memory_space<vmem>>, vector<1x352x72xf32>
    %1 = vector.shape_cast %0 : vector<1x352x72xf32> to vector<352x72xf32>
    %c0_2 = arith.constant 0 : index
    %c0_3 = arith.constant 0 : index
    %2 = vector.load %arg1[%c0_2, %c0_3] : memref<72x24xf32, #tpu.memory_space<vmem>>, vector<72x22xf32>
    %cst = arith.constant dense<0.000000e+00> : vector<352x22xf32>
    %3 = tpu.matmul %1, %2, %cst {dimension_numbers = #tpu.dot_dimension_numbers<[1], [0], [0], [1], [0, 0, 1, 1], [], []>} : vector<352x72xf32>, vector<72x22xf32>, vector<352x22xf32> -> vector<352x22xf32>
    %c0_4 = arith.constant 0 : index
    %c0_5 = arith.constant 0 : index
    %4 = vector.load %arg13[%c0_4, %c0_5] : memref<352x22xf32, #tpu.memory_space<vmem>>, vector<352x22xf32>
    tpu.vector_store %arg13[%c0_4, %c0_5], %3 {strides = array<i32>} : memref<352x22xf32, #tpu.memory_space<vmem>>, vector<352x22xf32>,
    %c0_6 = arith.constant 0 : index
    %c0_7 = arith.constant 0 : index
    %5 = vector.load %arg13[%c0_6, %c0_7] : memref<352x22xf32, #tpu.memory_space<vmem>>, vector<352x22xf32>
    %c1 = arith.constant 1 : index
    %c0_8 = arith.constant 0 : index
    %c0_9 = arith.constant 0 : index
    %6 = vector.load %arg2[%c1, %c0_8, %c0_9] : memref<3x352x72xf32, #tpu.memory_space<vmem>>, vector<1x352x72xf32>
    %7 = vector.shape_cast %6 : vector<1x352x72xf32> to vector<352x72xf32>
    %c0_10 = arith.constant 0 : index
    %c1_11 = arith.constant 1 : index
    %8 = vector.load %arg1[%c0_10, %c1_11] : memref<72x24xf32, #tpu.memory_space<vmem>>, vector<72x22xf32>
    %cst_12 = arith.constant dense<0.000000e+00> : vector<352x22xf32>
    %9 = tpu.matmul %7, %8, %cst_12 {dimension_numbers = #tpu.dot_dimension_numbers<[1], [0], [0], [1], [0, 0, 1, 1], [], []>} : vector<352x72xf32>, vector<72x22xf32>, vector<352x22xf32> -> vector<352x22xf32>
    %10 = arith.addf %5, %9 : vector<352x22xf32>
    %c0_13 = arith.constant 0 : index
    %c0_14 = arith.constant 0 : index
    %11 = vector.load %arg13[%c0_13, %c0_14] : memref<352x22xf32, #tpu.memory_space<vmem>>, vector<352x22xf32>
    tpu.vector_store %arg13[%c0_13, %c0_14], %10 {strides = array<i32>} : memref<352x22xf32, #tpu.memory_space<vmem>>, vector<352x22xf32>,
    %c0_15 = arith.constant 0 : index
    %c0_16 = arith.constant 0 : index
    %12 = vector.load %arg13[%c0_15, %c0_16] : memref<352x22xf32, #tpu.memory_space<vmem>>, vector<352x22xf32>
    %c2 = arith.constant 2 : index
    %c0_17 = arith.constant 0 : index
    %c0_18 = arith.constant 0 : index
    %13 = vector.load %arg2[%c2, %c0_17, %c0_18] : memref<3x352x72xf32, #tpu.memory_space<vmem>>, vector<1x352x72xf32>
    %14 = vector.shape_cast %13 : vector<1x352x72xf32> to vector<352x72xf32>
    %c0_19 = arith.constant 0 : index
    %c2_20 = arith.constant 2 : index
    %15 = vector.load %arg1[%c0_19, %c2_20] : memref<72x24xf32, #tpu.memory_space<vmem>>, vector<72x22xf32>
    %cst_21 = arith.constant dense<0.000000e+00> : vector<352x22xf32>
    %16 = tpu.matmul %14, %15, %cst_21 {dimension_numbers = #tpu.dot_dimension_numbers<[1], [0], [0], [1], [0, 0, 1, 1], [], []>} : vector<352x72xf32>, vector<72x22xf32>, vector<352x22xf32> -> vector<352x22xf32>
    %17 = arith.addf %12, %16 : vector<352x22xf32>
    %c0_22 = arith.constant 0 : index
    %c0_23 = arith.constant 0 : index
    %18 = vector.load %arg13[%c0_22, %c0_23] : memref<352x22xf32, #tpu.memory_space<vmem>>, vector<352x22xf32>
    tpu.vector_store %arg13[%c0_22, %c0_23], %17 {strides = array<i32>} : memref<352x22xf32, #tpu.memory_space<vmem>>, vector<352x22xf32>,
    %c0_24 = arith.constant 0 : index
    %c0_25 = arith.constant 0 : index
    %19 = vector.load %arg13[%c0_24, %c0_25] : memref<352x22xf32, #tpu.memory_space<vmem>>, vector<352x22xf32>
    %c0_26 = arith.constant 0 : index
    %c0_27 = arith.constant 0 : index
    %20 = vector.load %arg3[%c0_26, %c0_27] : memref<352x1xf32, #tpu.memory_space<vmem>>, vector<352x1xf32>
    %21 = vector.broadcast %20 : vector<352x1xf32> to vector<352x22xf32>
    %22 = arith.addf %19, %21 : vector<352x22xf32>
    %cst_28 = arith.constant 0.000000e+00 : f32
    %23 = vector.broadcast %cst_28 : f32 to vector<352x22xf32>
    %24 = arith.maximumf %22, %23 : vector<352x22xf32>
    %25 = vector.shape_cast %24 : vector<352x22xf32> to vector<11x32x22xf32>
    %26 = vector.extract_strided_slice %25 {offsets = [0, 0, 0], sizes = [11, 16, 22], strides = [1, 1, 1]} : vector<11x32x22xf32> to vector<11x16x22xf32>
    %27 = vector.extract_strided_slice %25 {offsets = [0, 16, 0], sizes = [11, 16, 22], strides = [1, 1, 1]} : vector<11x32x22xf32> to vector<11x16x22xf32>
    %28 = arith.maximumf %26, %27 : vector<11x16x22xf32>
    %29 = vector.shape_cast %28 : vector<11x16x22xf32> to vector<176x22xf32>
    %c0_29 = arith.constant 0 : index
    %c0_30 = arith.constant 0 : index
    %30 = vector.load %arg4[%c0_29, %c0_30] : memref<22x22xf32, #tpu.memory_space<vmem>>, vector<22x22xf32>
    %cst_31 = arith.constant dense<0.000000e+00> : vector<176x22xf32>
    %31 = tpu.matmul %29, %30, %cst_31 {dimension_numbers = #tpu.dot_dimension_numbers<[1], [0], [0], [1], [0, 0, 1, 1], [], []>} : vector<176x22xf32>, vector<22x22xf32>, vector<176x22xf32> -> vector<176x22xf32>
    %32 = vector.extract_strided_slice %31 {offsets = [0, 0], sizes = [176, 11], strides = [1, 1]} : vector<176x22xf32> to vector<176x11xf32>
    %33 = vector.extract_strided_slice %31 {offsets = [0, 11], sizes = [176, 11], strides = [1, 1]} : vector<176x22xf32> to vector<176x11xf32>
    %34 = arith.maximumf %32, %33 : vector<176x11xf32>
    %cst_32 = arith.constant 0.000000e+00 : f32
    %35 = vector.broadcast %cst_32 : f32 to vector<176x15xf32>
    %c0_33 = arith.constant 0 : index
    %c0_34 = arith.constant 0 : index
    %36 = vector.load %arg14[%c0_33, %c0_34] : memref<176x15xf32, #tpu.memory_space<vmem>>, vector<176x15xf32>
    tpu.vector_store %arg14[%c0_33, %c0_34], %35 {strides = array<i32>} : memref<176x15xf32, #tpu.memory_space<vmem>>, vector<176x15xf32>,
    %c0_35 = arith.constant 0 : index
    %c2_36 = arith.constant 2 : index
    %37 = vector.load %arg14[%c0_35, %c2_36] : memref<176x15xf32, #tpu.memory_space<vmem>>, vector<176x11xf32>
    tpu.vector_store %arg14[%c0_35, %c2_36], %34 {strides = array<i32>} : memref<176x15xf32, #tpu.memory_space<vmem>>, vector<176x11xf32>,
    %c0_37 = arith.constant 0 : index
    %c0_38 = arith.constant 0 : index
    %c0_39 = arith.constant 0 : index
    %38 = vector.load %arg5[%c0_37, %c0_38, %c0_39] : memref<3x104x176xf32, #tpu.memory_space<vmem>>, vector<1x104x176xf32>
    %39 = vector.shape_cast %38 : vector<1x104x176xf32> to vector<104x176xf32>
    %c0_40 = arith.constant 0 : index
    %c0_41 = arith.constant 0 : index
    %40 = vector.load %arg14[%c0_40, %c0_41] : memref<176x15xf32, #tpu.memory_space<vmem>>, vector<176x13xf32>
    %cst_42 = arith.constant dense<0.000000e+00> : vector<104x13xf32>
    %41 = tpu.matmul %39, %40, %cst_42 {dimension_numbers = #tpu.dot_dimension_numbers<[1], [0], [0], [1], [0, 0, 1, 1], [], []>} : vector<104x176xf32>, vector<176x13xf32>, vector<104x13xf32> -> vector<104x13xf32>
    %c1_43 = arith.constant 1 : index
    %c0_44 = arith.constant 0 : index
    %c0_45 = arith.constant 0 : index
    %42 = vector.load %arg5[%c1_43, %c0_44, %c0_45] : memref<3x104x176xf32, #tpu.memory_space<vmem>>, vector<1x104x176xf32>
    %43 = vector.shape_cast %42 : vector<1x104x176xf32> to vector<104x176xf32>
    %c0_46 = arith.constant 0 : index
    %c1_47 = arith.constant 1 : index
    %44 = vector.load %arg14[%c0_46, %c1_47] : memref<176x15xf32, #tpu.memory_space<vmem>>, vector<176x13xf32>
    %cst_48 = arith.constant dense<0.000000e+00> : vector<104x13xf32>
    %45 = tpu.matmul %43, %44, %cst_48 {dimension_numbers = #tpu.dot_dimension_numbers<[1], [0], [0], [1], [0, 0, 1, 1], [], []>} : vector<104x176xf32>, vector<176x13xf32>, vector<104x13xf32> -> vector<104x13xf32>
    %46 = arith.addf %41, %45 : vector<104x13xf32>
    %c2_49 = arith.constant 2 : index
    %c0_50 = arith.constant 0 : index
    %c0_51 = arith.constant 0 : index
    %47 = vector.load %arg5[%c2_49, %c0_50, %c0_51] : memref<3x104x176xf32, #tpu.memory_space<vmem>>, vector<1x104x176xf32>
    %48 = vector.shape_cast %47 : vector<1x104x176xf32> to vector<104x176xf32>
    %c0_52 = arith.constant 0 : index
    %c2_53 = arith.constant 2 : index
    %49 = vector.load %arg14[%c0_52, %c2_53] : memref<176x15xf32, #tpu.memory_space<vmem>>, vector<176x13xf32>
    %cst_54 = arith.constant dense<0.000000e+00> : vector<104x13xf32>
    %50 = tpu.matmul %48, %49, %cst_54 {dimension_numbers = #tpu.dot_dimension_numbers<[1], [0], [0], [1], [0, 0, 1, 1], [], []>} : vector<104x176xf32>, vector<176x13xf32>, vector<104x13xf32> -> vector<104x13xf32>
    %51 = arith.addf %46, %50 : vector<104x13xf32>
    %cst_55 = arith.constant 2.000000e+00 : f32
    %52 = vector.broadcast %cst_55 : f32 to vector<104x13xf32>
    %53 = arith.mulf %52, %51 : vector<104x13xf32>
    %c0_56 = arith.constant 0 : index
    %c0_57 = arith.constant 0 : index
    %54 = vector.load %arg6[%c0_56, %c0_57] : memref<104x1xf32, #tpu.memory_space<vmem>>, vector<104x1xf32>
    %55 = vector.broadcast %54 : vector<104x1xf32> to vector<104x13xf32>
    %56 = arith.addf %53, %55 : vector<104x13xf32>
    %c0_58 = arith.constant 0 : index
    %c0_59 = arith.constant 0 : index
    %57 = vector.load %arg15[%c0_58, %c0_59] : memref<104x13xf32, #tpu.memory_space<vmem>>, vector<104x13xf32>
    tpu.vector_store %arg15[%c0_58, %c0_59], %56 {strides = array<i32>} : memref<104x13xf32, #tpu.memory_space<vmem>>, vector<104x13xf32>,
    %c0_60 = arith.constant 0 : index
    %c0_61 = arith.constant 0 : index
    %c0_62 = arith.constant 0 : index
    %58 = vector.load %arg7[%c0_60, %c0_61, %c0_62] : memref<5x72x104xf32, #tpu.memory_space<vmem>>, vector<1x72x104xf32>
    %59 = vector.shape_cast %58 : vector<1x72x104xf32> to vector<72x104xf32>
    %c0_63 = arith.constant 0 : index
    %c0_64 = arith.constant 0 : index
    %60 = vector.load %arg15[%c0_63, %c0_64] : memref<104x13xf32, #tpu.memory_space<vmem>>, vector<104x9xf32>
    %cst_65 = arith.constant dense<0.000000e+00> : vector<72x9xf32>
    %61 = tpu.matmul %59, %60, %cst_65 {dimension_numbers = #tpu.dot_dimension_numbers<[1], [0], [0], [1], [0, 0, 1, 1], [], []>} : vector<72x104xf32>, vector<104x9xf32>, vector<72x9xf32> -> vector<72x9xf32>
    %c1_66 = arith.constant 1 : index
    %c0_67 = arith.constant 0 : index
    %c0_68 = arith.constant 0 : index
    %62 = vector.load %arg7[%c1_66, %c0_67, %c0_68] : memref<5x72x104xf32, #tpu.memory_space<vmem>>, vector<1x72x104xf32>
    %63 = vector.shape_cast %62 : vector<1x72x104xf32> to vector<72x104xf32>
    %c0_69 = arith.constant 0 : index
    %c1_70 = arith.constant 1 : index
    %64 = vector.load %arg15[%c0_69, %c1_70] : memref<104x13xf32, #tpu.memory_space<vmem>>, vector<104x9xf32>
    %cst_71 = arith.constant dense<0.000000e+00> : vector<72x9xf32>
    %65 = tpu.matmul %63, %64, %cst_71 {dimension_numbers = #tpu.dot_dimension_numbers<[1], [0], [0], [1], [0, 0, 1, 1], [], []>} : vector<72x104xf32>, vector<104x9xf32>, vector<72x9xf32> -> vector<72x9xf32>
    %66 = arith.addf %61, %65 : vector<72x9xf32>
    %c2_72 = arith.constant 2 : index
    %c0_73 = arith.constant 0 : index
    %c0_74 = arith.constant 0 : index
    %67 = vector.load %arg7[%c2_72, %c0_73, %c0_74] : memref<5x72x104xf32, #tpu.memory_space<vmem>>, vector<1x72x104xf32>
    %68 = vector.shape_cast %67 : vector<1x72x104xf32> to vector<72x104xf32>
    %c0_75 = arith.constant 0 : index
    %c2_76 = arith.constant 2 : index
    %69 = vector.load %arg15[%c0_75, %c2_76] : memref<104x13xf32, #tpu.memory_space<vmem>>, vector<104x9xf32>
    %cst_77 = arith.constant dense<0.000000e+00> : vector<72x9xf32>
    %70 = tpu.matmul %68, %69, %cst_77 {dimension_numbers = #tpu.dot_dimension_numbers<[1], [0], [0], [1], [0, 0, 1, 1], [], []>} : vector<72x104xf32>, vector<104x9xf32>, vector<72x9xf32> -> vector<72x9xf32>
    %71 = arith.addf %66, %70 : vector<72x9xf32>
    %c3 = arith.constant 3 : index
    %c0_78 = arith.constant 0 : index
    %c0_79 = arith.constant 0 : index
    %72 = vector.load %arg7[%c3, %c0_78, %c0_79] : memref<5x72x104xf32, #tpu.memory_space<vmem>>, vector<1x72x104xf32>
    %73 = vector.shape_cast %72 : vector<1x72x104xf32> to vector<72x104xf32>
    %c0_80 = arith.constant 0 : index
    %c3_81 = arith.constant 3 : index
    %74 = vector.load %arg15[%c0_80, %c3_81] : memref<104x13xf32, #tpu.memory_space<vmem>>, vector<104x9xf32>
    %cst_82 = arith.constant dense<0.000000e+00> : vector<72x9xf32>
    %75 = tpu.matmul %73, %74, %cst_82 {dimension_numbers = #tpu.dot_dimension_numbers<[1], [0], [0], [1], [0, 0, 1, 1], [], []>} : vector<72x104xf32>, vector<104x9xf32>, vector<72x9xf32> -> vector<72x9xf32>
    %76 = arith.addf %71, %75 : vector<72x9xf32>
    %c4 = arith.constant 4 : index
    %c0_83 = arith.constant 0 : index
    %c0_84 = arith.constant 0 : index
    %77 = vector.load %arg7[%c4, %c0_83, %c0_84] : memref<5x72x104xf32, #tpu.memory_space<vmem>>, vector<1x72x104xf32>
    %78 = vector.shape_cast %77 : vector<1x72x104xf32> to vector<72x104xf32>
    %c0_85 = arith.constant 0 : index
    %c4_86 = arith.constant 4 : index
    %79 = vector.load %arg15[%c0_85, %c4_86] : memref<104x13xf32, #tpu.memory_space<vmem>>, vector<104x9xf32>
    %cst_87 = arith.constant dense<0.000000e+00> : vector<72x9xf32>
    %80 = tpu.matmul %78, %79, %cst_87 {dimension_numbers = #tpu.dot_dimension_numbers<[1], [0], [0], [1], [0, 0, 1, 1], [], []>} : vector<72x104xf32>, vector<104x9xf32>, vector<72x9xf32> -> vector<72x9xf32>
    %81 = arith.addf %76, %80 : vector<72x9xf32>
    %c0_88 = arith.constant 0 : index
    %c0_89 = arith.constant 0 : index
    %82 = vector.load %arg8[%c0_88, %c0_89] : memref<72x1xf32, #tpu.memory_space<vmem>>, vector<72x1xf32>
    %83 = vector.broadcast %82 : vector<72x1xf32> to vector<72x9xf32>
    %84 = arith.addf %81, %83 : vector<72x9xf32>
    %c0_90 = arith.constant 0 : index
    %c0_91 = arith.constant 0 : index
    %85 = vector.load %arg16[%c0_90, %c0_91] : memref<72x9xf32, #tpu.memory_space<vmem>>, vector<72x9xf32>
    tpu.vector_store %arg16[%c0_90, %c0_91], %84 {strides = array<i32>} : memref<72x9xf32, #tpu.memory_space<vmem>>, vector<72x9xf32>,
    %c0_92 = arith.constant 0 : index
    %c0_93 = arith.constant 0 : index
    %c0_94 = arith.constant 0 : index
    %86 = vector.load %arg9[%c0_92, %c0_93, %c0_94] : memref<5x40x72xf32, #tpu.memory_space<vmem>>, vector<1x40x72xf32>
    %87 = vector.shape_cast %86 : vector<1x40x72xf32> to vector<40x72xf32>
    %c0_95 = arith.constant 0 : index
    %c0_96 = arith.constant 0 : index
    %88 = vector.load %arg16[%c0_95, %c0_96] : memref<72x9xf32, #tpu.memory_space<vmem>>, vector<72x5xf32>
    %cst_97 = arith.constant dense<0.000000e+00> : vector<40x5xf32>
    %89 = tpu.matmul %87, %88, %cst_97 {dimension_numbers = #tpu.dot_dimension_numbers<[1], [0], [0], [1], [0, 0, 1, 1], [], []>} : vector<40x72xf32>, vector<72x5xf32>, vector<40x5xf32> -> vector<40x5xf32>
    %c1_98 = arith.constant 1 : index
    %c0_99 = arith.constant 0 : index
    %c0_100 = arith.constant 0 : index
    %90 = vector.load %arg9[%c1_98, %c0_99, %c0_100] : memref<5x40x72xf32, #tpu.memory_space<vmem>>, vector<1x40x72xf32>
    %91 = vector.shape_cast %90 : vector<1x40x72xf32> to vector<40x72xf32>
    %c0_101 = arith.constant 0 : index
    %c1_102 = arith.constant 1 : index
    %92 = vector.load %arg16[%c0_101, %c1_102] : memref<72x9xf32, #tpu.memory_space<vmem>>, vector<72x5xf32>
    %cst_103 = arith.constant dense<0.000000e+00> : vector<40x5xf32>
    %93 = tpu.matmul %91, %92, %cst_103 {dimension_numbers = #tpu.dot_dimension_numbers<[1], [0], [0], [1], [0, 0, 1, 1], [], []>} : vector<40x72xf32>, vector<72x5xf32>, vector<40x5xf32> -> vector<40x5xf32>
    %94 = arith.addf %89, %93 : vector<40x5xf32>
    %c2_104 = arith.constant 2 : index
    %c0_105 = arith.constant 0 : index
    %c0_106 = arith.constant 0 : index
    %95 = vector.load %arg9[%c2_104, %c0_105, %c0_106] : memref<5x40x72xf32, #tpu.memory_space<vmem>>, vector<1x40x72xf32>
    %96 = vector.shape_cast %95 : vector<1x40x72xf32> to vector<40x72xf32>
    %c0_107 = arith.constant 0 : index
    %c2_108 = arith.constant 2 : index
    %97 = vector.load %arg16[%c0_107, %c2_108] : memref<72x9xf32, #tpu.memory_space<vmem>>, vector<72x5xf32>
    %cst_109 = arith.constant dense<0.000000e+00> : vector<40x5xf32>
    %98 = tpu.matmul %96, %97, %cst_109 {dimension_numbers = #tpu.dot_dimension_numbers<[1], [0], [0], [1], [0, 0, 1, 1], [], []>} : vector<40x72xf32>, vector<72x5xf32>, vector<40x5xf32> -> vector<40x5xf32>
    %99 = arith.addf %94, %98 : vector<40x5xf32>
    %c3_110 = arith.constant 3 : index
    %c0_111 = arith.constant 0 : index
    %c0_112 = arith.constant 0 : index
    %100 = vector.load %arg9[%c3_110, %c0_111, %c0_112] : memref<5x40x72xf32, #tpu.memory_space<vmem>>, vector<1x40x72xf32>
    %101 = vector.shape_cast %100 : vector<1x40x72xf32> to vector<40x72xf32>
    %c0_113 = arith.constant 0 : index
    %c3_114 = arith.constant 3 : index
    %102 = vector.load %arg16[%c0_113, %c3_114] : memref<72x9xf32, #tpu.memory_space<vmem>>, vector<72x5xf32>
    %cst_115 = arith.constant dense<0.000000e+00> : vector<40x5xf32>
    %103 = tpu.matmul %101, %102, %cst_115 {dimension_numbers = #tpu.dot_dimension_numbers<[1], [0], [0], [1], [0, 0, 1, 1], [], []>} : vector<40x72xf32>, vector<72x5xf32>, vector<40x5xf32> -> vector<40x5xf32>
    %104 = arith.addf %99, %103 : vector<40x5xf32>
    %c4_116 = arith.constant 4 : index
    %c0_117 = arith.constant 0 : index
    %c0_118 = arith.constant 0 : index
    %105 = vector.load %arg9[%c4_116, %c0_117, %c0_118] : memref<5x40x72xf32, #tpu.memory_space<vmem>>, vector<1x40x72xf32>
    %106 = vector.shape_cast %105 : vector<1x40x72xf32> to vector<40x72xf32>
    %c0_119 = arith.constant 0 : index
    %c4_120 = arith.constant 4 : index
    %107 = vector.load %arg16[%c0_119, %c4_120] : memref<72x9xf32, #tpu.memory_space<vmem>>, vector<72x5xf32>
    %cst_121 = arith.constant dense<0.000000e+00> : vector<40x5xf32>
    %108 = tpu.matmul %106, %107, %cst_121 {dimension_numbers = #tpu.dot_dimension_numbers<[1], [0], [0], [1], [0, 0, 1, 1], [], []>} : vector<40x72xf32>, vector<72x5xf32>, vector<40x5xf32> -> vector<40x5xf32>
    %109 = arith.addf %104, %108 : vector<40x5xf32>
    %cst_122 = arith.constant 1.000000e+00 : f32
    %110 = vector.broadcast %cst_122 : f32 to vector<40x5xf32>
    %111 = arith.addf %109, %110 : vector<40x5xf32>
    %112 = vector.shape_cast %111 : vector<40x5xf32> to vector<5x8x5xf32>
    %cst_123 = arith.constant dense<0.000000e+00> : vector<8x5xf32>
    %113 = vector.multi_reduction <add>, %112, %cst_123 [0] : vector<5x8x5xf32> to vector<8x5xf32>
    %cst_124 = arith.constant dense<0.000000e+00> : vector<8xf32>
    %114 = vector.multi_reduction <add>, %113, %cst_124 [1] : vector<8x5xf32> to vector<8xf32>
    %115 = vector.shape_cast %114 : vector<8xf32> to vector<8x1xf32>
    %cst_125 = arith.constant 4.000000e-02 : f32
    %116 = vector.broadcast %cst_125 : f32 to vector<8x1xf32>
    %117 = arith.mulf %115, %116 : vector<8x1xf32>
    %c0_126 = arith.constant 0 : index
    %c0_127 = arith.constant 0 : index
    %118 = vector.load %arg10[%c0_126, %c0_127] : memref<8x8xf32, #tpu.memory_space<vmem>>, vector<8x8xf32>
    %cst_128 = arith.constant dense<0.000000e+00> : vector<8x1xf32>
    %119 = tpu.matmul %118, %117, %cst_128 {dimension_numbers = #tpu.dot_dimension_numbers<[1], [0], [0], [1], [0, 0, 1, 1], [], []>} : vector<8x8xf32>, vector<8x1xf32>, vector<8x1xf32> -> vector<8x1xf32>
    %c0_129 = arith.constant 0 : index
    %c0_130 = arith.constant 0 : index
    %120 = vector.load %arg11[%c0_129, %c0_130] : memref<8x1xf32, #tpu.memory_space<vmem>>, vector<8x1xf32>
    %121 = arith.addf %119, %120 : vector<8x1xf32>
    %c0_131 = arith.constant 0 : index
    %c0_132 = arith.constant 0 : index
    %122 = vector.load %arg12[%c0_131, %c0_132] : memref<8x1xf32, #tpu.memory_space<vmem>>, vector<8x1xf32>
    tpu.vector_store %arg12[%c0_131, %c0_132], %121 {strides = array<i32>} : memref<8x1xf32, #tpu.memory_space<vmem>>, vector<8x1xf32>,
    return
  }
  func.func @transform_0(%arg0: i32) -> (i32, i32) {
    %c0_i32 = arith.constant 0 : i32
    %c0_i32_0 = arith.constant 0 : i32
    %c0_i32_1 = arith.constant 0 : i32
    return %c0_i32, %c0_i32_0 : i32, i32
  }
  func.func @transform_1(%arg0: i32) -> (i32, i32, i32) {
    %c0_i32 = arith.constant 0 : i32
    %c0_i32_0 = arith.constant 0 : i32
    %c0_i32_1 = arith.constant 0 : i32
    %c0_i32_2 = arith.constant 0 : i32
    return %c0_i32, %c0_i32_0, %c0_i32_1 : i32, i32, i32
  }
  func.func @transform_2(%arg0: i32) -> (i32, i32) {
    %c0_i32 = arith.constant 0 : i32
    %c0_i32_0 = arith.constant 0 : i32
    %c0_i32_1 = arith.constant 0 : i32
    return %c0_i32, %c0_i32_0 : i32, i32
  }
  func.func @transform_3(%arg0: i32) -> (i32, i32) {
    %c0_i32 = arith.constant 0 : i32
    %c0_i32_0 = arith.constant 0 : i32
    %c0_i32_1 = arith.constant 0 : i32
    return %c0_i32, %c0_i32_0 : i32, i32
  }
  func.func @transform_4(%arg0: i32) -> (i32, i32, i32) {
    %c0_i32 = arith.constant 0 : i32
    %c0_i32_0 = arith.constant 0 : i32
    %c0_i32_1 = arith.constant 0 : i32
    %c0_i32_2 = arith.constant 0 : i32
    return %c0_i32, %c0_i32_0, %c0_i32_1 : i32, i32, i32
  }
  func.func @transform_5(%arg0: i32) -> (i32, i32) {
    %c0_i32 = arith.constant 0 : i32
    %c0_i32_0 = arith.constant 0 : i32
    %c0_i32_1 = arith.constant 0 : i32
    return %c0_i32, %c0_i32_0 : i32, i32
  }
  func.func @transform_6(%arg0: i32) -> (i32, i32, i32) {
    %c0_i32 = arith.constant 0 : i32
    %c0_i32_0 = arith.constant 0 : i32
    %c0_i32_1 = arith.constant 0 : i32
    %c0_i32_2 = arith.constant 0 : i32
    return %c0_i32, %c0_i32_0, %c0_i32_1 : i32, i32, i32
  }
  func.func @transform_7(%arg0: i32) -> (i32, i32) {
    %c0_i32 = arith.constant 0 : i32
    %c0_i32_0 = arith.constant 0 : i32
    %c0_i32_1 = arith.constant 0 : i32
    return %c0_i32, %c0_i32_0 : i32, i32
  }
  func.func @transform_8(%arg0: i32) -> (i32, i32, i32) {
    %c0_i32 = arith.constant 0 : i32
    %c0_i32_0 = arith.constant 0 : i32
    %c0_i32_1 = arith.constant 0 : i32
    %c0_i32_2 = arith.constant 0 : i32
    return %c0_i32, %c0_i32_0, %c0_i32_1 : i32, i32, i32
  }
  func.func @transform_9(%arg0: i32) -> (i32, i32) {
    %c0_i32 = arith.constant 0 : i32
    %c0_i32_0 = arith.constant 0 : i32
    %c0_i32_1 = arith.constant 0 : i32
    return %c0_i32, %c0_i32_0 : i32, i32
  }
  func.func @transform_10(%arg0: i32) -> (i32, i32) {
    %c0_i32 = arith.constant 0 : i32
    %c0_i32_0 = arith.constant 0 : i32
    %c0_i32_1 = arith.constant 0 : i32
    return %c0_i32, %c0_i32_0 : i32, i32
  }
  func.func @transform_11(%arg0: i32) -> (i32, i32) {
    %c0_i32 = arith.constant 0 : i32
    %c0_i32_0 = arith.constant 0 : i32
    %c0_i32_1 = arith.constant 0 : i32
    return %c0_i32, %c0_i32_0 : i32, i32
  }
}

</mosaic_0001>

<llo_original>
// kernel: convolution_model_forward.1
$region0: #{convolution_model_forward.1}
  #allocation0 [shape = 'u32[]', space=smem, size = 0x4, offset = 0x4, fixed_abs, tag = 'smem constant byte address 0x4 - core index']
  #allocation1 [shape = 'u32[144,128]{1,0:T(1,128)}', space=vmem, size = 0x12000, scoped, tag = 'internal scratch']
  #allocation2 [shape = 'f32[352,22]{1,0:T(8,128)}', space=vmem, size = 0x2c000, scoped, tag = 'scratch operand']
  #allocation3 [shape = 'f32[176,15]{1,0:T(8,128)}', space=vmem, size = 0x16000, scoped, tag = 'scratch operand']
  #allocation4 [shape = 'f32[104,13]{1,0:T(8,128)}', space=vmem, size = 0xd000, scoped, tag = 'scratch operand']
  #allocation5 [shape = 'f32[72,9]{1,0:T(8,128)}', space=vmem, size = 0x9000, scoped, tag = 'scratch operand']
  %s0 = inlined_call_operand.vmem [shape: f32[72,24], index: 0, kind: input, shape index: {}]
  %s1 = inlined_call_operand.vmem [shape: f32[3,352,72], index: 1, kind: input, shape index: {}]
  %s2 = inlined_call_operand.vmem [shape: f32[352,1], index: 2, kind: input, shape index: {}]
  %s3 = inlined_call_operand.vmem [shape: f32[22,22], index: 3, kind: input, shape index: {}]
  %s4 = inlined_call_operand.vmem [shape: f32[3,104,176], index: 4, kind: input, shape index: {}]
  %s5 = inlined_call_operand.vmem [shape: f32[104,1], index: 5, kind: input, shape index: {}]
  %s6 = inlined_call_operand.vmem [shape: f32[5,72,104], index: 6, kind: input, shape index: {}]
  %s7 = inlined_call_operand.vmem [shape: f32[72,1], index: 7, kind: input, shape index: {}]
  %s8 = inlined_call_operand.vmem [shape: f32[5,40,72], index: 8, kind: input, shape index: {}]
  %s9 = inlined_call_operand.vmem [shape: f32[8,8], index: 9, kind: input, shape index: {}]
  %s10 = inlined_call_operand.vmem [shape: f32[8,1], index: 10, kind: input, shape index: {}]
  %s11 = inlined_call_operand.vmem [shape: f32[8,1], index: 11, kind: output, shape index: {}]
  %s12 = sld [smem:[#allocation0]]
  $region54: #{convolution_model_forward.1} parent=0
    _
  %s14 = ssub.s32 1, %s12
  %s15 = scalar_select 0, %s14, %s12
  // Predicated region
  $region2: #{convolution_model_forward.1} parent=0 // pred_check
    _
  $region3: #{convolution_model_forward.1} parent=0 // pred_check_branch
    %17 = sbr.rel (0) target = $region5
  $region4: #{convolution_model_forward.1} parent=0 // pred_region
    _
  $region5: #{convolution_model_forward.1} parent=0 // pred_fallthru
    _
  // Predicated region
  $region6: #{convolution_model_forward.1} parent=0 // pred_check
    _
  $region7: #{convolution_model_forward.1} parent=0 // pred_check_branch
    %19 = sbr.rel (0) target = $region9
  $region8: #{convolution_model_forward.1} parent=0 // pred_region
    _
  $region9: #{convolution_model_forward.1} parent=0 // pred_fallthru
    _
  // Predicated region
  $region10: #{convolution_model_forward.1} parent=0 // pred_check
    _
  $region11: #{convolution_model_forward.1} parent=0 // pred_check_branch
    %21 = sbr.rel (0) target = $region13
  $region12: #{convolution_model_forward.1} parent=0 // pred_region
    _
  $region13: #{convolution_model_forward.1} parent=0 // pred_fallthru
    _
  // Predicated region
  $region14: #{convolution_model_forward.1} parent=0 // pred_check
    _
  $region15: #{convolution_model_forward.1} parent=0 // pred_check_branch
    %23 = sbr.rel (0) target = $region17
  $region16: #{convolution_model_forward.1} parent=0 // pred_region
    _
  $region17: #{convolution_model_forward.1} parent=0 // pred_fallthru
    _
  // Predicated region
  $region18: #{convolution_model_forward.1} parent=0 // pred_check
    _
  $region19: #{convolution_model_forward.1} parent=0 // pred_check_branch
    %25 = sbr.rel (0) target = $region21
  $region20: #{convolution_model_forward.1} parent=0 // pred_region
    _
  $region21: #{convolution_model_forward.1} parent=0 // pred_fallthru
    _
  // Predicated region
  $region22: #{convolution_model_forward.1} parent=0 // pred_check
    _
  $region23: #{convolution_model_forward.1} parent=0 // pred_check_branch
    %27 = sbr.rel (0) target = $region25
  $region24: #{convolution_model_forward.1} parent=0 // pred_region
    _
  $region25: #{convolution_model_forward.1} parent=0 // pred_fallthru
    _
  // Predicated region
  $region26: #{convolution_model_forward.1} parent=0 // pred_check
    _
  $region27: #{convolution_model_forward.1} parent=0 // pred_check_branch
    %29 = sbr.rel (0) target = $region29
  $region28: #{convolution_model_forward.1} parent=0 // pred_region
    _
  $region29: #{convolution_model_forward.1} parent=0 // pred_fallthru
    _
  // Predicated region
  $region30: #{convolution_model_forward.1} parent=0 // pred_check
    _
  $region31: #{convolution_model_forward.1} parent=0 // pred_check_branch
    %31 = sbr.rel (0) target = $region33
  $region32: #{convolution_model_forward.1} parent=0 // pred_region
    _
  $region33: #{convolution_model_forward.1} parent=0 // pred_fallthru
    _
  // Predicated region
  $region34: #{convolution_model_forward.1} parent=0 // pred_check
    _
  $region35: #{convolution_model_forward.1} parent=0 // pred_check_branch
    %33 = sbr.rel (0) target = $region37
  $region36: #{convolution_model_forward.1} parent=0 // pred_region
    _
  $region37: #{convolution_model_forward.1} parent=0 // pred_fallthru
    _
  // Predicated region
  $region38: #{convolution_model_forward.1} parent=0 // pred_check
    _
  $region39: #{convolution_model_forward.1} parent=0 // pred_check_branch
    %35 = sbr.rel (0) target = $region41
  $region40: #{convolution_model_forward.1} parent=0 // pred_region
    _
  $region41: #{convolution_model_forward.1} parent=0 // pred_fallthru
    _
  // Predicated region
  $region42: #{convolution_model_forward.1} parent=0 // pred_check
    _
  $region43: #{convolution_model_forward.1} parent=0 // pred_check_branch
    %37 = sbr.rel (0) target = $region45
  $region44: #{convolution_model_forward.1} parent=0 // pred_region
    _
  $region45: #{convolution_model_forward.1} parent=0 // pred_fallthru
    _
  %v38 = vld [vmem:[%s1] sm:$0xff]
  %v39 = vld [vmem:[%s1 + $0x8] sm:$0xff]
  %v40 = vld [vmem:[%s1 + $0x10] sm:$0xff]
  %v41 = vld [vmem:[%s1 + $0x18] sm:$0xff]
  %v42 = vld [vmem:[%s1 + $0x20] sm:$0xff]
  %v43 = vld [vmem:[%s1 + $0x28] sm:$0xff]
  %v44 = vld [vmem:[%s1 + $0x30] sm:$0xff]
  %v45 = vld [vmem:[%s1 + $0x38] sm:$0xff]
  %v46 = vld [vmem:[%s1 + $0x40] sm:$0xff]
  %v47 = vld [vmem:[%s1 + $0x48] sm:$0xff]
  %v48 = vld [vmem:[%s1 + $0x50] sm:$0xff]
  %v49 = vld [vmem:[%s1 + $0x58] sm:$0xff]
  %v50 = vld [vmem:[%s1 + $0x60] sm:$0xff]
  %v51 = vld [vmem:[%s1 + $0x68] sm:$0xff]
  %v52 = vld [vmem:[%s1 + $0x70] sm:$0xff]
  %v53 = vld [vmem:[%s1 + $0x78] sm:$0xff]
  %v54 = vld [vmem:[%s1 + $0x80] sm:$0xff]
  %v55 = vld [vmem:[%s1 + $0x88] sm:$0xff]
  %v56 = vld [vmem:[%s1 + $0x90] sm:$0xff]
  %v57 = vld [vmem:[%s1 + $0x98] sm:$0xff]
  %v58 = vld [vmem:[%s1 + $0xa0] sm:$0xff]
  %v59 = vld [vmem:[%s1 + $0xa8] sm:$0xff]
  %v60 = vld [vmem:[%s1 + $0xb0] sm:$0xff]
  %v61 = vld [vmem:[%s1 + $0xb8] sm:$0xff]
  %v62 = vld [vmem:[%s1 + $0xc0] sm:$0xff]
  %v63 = vld [vmem:[%s1 + $0xc8] sm:$0xff]
  %v64 = vld [vmem:[%s1 + $0xd0] sm:$0xff]
  %v65 = vld [vmem:[%s1 + $0xd8] sm:$0xff]
  %v66 = vld [vmem:[%s1 + $0xe0] sm:$0xff]
  %v67 = vld [vmem:[%s1 + $0xe8] sm:$0xff]
  %v68 = vld [vmem:[%s1 + $0xf0] sm:$0xff]
  %v69 = vld [vmem:[%s1 + $0xf8] sm:$0xff]
  %v70 = vld [vmem:[%s1 + $0x100] sm:$0xff]
  %v71 = vld [vmem:[%s1 + $0x108] sm:$0xff]
  %v72 = vld [vmem:[%s1 + $0x110] sm:$0xff]
  %v73 = vld [vmem:[%s1 + $0x118] sm:$0xff]
  %v74 = vld [vmem:[%s1 + $0x120] sm:$0xff]
  %v75 = vld [vmem:[%s1 + $0x128] sm:$0xff]
  %v76 = vld [vmem:[%s1 + $0x130] sm:$0xff]
  %v77 = vld [vmem:[%s1 + $0x138] sm:$0xff]
  %v78 = vld [vmem:[%s1 + $0x140] sm:$0xff]
  %v79 = vld [vmem:[%s1 + $0x148] sm:$0xff]
  %v80 = vld [vmem:[%s1 + $0x150] sm:$0xff]
  %v81 = vld [vmem:[%s1 + $0x158] sm:$0xff]
  %v82 = vld [vmem:[%s0] sm:$0xff]
  %v83 = vld [vmem:[%s0 + $0x8] sm:$0xff]
  %v84 = vld [vmem:[%s0 + $0x10] sm:$0xff]
  %v85 = vld [vmem:[%s0 + $0x18] sm:$0xff]
  %v86 = vld [vmem:[%s0 + $0x20] sm:$0xff]
  %v87 = vld [vmem:[%s0 + $0x28] sm:$0xff]
  %v88 = vld [vmem:[%s0 + $0x30] sm:$0xff]
  %v89 = vld [vmem:[%s0 + $0x38] sm:$0xff]
  %v90 = vld [vmem:[%s0 + $0x40] sm:$0xff]
  %vm91 = vcmask 588800
  %v93 = vsel %vm91, %v38, 0
  %v96 = vsel %vm91, %v39, 0
  %v99 = vsel %vm91, %v40, 0
  %v102 = vsel %vm91, %v41, 0
  %v105 = vsel %vm91, %v42, 0
  %v108 = vsel %vm91, %v43, 0
  %v111 = vsel %vm91, %v44, 0
  %v114 = vsel %vm91, %v45, 0
  %v117 = vsel %vm91, %v46, 0
  %v120 = vsel %vm91, %v47, 0
  %v123 = vsel %vm91, %v48, 0
  %v126 = vsel %vm91, %v49, 0
  %v129 = vsel %vm91, %v50, 0
  %v132 = vsel %vm91, %v51, 0
  %v135 = vsel %vm91, %v52, 0
  %v138 = vsel %vm91, %v53, 0
  %v141 = vsel %vm91, %v54, 0
  %v144 = vsel %vm91, %v55, 0
  %v147 = vsel %vm91, %v56, 0
  %v150 = vsel %vm91, %v57, 0
  %v153 = vsel %vm91, %v58, 0
  %v156 = vsel %vm91, %v59, 0
  %v159 = vsel %vm91, %v60, 0
  %v162 = vsel %vm91, %v61, 0
  %v165 = vsel %vm91, %v62, 0
  %v168 = vsel %vm91, %v63, 0
  %v171 = vsel %vm91, %v64, 0
  %v174 = vsel %vm91, %v65, 0
  %v177 = vsel %vm91, %v66, 0
  %v180 = vsel %vm91, %v67, 0
  %v183 = vsel %vm91, %v68, 0
  %v186 = vsel %vm91, %v69, 0
  %v189 = vsel %vm91, %v70, 0
  %v192 = vsel %vm91, %v71, 0
  %v195 = vsel %vm91, %v72, 0
  %v198 = vsel %vm91, %v73, 0
  %v201 = vsel %vm91, %v74, 0
  %v204 = vsel %vm91, %v75, 0
  %v207 = vsel %vm91, %v76, 0
  %v210 = vsel %vm91, %v77, 0
  %v213 = vsel %vm91, %v78, 0
  %v216 = vsel %vm91, %v79, 0
  %v219 = vsel %vm91, %v80, 0
  %v222 = vsel %vm91, %v81, 0
  %224 = vmatprep.subr.mxu0 0.0
  %225 = vmatpush1.msra.mxu0 0.0
  %226 = vmatprep.subr.mxu0 0.0
  %227 = vmatpush1.msra.mxu0 0.0
  %228 = vmatprep.subr.mxu0 0.0
  %229 = vmatpush1.msra.mxu0 0.0
  %230 = vmatprep.subr.mxu0 0.0
  %231 = vmatpush1.msra.mxu0 0.0
  %232 = vmatprep.subr.mxu0 0.0
  %233 = vmatpush1.msra.mxu0 0.0
  %234 = vmatprep.subr.mxu0 0.0
  %235 = vmatpush1.msra.mxu0 0.0
  %236 = vmatprep.subr.mxu0 0.0
  %237 = vmatpush1.msra.mxu0 0.0
  %238 = vmatprep.subr.mxu0 0.0
  %239 = vmatpush1.msra.mxu0 %v90
  %240 = vmatprep.subr.mxu0 0.0
  %241 = vmatpush1.msra.mxu0 %v89
  %242 = vmatprep.subr.mxu0 0.0
  %243 = vmatpush1.msra.mxu0 %v88
  %244 = vmatprep.subr.mxu0 0.0
  %245 = vmatpush1.msra.mxu0 %v87
  %246 = vmatprep.subr.mxu0 0.0
  %247 = vmatpush1.msra.mxu0 %v86
  %248 = vmatprep.subr.mxu0 0.0
  %249 = vmatpush1.msra.mxu0 %v85
  %250 = vmatprep.subr.mxu0 0.0
  %251 = vmatpush1.msra.mxu0 %v84
  %252 = vmatprep.subr.mxu0 0.0
  %253 = vmatpush1.msra.mxu0 %v83
  %254 = vmatprep.subr.mxu0 0.0
  %255 = vmatpush1.msra.mxu0 %v82
  %256 = vmatprep.subr.mxu0 0.0
  %257 = vmatpush2.msra.mxu0 0.0
  %258 = vmatprep.subr.mxu0 0.0
  %259 = vmatpush2.msra.mxu0 0.0
  %260 = vmatprep.subr.mxu0 0.0
  %261 = vmatpush2.msra.mxu0 0.0
  %262 = vmatprep.subr.mxu0 0.0
  %263 = vmatpush2.msra.mxu0 0.0
  %264 = vmatprep.subr.mxu0 0.0
  %265 = vmatpush2.msra.mxu0 0.0
  %266 = vmatprep.subr.mxu0 0.0
  %267 = vmatpush2.msra.mxu0 0.0
  %268 = vmatprep.subr.mxu0 0.0
  %269 = vmatpush2.msra.mxu0 0.0
  %270 = vmatprep.subr.mxu0 0.0
  %271 = vmatpush2.msra.mxu0 0.0
  %272 = vmatprep.subr.mxu0 0.0
  %273 = vmatpush2.msra.mxu0 0.0
  %274 = vmatprep.subr.mxu0 0.0
  %275 = vmatpush2.msra.mxu0 0.0
  %276 = vmatprep.subr.mxu0 0.0
  %277 = vmatpush2.msra.mxu0 0.0
  %278 = vmatprep.subr.mxu0 0.0
  %279 = vmatpush2.msra.mxu0 0.0
  %280 = vmatprep.subr.mxu0 0.0
  %281 = vmatpush2.msra.mxu0 0.0
  %282 = vmatprep.subr.mxu0 0.0
  %283 = vmatpush2.msra.mxu0 0.0
  %284 = vmatprep.subr.mxu0 0.0
  %285 = vmatpush2.msra.mxu0 0.0
  %286 = vmatprep.subr.mxu0 0.0
  %287 = vmatpush2.msra.mxu0 0.0
  %288 = vmatprep.mubr.f32.mxu0 0.0
  %289 = vmatmul.mubr.f32.gmra.mxu0 %v93
  %v290 = vpop.f32.mrf.mxu0
  %v291 = vadd.f32 0.0, %v290
  %v292 = vpop.f32.mrf.mxu0
  %293 = vmatprep.mubr.f32.mxu0 0.0
  %294 = vmatmul.mubr.f32.gmra.mxu0 %v96
  %v295 = vpop.f32.mrf.mxu0
  %v296 = vadd.f32 0.0, %v295
  %v297 = vpop.f32.mrf.mxu0
  %298 = vmatprep.mubr.f32.mxu0 0.0
  %299 = vmatmul.mubr.f32.gmra.mxu0 %v99
  %v300 = vpop.f32.mrf.mxu0
  %v301 = vadd.f32 0.0, %v300
  %v302 = vpop.f32.mrf.mxu0
  %303 = vmatprep.mubr.f32.mxu0 0.0
  %304 = vmatmul.mubr.f32.gmra.mxu0 %v102
  %v305 = vpop.f32.mrf.mxu0
  %v306 = vadd.f32 0.0, %v305
  %v307 = vpop.f32.mrf.mxu0
  %308 = vmatprep.mubr.f32.mxu0 0.0
  %309 = vmatmul.mubr.f32.gmra.mxu0 %v105
  %v310 = vpop.f32.mrf.mxu0
  %v311 = vadd.f32 0.0, %v310
  %v312 = vpop.f32.mrf.mxu0
  %313 = vmatprep.mubr.f32.mxu0 0.0
  %314 = vmatmul.mubr.f32.gmra.mxu0 %v108
  %v315 = vpop.f32.mrf.mxu0
  %v316 = vadd.f32 0.0, %v315
  %v317 = vpop.f32.mrf.mxu0
  %318 = vmatprep.mubr.f32.mxu0 0.0
  %319 = vmatmul.mubr.f32.gmra.mxu0 %v111
  %v320 = vpop.f32.mrf.mxu0
  %v321 = vadd.f32 0.0, %v320
  %v322 = vpop.f32.mrf.mxu0
  %323 = vmatprep.mubr.f32.mxu0 0.0
  %324 = vmatmul.mubr.f32.gmra.mxu0 %v114
  %v325 = vpop.f32.mrf.mxu0
  %v326 = vadd.f32 0.0, %v325
  %v327 = vpop.f32.mrf.mxu0
  %328 = vmatprep.mubr.f32.mxu0 0.0
  %329 = vmatmul.mubr.f32.gmra.mxu0 %v117
  %v330 = vpop.f32.mrf.mxu0
  %v331 = vadd.f32 0.0, %v330
  %v332 = vpop.f32.mrf.mxu0
  %333 = vmatprep.mubr.f32.mxu0 0.0
  %334 = vmatmul.mubr.f32.gmra.mxu0 %v120
  %v335 = vpop.f32.mrf.mxu0
  %v336 = vadd.f32 0.0, %v335
  %v337 = vpop.f32.mrf.mxu0
  %338 = vmatprep.mubr.f32.mxu0 0.0
  %339 = vmatmul.mubr.f32.gmra.mxu0 %v123
  %v340 = vpop.f32.mrf.mxu0
  %v341 = vadd.f32 0.0, %v340
  %v342 = vpop.f32.mrf.mxu0
  %343 = vmatprep.mubr.f32.mxu0 0.0
  %344 = vmatmul.mubr.f32.gmra.mxu0 %v126
  %v345 = vpop.f32.mrf.mxu0
  %v346 = vadd.f32 0.0, %v345
  %v347 = vpop.f32.mrf.mxu0
  %348 = vmatprep.mubr.f32.mxu0 0.0
  %349 = vmatmul.mubr.f32.gmra.mxu0 %v129
  %v350 = vpop.f32.mrf.mxu0
  %v351 = vadd.f32 0.0, %v350
  %v352 = vpop.f32.mrf.mxu0
  %353 = vmatprep.mubr.f32.mxu0 0.0
  %354 = vmatmul.mubr.f32.gmra.mxu0 %v132
  %v355 = vpop.f32.mrf.mxu0
  %v356 = vadd.f32 0.0, %v355
  %v357 = vpop.f32.mrf.mxu0
  %358 = vmatprep.mubr.f32.mxu0 0.0
  %359 = vmatmul.mubr.f32.gmra.mxu0 %v135
  %v360 = vpop.f32.mrf.mxu0
  %v361 = vadd.f32 0.0, %v360
  %v362 = vpop.f32.mrf.mxu0
  %363 = vmatprep.mubr.f32.mxu0 0.0
  %364 = vmatmul.mubr.f32.gmra.mxu0 %v138
  %v365 = vpop.f32.mrf.mxu0
  %v366 = vadd.f32 0.0, %v365
  %v367 = vpop.f32.mrf.mxu0
  %368 = vmatprep.mubr.f32.mxu0 0.0
  %369 = vmatmul.mubr.f32.gmra.mxu0 %v141
  %v370 = vpop.f32.mrf.mxu0
  %v371 = vadd.f32 0.0, %v370
  %v372 = vpop.f32.mrf.mxu0
  %373 = vmatprep.mubr.f32.mxu0 0.0
  %374 = vmatmul.mubr.f32.gmra.mxu0 %v144
  %v375 = vpop.f32.mrf.mxu0
  %v376 = vadd.f32 0.0, %v375
  %v377 = vpop.f32.mrf.mxu0
  %378 = vmatprep.mubr.f32.mxu0 0.0
  %379 = vmatmul.mubr.f32.gmra.mxu0 %v147
  %v380 = vpop.f32.mrf.mxu0
  %v381 = vadd.f32 0.0, %v380
  %v382 = vpop.f32.mrf.mxu0
  %383 = vmatprep.mubr.f32.mxu0 0.0
  %384 = vmatmul.mubr.f32.gmra.mxu0 %v150
  %v385 = vpop.f32.mrf.mxu0
  %v386 = vadd.f32 0.0, %v385
  %v387 = vpop.f32.mrf.mxu0
  %388 = vmatprep.mubr.f32.mxu0 0.0
  %389 = vmatmul.mubr.f32.gmra.mxu0 %v153
  %v390 = vpop.f32.mrf.mxu0
  %v391 = vadd.f32 0.0, %v390
  %v392 = vpop.f32.mrf.mxu0
  %393 = vmatprep.mubr.f32.mxu0 0.0
  %394 = vmatmul.mubr.f32.gmra.mxu0 %v156
  %v395 = vpop.f32.mrf.mxu0
  %v396 = vadd.f32 0.0, %v395
  %v397 = vpop.f32.mrf.mxu0
  %398 = vmatprep.mubr.f32.mxu0 0.0
  %399 = vmatmul.mubr.f32.gmra.mxu0 %v159
  %v400 = vpop.f32.mrf.mxu0
  %v401 = vadd.f32 0.0, %v400
  %v402 = vpop.f32.mrf.mxu0
  %403 = vmatprep.mubr.f32.mxu0 0.0
  %404 = vmatmul.mubr.f32.gmra.mxu0 %v162
  %v405 = vpop.f32.mrf.mxu0
  %v406 = vadd.f32 0.0, %v405
  %v407 = vpop.f32.mrf.mxu0
  %408 = vmatprep.mubr.f32.mxu0 0.0
  %409 = vmatmul.mubr.f32.gmra.mxu0 %v165
  %v410 = vpop.f32.mrf.mxu0
  %v411 = vadd.f32 0.0, %v410
  %v412 = vpop.f32.mrf.mxu0
  %413 = vmatprep.mubr.f32.mxu0 0.0
  %414 = vmatmul.mubr.f32.gmra.mxu0 %v168
  %v415 = vpop.f32.mrf.mxu0
  %v416 = vadd.f32 0.0, %v415
  %v417 = vpop.f32.mrf.mxu0
  %418 = vmatprep.mubr.f32.mxu0 0.0
  %419 = vmatmul.mubr.f32.gmra.mxu0 %v171
  %v420 = vpop.f32.mrf.mxu0
  %v421 = vadd.f32 0.0, %v420
  %v422 = vpop.f32.mrf.mxu0
  %423 = vmatprep.mubr.f32.mxu0 0.0
  %424 = vmatmul.mubr.f32.gmra.mxu0 %v174
  %v425 = vpop.f32.mrf.mxu0
  %v426 = vadd.f32 0.0, %v425
  %v427 = vpop.f32.mrf.mxu0
  %428 = vmatprep.mubr.f32.mxu0 0.0
  %429 = vmatmul.mubr.f32.gmra.mxu0 %v177
  %v430 = vpop.f32.mrf.mxu0
  %v431 = vadd.f32 0.0, %v430
  %v432 = vpop.f32.mrf.mxu0
  %433 = vmatprep.mubr.f32.mxu0 0.0
  %434 = vmatmul.mubr.f32.gmra.mxu0 %v180
  %v435 = vpop.f32.mrf.mxu0
  %v436 = vadd.f32 0.0, %v435
  %v437 = vpop.f32.mrf.mxu0
  %438 = vmatprep.mubr.f32.mxu0 0.0
  %439 = vmatmul.mubr.f32.gmra.mxu0 %v183
  %v440 = vpop.f32.mrf.mxu0
  %v441 = vadd.f32 0.0, %v440
  %v442 = vpop.f32.mrf.mxu0
  %443 = vmatprep.mubr.f32.mxu0 0.0
  %444 = vmatmul.mubr.f32.gmra.mxu0 %v186
  %v445 = vpop.f32.mrf.mxu0
  %v446 = vadd.f32 0.0, %v445
  %v447 = vpop.f32.mrf.mxu0
  %448 = vmatprep.mubr.f32.mxu0 0.0
  %449 = vmatmul.mubr.f32.gmra.mxu0 %v189
  %v450 = vpop.f32.mrf.mxu0
  %v451 = vadd.f32 0.0, %v450
  %v452 = vpop.f32.mrf.mxu0
  %453 = vmatprep.mubr.f32.mxu0 0.0
  %454 = vmatmul.mubr.f32.gmra.mxu0 %v192
  %v455 = vpop.f32.mrf.mxu0
  %v456 = vadd.f32 0.0, %v455
  %v457 = vpop.f32.mrf.mxu0
  %458 = vmatprep.mubr.f32.mxu0 0.0
  %459 = vmatmul.mubr.f32.gmra.mxu0 %v195
  %v460 = vpop.f32.mrf.mxu0
  %v461 = vadd.f32 0.0, %v460
  %v462 = vpop.f32.mrf.mxu0
  %463 = vmatprep.mubr.f32.mxu0 0.0
  %464 = vmatmul.mubr.f32.gmra.mxu0 %v198
  %v465 = vpop.f32.mrf.mxu0
  %v466 = vadd.f32 0.0, %v465
  %v467 = vpop.f32.mrf.mxu0
  %468 = vmatprep.mubr.f32.mxu0 0.0
  %469 = vmatmul.mubr.f32.gmra.mxu0 %v201
  %v470 = vpop.f32.mrf.mxu0
  %v471 = vadd.f32 0.0, %v470
  %v472 = vpop.f32.mrf.mxu0
  %473 = vmatprep.mubr.f32.mxu0 0.0
  %474 = vmatmul.mubr.f32.gmra.mxu0 %v204
  %v475 = vpop.f32.mrf.mxu0
  %v476 = vadd.f32 0.0, %v475
  %v477 = vpop.f32.mrf.mxu0
  %478 = vmatprep.mubr.f32.mxu0 0.0
  %479 = vmatmul.mubr.f32.gmra.mxu0 %v207
  %v480 = vpop.f32.mrf.mxu0
  %v481 = vadd.f32 0.0, %v480
  %v482 = vpop.f32.mrf.mxu0
  %483 = vmatprep.mubr.f32.mxu0 0.0
  %484 = vmatmul.mubr.f32.gmra.mxu0 %v210
  %v485 = vpop.f32.mrf.mxu0
  %v486 = vadd.f32 0.0, %v485
  %v487 = vpop.f32.mrf.mxu0
  %488 = vmatprep.mubr.f32.mxu0 0.0
  %489 = vmatmul.mubr.f32.gmra.mxu0 %v213
  %v490 = vpop.f32.mrf.mxu0
  %v491 = vadd.f32 0.0, %v490
  %v492 = vpop.f32.mrf.mxu0
  %493 = vmatprep.mubr.f32.mxu0 0.0
  %494 = vmatmul.mubr.f32.gmra.mxu0 %v216
  %v495 = vpop.f32.mrf.mxu0
  %v496 = vadd.f32 0.0, %v495
  %v497 = vpop.f32.mrf.mxu0
  %498 = vmatprep.mubr.f32.mxu0 0.0
  %499 = vmatmul.mubr.f32.gmra.mxu0 %v219
  %v500 = vpop.f32.mrf.mxu0
  %v501 = vadd.f32 0.0, %v500
  %v502 = vpop.f32.mrf.mxu0
  %503 = vmatprep.mubr.f32.mxu0 0.0
  %504 = vmatmul.mubr.f32.gmra.mxu0 %v222
  %v505 = vpop.f32.mrf.mxu0
  %v506 = vadd.f32 0.0, %v505
  %v507 = vpop.f32.mrf.mxu0
  %508 = vdwg.mxu0
  %vm509 = vcmask 179200
  %510 = vst.msk [vmem:[#allocation2] sm:$0xff] %vm509, %v291
  %511 = vst.msk [vmem:[#allocation2 + $0x8] sm:$0xff] %vm509, %v296
  %512 = vst.msk [vmem:[#allocation2 + $0x10] sm:$0xff] %vm509, %v301
  %513 = vst.msk [vmem:[#allocation2 + $0x18] sm:$0xff] %vm509, %v306
  %514 = vst.msk [vmem:[#allocation2 + $0x20] sm:$0xff] %vm509, %v311
  %515 = vst.msk [vmem:[#allocation2 + $0x28] sm:$0xff] %vm509, %v316
  %516 = vst.msk [vmem:[#allocation2 + $0x30] sm:$0xff] %vm509, %v321
  %517 = vst.msk [vmem:[#allocation2 + $0x38] sm:$0xff] %vm509, %v326
  %518 = vst.msk [vmem:[#allocation2 + $0x40] sm:$0xff] %vm509, %v331
  %519 = vst.msk [vmem:[#allocation2 + $0x48] sm:$0xff] %vm509, %v336
  %520 = vst.msk [vmem:[#allocation2 + $0x50] sm:$0xff] %vm509, %v341
  %521 = vst.msk [vmem:[#allocation2 + $0x58] sm:$0xff] %vm509, %v346
  %522 = vst.msk [vmem:[#allocation2 + $0x60] sm:$0xff] %vm509, %v351
  %523 = vst.msk [vmem:[#allocation2 + $0x68] sm:$0xff] %vm509, %v356
  %524 = vst.msk [vmem:[#allocation2 + $0x70] sm:$0xff] %vm509, %v361
  %525 = vst.msk [vmem:[#allocation2 + $0x78] sm:$0xff] %vm509, %v366
  %526 = vst.msk [vmem:[#allocation2 + $0x80] sm:$0xff] %vm509, %v371
  %527 = vst.msk [vmem:[#allocation2 + $0x88] sm:$0xff] %vm509, %v376
  %528 = vst.msk [vmem:[#allocation2 + $0x90] sm:$0xff] %vm509, %v381
  %529 = vst.msk [vmem:[#allocation2 + $0x98] sm:$0xff] %vm509, %v386
  %530 = vst.msk [vmem:[#allocation2 + $0xa0] sm:$0xff] %vm509, %v391
  %531 = vst.msk [vmem:[#allocation2 + $0xa8] sm:$0xff] %vm509, %v396
  %532 = vst.msk [vmem:[#allocation2 + $0xb0] sm:$0xff] %vm509, %v401
  %533 = vst.msk [vmem:[#allocation2 + $0xb8] sm:$0xff] %vm509, %v406
  %534 = vst.msk [vmem:[#allocation2 + $0xc0] sm:$0xff] %vm509, %v411
  %535 = vst.msk [vmem:[#allocation2 + $0xc8] sm:$0xff] %vm509, %v416
  %536 = vst.msk [vmem:[#allocation2 + $0xd0] sm:$0xff] %vm509, %v421
  %537 = vst.msk [vmem:[#allocation2 + $0xd8] sm:$0xff] %vm509, %v426
  %538 = vst.msk [vmem:[#allocation2 + $0xe0] sm:$0xff] %vm509, %v431
  %539 = vst.msk [vmem:[#allocation2 + $0xe8] sm:$0xff] %vm509, %v436
  %540 = vst.msk [vmem:[#allocation2 + $0xf0] sm:$0xff] %vm509, %v441
  %541 = vst.msk [vmem:[#allocation2 + $0xf8] sm:$0xff] %vm509, %v446
  %542 = vst.msk [vmem:[#allocation2 + $0x100] sm:$0xff] %vm509, %v451
  %543 = vst.msk [vmem:[#allocation2 + $0x108] sm:$0xff] %vm509, %v456
  %544 = vst.msk [vmem:[#allocation2 + $0x110] sm:$0xff] %vm509, %v461
  %545 = vst.msk [vmem:[#allocation2 + $0x118] sm:$0xff] %vm509, %v466
  %546 = vst.msk [vmem:[#allocation2 + $0x120] sm:$0xff] %vm509, %v471
  %547 = vst.msk [vmem:[#allocation2 + $0x128] sm:$0xff] %vm509, %v476
  %548 = vst.msk [vmem:[#allocation2 + $0x130] sm:$0xff] %vm509, %v481
  %549 = vst.msk [vmem:[#allocation2 + $0x138] sm:$0xff] %vm509, %v486
  %550 = vst.msk [vmem:[#allocation2 + $0x140] sm:$0xff] %vm509, %v491
  %551 = vst.msk [vmem:[#allocation2 + $0x148] sm:$0xff] %vm509, %v496
  %552 = vst.msk [vmem:[#allocation2 + $0x150] sm:$0xff] %vm509, %v501
  %553 = vst.msk [vmem:[#allocation2 + $0x158] sm:$0xff] %vm509, %v506
  %v554 = vld [vmem:[#allocation2] sm:$0xff]
  %v555 = vld [vmem:[#allocation2 + $0x8] sm:$0xff]
  %v556 = vld [vmem:[#allocation2 + $0x10] sm:$0xff]
  %v557 = vld [vmem:[#allocation2 + $0x18] sm:$0xff]
  %v558 = vld [vmem:[#allocation2 + $0x20] sm:$0xff]
  %v559 = vld [vmem:[#allocation2 + $0x28] sm:$0xff]
  %v560 = vld [vmem:[#allocation2 + $0x30] sm:$0xff]
  %v561 = vld [vmem:[#allocation2 + $0x38] sm:$0xff]
  %v562 = vld [vmem:[#allocation2 + $0x40] sm:$0xff]
  %v563 = vld [vmem:[#allocation2 + $0x48] sm:$0xff]
  %v564 = vld [vmem:[#allocation2 + $0x50] sm:$0xff]
  %v565 = vld [vmem:[#allocation2 + $0x58] sm:$0xff]
  %v566 = vld [vmem:[#allocation2 + $0x60] sm:$0xff]
  %v567 = vld [vmem:[#allocation2 + $0x68] sm:$0xff]
  %v568 = vld [vmem:[#allocation2 + $0x70] sm:$0xff]
  %v569 = vld [vmem:[#allocation2 + $0x78] sm:$0xff]
  %v570 = vld [vmem:[#allocation2 + $0x80] sm:$0xff]
  %v571 = vld [vmem:[#allocation2 + $0x88] sm:$0xff]
  %v572 = vld [vmem:[#allocation2 + $0x90] sm:$0xff]
  %v573 = vld [vmem:[#allocation2 + $0x98] sm:$0xff]
  %v574 = vld [vmem:[#allocation2 + $0xa0] sm:$0xff]
  %v575 = vld [vmem:[#allocation2 + $0xa8] sm:$0xff]
  %v576 = vld [vmem:[#allocation2 + $0xb0] sm:$0xff]
  %v577 = vld [vmem:[#allocation2 + $0xb8] sm:$0xff]
  %v578 = vld [vmem:[#allocation2 + $0xc0] sm:$0xff]
  %v579 = vld [vmem:[#allocation2 + $0xc8] sm:$0xff]
  %v580 = vld [vmem:[#allocation2 + $0xd0] sm:$0xff]
  %v581 = vld [vmem:[#allocation2 + $0xd8] sm:$0xff]
  %v582 = vld [vmem:[#allocation2 + $0xe0] sm:$0xff]
  %v583 = vld [vmem:[#allocation2 + $0xe8] sm:$0xff]
  %v584 = vld [vmem:[#allocation2 + $0xf0] sm:$0xff]
  %v585 = vld [vmem:[#allocation2 + $0xf8] sm:$0xff]
  %v586 = vld [vmem:[#allocation2 + $0x100] sm:$0xff]
  %v587 = vld [vmem:[#allocation2 + $0x108] sm:$0xff]
  %v588 = vld [vmem:[#allocation2 + $0x110] sm:$0xff]
  %v589 = vld [vmem:[#allocation2 + $0x118] sm:$0xff]
  %v590 = vld [vmem:[#allocation2 + $0x120] sm:$0xff]
  %v591 = vld [vmem:[#allocation2 + $0x128] sm:$0xff]
  %v592 = vld [vmem:[#allocation2 + $0x130] sm:$0xff]
  %v593 = vld [vmem:[#allocation2 + $0x138] sm:$0xff]
  %v594 = vld [vmem:[#allocation2 + $0x140] sm:$0xff]
  %v595 = vld [vmem:[#allocation2 + $0x148] sm:$0xff]
  %v596 = vld [vmem:[#allocation2 + $0x150] sm:$0xff]
  %v597 = vld [vmem:[#allocation2 + $0x158] sm:$0xff]
  %s598 = scalar_lea.vmem %s1, 352
  %v599 = vld [vmem:[%s598] sm:$0xff]
  %v600 = vld [vmem:[%s598 + $0x8] sm:$0xff]
  %v601 = vld [vmem:[%s598 + $0x10] sm:$0xff]
  %v602 = vld [vmem:[%s598 + $0x18] sm:$0xff]
  %v603 = vld [vmem:[%s598 + $0x20] sm:$0xff]
  %v604 = vld [vmem:[%s598 + $0x28] sm:$0xff]
  %v605 = vld [vmem:[%s598 + $0x30] sm:$0xff]
  %v606 = vld [vmem:[%s598 + $0x38] sm:$0xff]
  %v607 = vld [vmem:[%s598 + $0x40] sm:$0xff]
  %v608 = vld [vmem:[%s598 + $0x48] sm:$0xff]
  %v609 = vld [vmem:[%s598 + $0x50] sm:$0xff]
  %v610 = vld [vmem:[%s598 + $0x58] sm:$0xff]
  %v611 = vld [vmem:[%s598 + $0x60] sm:$0xff]
  %v612 = vld [vmem:[%s598 + $0x68] sm:$0xff]
  %v613 = vld [vmem:[%s598 + $0x70] sm:$0xff]
  %v614 = vld [vmem:[%s598 + $0x78] sm:$0xff]
  %v615 = vld [vmem:[%s598 + $0x80] sm:$0xff]
  %v616 = vld [vmem:[%s598 + $0x88] sm:$0xff]
  %v617 = vld [vmem:[%s598 + $0x90] sm:$0xff]
  %v618 = vld [vmem:[%s598 + $0x98] sm:$0xff]
  %v619 = vld [vmem:[%s598 + $0xa0] sm:$0xff]
  %v620 = vld [vmem:[%s598 + $0xa8] sm:$0xff]
  %v621 = vld [vmem:[%s598 + $0xb0] sm:$0xff]
  %v622 = vld [vmem:[%s598 + $0xb8] sm:$0xff]
  %v623 = vld [vmem:[%s598 + $0xc0] sm:$0xff]
  %v624 = vld [vmem:[%s598 + $0xc8] sm:$0xff]
  %v625 = vld [vmem:[%s598 + $0xd0] sm:$0xff]
  %v626 = vld [vmem:[%s598 + $0xd8] sm:$0xff]
  %v627 = vld [vmem:[%s598 + $0xe0] sm:$0xff]
  %v628 = vld [vmem:[%s598 + $0xe8] sm:$0xff]
  %v629 = vld [vmem:[%s598 + $0xf0] sm:$0xff]
  %v630 = vld [vmem:[%s598 + $0xf8] sm:$0xff]
  %v631 = vld [vmem:[%s598 + $0x100] sm:$0xff]
  %v632 = vld [vmem:[%s598 + $0x108] sm:$0xff]
  %v633 = vld [vmem:[%s598 + $0x110] sm:$0xff]
  %v634 = vld [vmem:[%s598 + $0x118] sm:$0xff]
  %v635 = vld [vmem:[%s598 + $0x120] sm:$0xff]
  %v636 = vld [vmem:[%s598 + $0x128] sm:$0xff]
  %v637 = vld [vmem:[%s598 + $0x130] sm:$0xff]
  %v638 = vld [vmem:[%s598 + $0x138] sm:$0xff]
  %v639 = vld [vmem:[%s598 + $0x140] sm:$0xff]
  %v640 = vld [vmem:[%s598 + $0x148] sm:$0xff]
  %v641 = vld [vmem:[%s598 + $0x150] sm:$0xff]
  %v642 = vld [vmem:[%s598 + $0x158] sm:$0xff]
  %v643 = vld [vmem:[%s0] sm:$0xff]
  %v644 = vld [vmem:[%s0 + $0x8] sm:$0xff]
  %v645 = vld [vmem:[%s0 + $0x10] sm:$0xff]
  %v646 = vld [vmem:[%s0 + $0x18] sm:$0xff]
  %v647 = vld [vmem:[%s0 + $0x20] sm:$0xff]
  %v648 = vld [vmem:[%s0 + $0x28] sm:$0xff]
  %v649 = vld [vmem:[%s0 + $0x30] sm:$0xff]
  %v650 = vld [vmem:[%s0 + $0x38] sm:$0xff]
  %v651 = vld [vmem:[%s0 + $0x40] sm:$0xff]
  %661 = vrot.lane.b32.xlu0 %v643, 127
  %v662 = vpop.permute.xlu0 %661
  %663 = vrot.lane.b32.xlu0 %v644, 127
  %v664 = vpop.permute.xlu0 %663
  %665 = vrot.lane.b32.xlu0 %v645, 127
  %v666 = vpop.permute.xlu0 %665
  %667 = vrot.lane.b32.xlu0 %v646, 127
  %v668 = vpop.permute.xlu0 %667
  %669 = vrot.lane.b32.xlu0 %v647, 127
  %v670 = vpop.permute.xlu0 %669
  %671 = vrot.lane.b32.xlu0 %v648, 127
  %v672 = vpop.permute.xlu0 %671
  %673 = vrot.lane.b32.xlu0 %v649, 127
  %v674 = vpop.permute.xlu0 %673
  %675 = vrot.lane.b32.xlu0 %v650, 127
  %v676 = vpop.permute.xlu0 %675
  %677 = vrot.lane.b32.xlu0 %v651, 127
  %v678 = vpop.permute.xlu0 %677
  %v689 = vsel %vm91, %v599, 0
  %v692 = vsel %vm91, %v600, 0
  %v695 = vsel %vm91, %v601, 0
  %v698 = vsel %vm91, %v602, 0
  %v701 = vsel %vm91, %v603, 0
  %v704 = vsel %vm91, %v604, 0
  %v707 = vsel %vm91, %v605, 0
  %v710 = vsel %vm91, %v606, 0
  %v713 = vsel %vm91, %v607, 0
  %v716 = vsel %vm91, %v608, 0
  %v719 = vsel %vm91, %v609, 0
  %v722 = vsel %vm91, %v610, 0
  %v725 = vsel %vm91, %v611, 0
  %v728 = vsel %vm91, %v612, 0
  %v731 = vsel %vm91, %v613, 0
  %v734 = vsel %vm91, %v614, 0
  %v737 = vsel %vm91, %v615, 0
  %v740 = vsel %vm91, %v616, 0
  %v743 = vsel %vm91, %v617, 0
  %v746 = vsel %vm91, %v618, 0
  %v749 = vsel %vm91, %v619, 0
  %v752 = vsel %vm91, %v620, 0
  %v755 = vsel %vm91, %v621, 0
  %v758 = vsel %vm91, %v622, 0
  %v761 = vsel %vm91, %v623, 0
  %v764 = vsel %vm91, %v624, 0
  %v767 = vsel %vm91, %v625, 0
  %v770 = vsel %vm91, %v626, 0
  %v773 = vsel %vm91, %v627, 0
  %v776 = vsel %vm91, %v628, 0
  %v779 = vsel %vm91, %v629, 0
  %v782 = vsel %vm91, %v630, 0
  %v785 = vsel %vm91, %v631, 0
  %v788 = vsel %vm91, %v632, 0
  %v791 = vsel %vm91, %v633, 0
  %v794 = vsel %vm91, %v634, 0
  %v797 = vsel %vm91, %v635, 0
  %v800 = vsel %vm91, %v636, 0
  %v803 = vsel %vm91, %v637, 0
  %v806 = vsel %vm91, %v638, 0
  %v809 = vsel %vm91, %v639, 0
  %v812 = vsel %vm91, %v640, 0
  %v815 = vsel %vm91, %v641, 0
  %v818 = vsel %vm91, %v642, 0
  %820 = vmatprep.subr.mxu0 0.0
  %821 = vmatpush1.msra.mxu0 0.0
  %822 = vmatprep.subr.mxu0 0.0
  %823 = vmatpush1.msra.mxu0 0.0
  %824 = vmatprep.subr.mxu0 0.0
  %825 = vmatpush1.msra.mxu0 0.0
  %826 = vmatprep.subr.mxu0 0.0
  %827 = vmatpush1.msra.mxu0 0.0
  %828 = vmatprep.subr.mxu0 0.0
  %829 = vmatpush1.msra.mxu0 0.0
  %830 = vmatprep.subr.mxu0 0.0
  %831 = vmatpush1.msra.mxu0 0.0
  %832 = vmatprep.subr.mxu0 0.0
  %833 = vmatpush1.msra.mxu0 0.0
  %834 = vmatprep.subr.mxu0 0.0
  %835 = vmatpush1.msra.mxu0 %v678
  %836 = vmatprep.subr.mxu0 0.0
  %837 = vmatpush1.msra.mxu0 %v676
  %838 = vmatprep.subr.mxu0 0.0
  %839 = vmatpush1.msra.mxu0 %v674
  %840 = vmatprep.subr.mxu0 0.0
  %841 = vmatpush1.msra.mxu0 %v672
  %842 = vmatprep.subr.mxu0 0.0
  %843 = vmatpush1.msra.mxu0 %v670
  %844 = vmatprep.subr.mxu0 0.0
  %845 = vmatpush1.msra.mxu0 %v668
  %846 = vmatprep.subr.mxu0 0.0
  %847 = vmatpush1.msra.mxu0 %v666
  %848 = vmatprep.subr.mxu0 0.0
  %849 = vmatpush1.msra.mxu0 %v664
  %850 = vmatprep.subr.mxu0 0.0
  %851 = vmatpush1.msra.mxu0 %v662
  %852 = vmatprep.subr.mxu0 0.0
  %853 = vmatpush2.msra.mxu0 0.0
  %854 = vmatprep.subr.mxu0 0.0
  %855 = vmatpush2.msra.mxu0 0.0
  %856 = vmatprep.subr.mxu0 0.0
  %857 = vmatpush2.msra.mxu0 0.0
  %858 = vmatprep.subr.mxu0 0.0
  %859 = vmatpush2.msra.mxu0 0.0
  %860 = vmatprep.subr.mxu0 0.0
  %861 = vmatpush2.msra.mxu0 0.0
  %862 = vmatprep.subr.mxu0 0.0
  %863 = vmatpush2.msra.mxu0 0.0
  %864 = vmatprep.subr.mxu0 0.0
  %865 = vmatpush2.msra.mxu0 0.0
  %866 = vmatprep.subr.mxu0 0.0
  %867 = vmatpush2.msra.mxu0 0.0
  %868 = vmatprep.subr.mxu0 0.0
  %869 = vmatpush2.msra.mxu0 0.0
  %870 = vmatprep.subr.mxu0 0.0
  %871 = vmatpush2.msra.mxu0 0.0
  %872 = vmatprep.subr.mxu0 0.0
  %873 = vmatpush2.msra.mxu0 0.0
  %874 = vmatprep.subr.mxu0 0.0
  %875 = vmatpush2.msra.mxu0 0.0
  %876 = vmatprep.subr.mxu0 0.0
  %877 = vmatpush2.msra.mxu0 0.0
  %878 = vmatprep.subr.mxu0 0.0
  %879 = vmatpush2.msra.mxu0 0.0
  %880 = vmatprep.subr.mxu0 0.0
  %881 = vmatpush2.msra.mxu0 0.0
  %882 = vmatprep.subr.mxu0 0.0
  %883 = vmatpush2.msra.mxu0 0.0
  %884 = vmatprep.mubr.f32.mxu0 0.0
  %885 = vmatmul.mubr.f32.gmra.mxu0 %v689
  %v886 = vpop.f32.mrf.mxu0
  %v887 = vadd.f32 0.0, %v886
  %v888 = vpop.f32.mrf.mxu0
  %889 = vmatprep.mubr.f32.mxu0 0.0
  %890 = vmatmul.mubr.f32.gmra.mxu0 %v692
  %v891 = vpop.f32.mrf.mxu0
  %v892 = vadd.f32 0.0, %v891
  %v893 = vpop.f32.mrf.mxu0
  %894 = vmatprep.mubr.f32.mxu0 0.0
  %895 = vmatmul.mubr.f32.gmra.mxu0 %v695
  %v896 = vpop.f32.mrf.mxu0
  %v897 = vadd.f32 0.0, %v896
  %v898 = vpop.f32.mrf.mxu0
  %899 = vmatprep.mubr.f32.mxu0 0.0
  %900 = vmatmul.mubr.f32.gmra.mxu0 %v698
  %v901 = vpop.f32.mrf.mxu0
  %v902 = vadd.f32 0.0, %v901
  %v903 = vpop.f32.mrf.mxu0
  %904 = vmatprep.mubr.f32.mxu0 0.0
  %905 = vmatmul.mubr.f32.gmra.mxu0 %v701
  %v906 = vpop.f32.mrf.mxu0
  %v907 = vadd.f32 0.0, %v906
  %v908 = vpop.f32.mrf.mxu0
  %909 = vmatprep.mubr.f32.mxu0 0.0
  %910 = vmatmul.mubr.f32.gmra.mxu0 %v704
  %v911 = vpop.f32.mrf.mxu0
  %v912 = vadd.f32 0.0, %v911
  %v913 = vpop.f32.mrf.mxu0
  %914 = vmatprep.mubr.f32.mxu0 0.0
  %915 = vmatmul.mubr.f32.gmra.mxu0 %v707
  %v916 = vpop.f32.mrf.mxu0
  %v917 = vadd.f32 0.0, %v916
  %v918 = vpop.f32.mrf.mxu0
  %919 = vmatprep.mubr.f32.mxu0 0.0
  %920 = vmatmul.mubr.f32.gmra.mxu0 %v710
  %v921 = vpop.f32.mrf.mxu0
  %v922 = vadd.f32 0.0, %v921
  %v923 = vpop.f32.mrf.mxu0
  %924 = vmatprep.mubr.f32.mxu0 0.0
  %925 = vmatmul.mubr.f32.gmra.mxu0 %v713
  %v926 = vpop.f32.mrf.mxu0
  %v927 = vadd.f32 0.0, %v926
  %v928 = vpop.f32.mrf.mxu0
  %929 = vmatprep.mubr.f32.mxu0 0.0
  %930 = vmatmul.mubr.f32.gmra.mxu0 %v716
  %v931 = vpop.f32.mrf.mxu0
  %v932 = vadd.f32 0.0, %v931
  %v933 = vpop.f32.mrf.mxu0
  %934 = vmatprep.mubr.f32.mxu0 0.0
  %935 = vmatmul.mubr.f32.gmra.mxu0 %v719
  %v936 = vpop.f32.mrf.mxu0
  %v937 = vadd.f32 0.0, %v936
  %v938 = vpop.f32.mrf.mxu0
  %939 = vmatprep.mubr.f32.mxu0 0.0
  %940 = vmatmul.mubr.f32.gmra.mxu0 %v722
  %v941 = vpop.f32.mrf.mxu0
  %v942 = vadd.f32 0.0, %v941
  %v943 = vpop.f32.mrf.mxu0
  %944 = vmatprep.mubr.f32.mxu0 0.0
  %945 = vmatmul.mubr.f32.gmra.mxu0 %v725
  %v946 = vpop.f32.mrf.mxu0
  %v947 = vadd.f32 0.0, %v946
  %v948 = vpop.f32.mrf.mxu0
  %949 = vmatprep.mubr.f32.mxu0 0.0
  %950 = vmatmul.mubr.f32.gmra.mxu0 %v728
  %v951 = vpop.f32.mrf.mxu0
  %v952 = vadd.f32 0.0, %v951
  %v953 = vpop.f32.mrf.mxu0
  %954 = vmatprep.mubr.f32.mxu0 0.0
  %955 = vmatmul.mubr.f32.gmra.mxu0 %v731
  %v956 = vpop.f32.mrf.mxu0
  %v957 = vadd.f32 0.0, %v956
  %v958 = vpop.f32.mrf.mxu0
  %959 = vmatprep.mubr.f32.mxu0 0.0
  %960 = vmatmul.mubr.f32.gmra.mxu0 %v734
  %v961 = vpop.f32.mrf.mxu0
  %v962 = vadd.f32 0.0, %v961
  %v963 = vpop.f32.mrf.mxu0
  %964 = vmatprep.mubr.f32.mxu0 0.0
  %965 = vmatmul.mubr.f32.gmra.mxu0 %v737
  %v966 = vpop.f32.mrf.mxu0
  %v967 = vadd.f32 0.0, %v966
  %v968 = vpop.f32.mrf.mxu0
  %969 = vmatprep.mubr.f32.mxu0 0.0
  %970 = vmatmul.mubr.f32.gmra.mxu0 %v740
  %v971 = vpop.f32.mrf.mxu0
  %v972 = vadd.f32 0.0, %v971
  %v973 = vpop.f32.mrf.mxu0
  %974 = vmatprep.mubr.f32.mxu0 0.0
  %975 = vmatmul.mubr.f32.gmra.mxu0 %v743
  %v976 = vpop.f32.mrf.mxu0
  %v977 = vadd.f32 0.0, %v976
  %v978 = vpop.f32.mrf.mxu0
  %979 = vmatprep.mubr.f32.mxu0 0.0
  %980 = vmatmul.mubr.f32.gmra.mxu0 %v746
  %v981 = vpop.f32.mrf.mxu0
  %v982 = vadd.f32 0.0, %v981
  %v983 = vpop.f32.mrf.mxu0
  %984 = vmatprep.mubr.f32.mxu0 0.0
  %985 = vmatmul.mubr.f32.gmra.mxu0 %v749
  %v986 = vpop.f32.mrf.mxu0
  %v987 = vadd.f32 0.0, %v986
  %v988 = vpop.f32.mrf.mxu0
  %989 = vmatprep.mubr.f32.mxu0 0.0
  %990 = vmatmul.mubr.f32.gmra.mxu0 %v752
  %v991 = vpop.f32.mrf.mxu0
  %v992 = vadd.f32 0.0, %v991
  %v993 = vpop.f32.mrf.mxu0
  %994 = vmatprep.mubr.f32.mxu0 0.0
  %995 = vmatmul.mubr.f32.gmra.mxu0 %v755
  %v996 = vpop.f32.mrf.mxu0
  %v997 = vadd.f32 0.0, %v996
  %v998 = vpop.f32.mrf.mxu0
  %999 = vmatprep.mubr.f32.mxu0 0.0
  %1000 = vmatmul.mubr.f32.gmra.mxu0 %v758
  %v1001 = vpop.f32.mrf.mxu0
  %v1002 = vadd.f32 0.0, %v1001
  %v1003 = vpop.f32.mrf.mxu0
  %1004 = vmatprep.mubr.f32.mxu0 0.0
  %1005 = vmatmul.mubr.f32.gmra.mxu0 %v761
  %v1006 = vpop.f32.mrf.mxu0
  %v1007 = vadd.f32 0.0, %v1006
  %v1008 = vpop.f32.mrf.mxu0
  %1009 = vmatprep.mubr.f32.mxu0 0.0
  %1010 = vmatmul.mubr.f32.gmra.mxu0 %v764
  %v1011 = vpop.f32.mrf.mxu0
  %v1012 = vadd.f32 0.0, %v1011
  %v1013 = vpop.f32.mrf.mxu0
  %1014 = vmatprep.mubr.f32.mxu0 0.0
  %1015 = vmatmul.mubr.f32.gmra.mxu0 %v767
  %v1016 = vpop.f32.mrf.mxu0
  %v1017 = vadd.f32 0.0, %v1016
  %v1018 = vpop.f32.mrf.mxu0
  %1019 = vmatprep.mubr.f32.mxu0 0.0
  %1020 = vmatmul.mubr.f32.gmra.mxu0 %v770
  %v1021 = vpop.f32.mrf.mxu0
  %v1022 = vadd.f32 0.0, %v1021
  %v1023 = vpop.f32.mrf.mxu0
  %1024 = vmatprep.mubr.f32.mxu0 0.0
  %1025 = vmatmul.mubr.f32.gmra.mxu0 %v773
  %v1026 = vpop.f32.mrf.mxu0
  %v1027 = vadd.f32 0.0, %v1026
  %v1028 = vpop.f32.mrf.mxu0
  %1029 = vmatprep.mubr.f32.mxu0 0.0
  %1030 = vmatmul.mubr.f32.gmra.mxu0 %v776
  %v1031 = vpop.f32.mrf.mxu0
  %v1032 = vadd.f32 0.0, %v1031
  %v1033 = vpop.f32.mrf.mxu0
  %1034 = vmatprep.mubr.f32.mxu0 0.0
  %1035 = vmatmul.mubr.f32.gmra.mxu0 %v779
  %v1036 = vpop.f32.mrf.mxu0
  %v1037 = vadd.f32 0.0, %v1036
  %v1038 = vpop.f32.mrf.mxu0
  %1039 = vmatprep.mubr.f32.mxu0 0.0
  %1040 = vmatmul.mubr.f32.gmra.mxu0 %v782
  %v1041 = vpop.f32.mrf.mxu0
  %v1042 = vadd.f32 0.0, %v1041
  %v1043 = vpop.f32.mrf.mxu0
  %1044 = vmatprep.mubr.f32.mxu0 0.0
  %1045 = vmatmul.mubr.f32.gmra.mxu0 %v785
  %v1046 = vpop.f32.mrf.mxu0
  %v1047 = vadd.f32 0.0, %v1046
  %v1048 = vpop.f32.mrf.mxu0
  %1049 = vmatprep.mubr.f32.mxu0 0.0
  %1050 = vmatmul.mubr.f32.gmra.mxu0 %v788
  %v1051 = vpop.f32.mrf.mxu0
  %v1052 = vadd.f32 0.0, %v1051
  %v1053 = vpop.f32.mrf.mxu0
  %1054 = vmatprep.mubr.f32.mxu0 0.0
  %1055 = vmatmul.mubr.f32.gmra.mxu0 %v791
  %v1056 = vpop.f32.mrf.mxu0
  %v1057 = vadd.f32 0.0, %v1056
  %v1058 = vpop.f32.mrf.mxu0
  %1059 = vmatprep.mubr.f32.mxu0 0.0
  %1060 = vmatmul.mubr.f32.gmra.mxu0 %v794
  %v1061 = vpop.f32.mrf.mxu0
  %v1062 = vadd.f32 0.0, %v1061
  %v1063 = vpop.f32.mrf.mxu0
  %1064 = vmatprep.mubr.f32.mxu0 0.0
  %1065 = vmatmul.mubr.f32.gmra.mxu0 %v797
  %v1066 = vpop.f32.mrf.mxu0
  %v1067 = vadd.f32 0.0, %v1066
  %v1068 = vpop.f32.mrf.mxu0
  %1069 = vmatprep.mubr.f32.mxu0 0.0
  %1070 = vmatmul.mubr.f32.gmra.mxu0 %v800
  %v1071 = vpop.f32.mrf.mxu0
  %v1072 = vadd.f32 0.0, %v1071
  %v1073 = vpop.f32.mrf.mxu0
  %1074 = vmatprep.mubr.f32.mxu0 0.0
  %1075 = vmatmul.mubr.f32.gmra.mxu0 %v803
  %v1076 = vpop.f32.mrf.mxu0
  %v1077 = vadd.f32 0.0, %v1076
  %v1078 = vpop.f32.mrf.mxu0
  %1079 = vmatprep.mubr.f32.mxu0 0.0
  %1080 = vmatmul.mubr.f32.gmra.mxu0 %v806
  %v1081 = vpop.f32.mrf.mxu0
  %v1082 = vadd.f32 0.0, %v1081
  %v1083 = vpop.f32.mrf.mxu0
  %1084 = vmatprep.mubr.f32.mxu0 0.0
  %1085 = vmatmul.mubr.f32.gmra.mxu0 %v809
  %v1086 = vpop.f32.mrf.mxu0
  %v1087 = vadd.f32 0.0, %v1086
  %v1088 = vpop.f32.mrf.mxu0
  %1089 = vmatprep.mubr.f32.mxu0 0.0
  %1090 = vmatmul.mubr.f32.gmra.mxu0 %v812
  %v1091 = vpop.f32.mrf.mxu0
  %v1092 = vadd.f32 0.0, %v1091
  %v1093 = vpop.f32.mrf.mxu0
  %1094 = vmatprep.mubr.f32.mxu0 0.0
  %1095 = vmatmul.mubr.f32.gmra.mxu0 %v815
  %v1096 = vpop.f32.mrf.mxu0
  %v1097 = vadd.f32 0.0, %v1096
  %v1098 = vpop.f32.mrf.mxu0
  %1099 = vmatprep.mubr.f32.mxu0 0.0
  %1100 = vmatmul.mubr.f32.gmra.mxu0 %v818
  %v1101 = vpop.f32.mrf.mxu0
  %v1102 = vadd.f32 0.0, %v1101
  %v1103 = vpop.f32.mrf.mxu0
  %1104 = vdwg.mxu0
  %v1105 = vadd.f32 %v554, %v887
  %v1106 = vadd.f32 %v555, %v892
  %v1107 = vadd.f32 %v556, %v897
  %v1108 = vadd.f32 %v557, %v902
  %v1109 = vadd.f32 %v558, %v907
  %v1110 = vadd.f32 %v559, %v912
  %v1111 = vadd.f32 %v560, %v917
  %v1112 = vadd.f32 %v561, %v922
  %v1113 = vadd.f32 %v562, %v927
  %v1114 = vadd.f32 %v563, %v932
  %v1115 = vadd.f32 %v564, %v937
  %v1116 = vadd.f32 %v565, %v942
  %v1117 = vadd.f32 %v566, %v947
  %v1118 = vadd.f32 %v567, %v952
  %v1119 = vadd.f32 %v568, %v957
  %v1120 = vadd.f32 %v569, %v962
  %v1121 = vadd.f32 %v570, %v967
  %v1122 = vadd.f32 %v571, %v972
  %v1123 = vadd.f32 %v572, %v977
  %v1124 = vadd.f32 %v573, %v982
  %v1125 = vadd.f32 %v574, %v987
  %v1126 = vadd.f32 %v575, %v992
  %v1127 = vadd.f32 %v576, %v997
  %v1128 = vadd.f32 %v577, %v1002
  %v1129 = vadd.f32 %v578, %v1007
  %v1130 = vadd.f32 %v579, %v1012
  %v1131 = vadd.f32 %v580, %v1017
  %v1132 = vadd.f32 %v581, %v1022
  %v1133 = vadd.f32 %v582, %v1027
  %v1134 = vadd.f32 %v583, %v1032
  %v1135 = vadd.f32 %v584, %v1037
  %v1136 = vadd.f32 %v585, %v1042
  %v1137 = vadd.f32 %v586, %v1047
  %v1138 = vadd.f32 %v587, %v1052
  %v1139 = vadd.f32 %v588, %v1057
  %v1140 = vadd.f32 %v589, %v1062
  %v1141 = vadd.f32 %v590, %v1067
  %v1142 = vadd.f32 %v591, %v1072
  %v1143 = vadd.f32 %v592, %v1077
  %v1144 = vadd.f32 %v593, %v1082
  %v1145 = vadd.f32 %v594, %v1087
  %v1146 = vadd.f32 %v595, %v1092
  %v1147 = vadd.f32 %v596, %v1097
  %v1148 = vadd.f32 %v597, %v1102
  %1149 = vst.msk [vmem:[#allocation2] sm:$0xff] %vm509, %v1105
  %1150 = vst.msk [vmem:[#allocation2 + $0x8] sm:$0xff] %vm509, %v1106
  %1151 = vst.msk [vmem:[#allocation2 + $0x10] sm:$0xff] %vm509, %v1107
  %1152 = vst.msk [vmem:[#allocation2 + $0x18] sm:$0xff] %vm509, %v1108
  %1153 = vst.msk [vmem:[#allocation2 + $0x20] sm:$0xff] %vm509, %v1109
  %1154 = vst.msk [vmem:[#allocation2 + $0x28] sm:$0xff] %vm509, %v1110
  %1155 = vst.msk [vmem:[#allocation2 + $0x30] sm:$0xff] %vm509, %v1111
  %1156 = vst.msk [vmem:[#allocation2 + $0x38] sm:$0xff] %vm509, %v1112
  %1157 = vst.msk [vmem:[#allocation2 + $0x40] sm:$0xff] %vm509, %v1113
  %1158 = vst.msk [vmem:[#allocation2 + $0x48] sm:$0xff] %vm509, %v1114
  %1159 = vst.msk [vmem:[#allocation2 + $0x50] sm:$0xff] %vm509, %v1115
  %1160 = vst.msk [vmem:[#allocation2 + $0x58] sm:$0xff] %vm509, %v1116
  %1161 = vst.msk [vmem:[#allocation2 + $0x60] sm:$0xff] %vm509, %v1117
  %1162 = vst.msk [vmem:[#allocation2 + $0x68] sm:$0xff] %vm509, %v1118
  %1163 = vst.msk [vmem:[#allocation2 + $0x70] sm:$0xff] %vm509, %v1119
  %1164 = vst.msk [vmem:[#allocation2 + $0x78] sm:$0xff] %vm509, %v1120
  %1165 = vst.msk [vmem:[#allocation2 + $0x80] sm:$0xff] %vm509, %v1121
  %1166 = vst.msk [vmem:[#allocation2 + $0x88] sm:$0xff] %vm509, %v1122
  %1167 = vst.msk [vmem:[#allocation2 + $0x90] sm:$0xff] %vm509, %v1123
  %1168 = vst.msk [vmem:[#allocation2 + $0x98] sm:$0xff] %vm509, %v1124
  %1169 = vst.msk [vmem:[#allocation2 + $0xa0] sm:$0xff] %vm509, %v1125
  %1170 = vst.msk [vmem:[#allocation2 + $0xa8] sm:$0xff] %vm509, %v1126
  %1171 = vst.msk [vmem:[#allocation2 + $0xb0] sm:$0xff] %vm509, %v1127
  %1172 = vst.msk [vmem:[#allocation2 + $0xb8] sm:$0xff] %vm509, %v1128
  %1173 = vst.msk [vmem:[#allocation2 + $0xc0] sm:$0xff] %vm509, %v1129
  %1174 = vst.msk [vmem:[#allocation2 + $0xc8] sm:$0xff] %vm509, %v1130
  %1175 = vst.msk [vmem:[#allocation2 + $0xd0] sm:$0xff] %vm509, %v1131
  %1176 = vst.msk [vmem:[#allocation2 + $0xd8] sm:$0xff] %vm509, %v1132
  %1177 = vst.msk [vmem:[#allocation2 + $0xe0] sm:$0xff] %vm509, %v1133
  %1178 = vst.msk [vmem:[#allocation2 + $0xe8] sm:$0xff] %vm509, %v1134
  %1179 = vst.msk [vmem:[#allocation2 + $0xf0] sm:$0xff] %vm509, %v1135
  %1180 = vst.msk [vmem:[#allocation2 + $0xf8] sm:$0xff] %vm509, %v1136
  %1181 = vst.msk [vmem:[#allocation2 + $0x100] sm:$0xff] %vm509, %v1137
  %1182 = vst.msk [vmem:[#allocation2 + $0x108] sm:$0xff] %vm509, %v1138
  %1183 = vst.msk [vmem:[#allocation2 + $0x110] sm:$0xff] %vm509, %v1139
  %1184 = vst.msk [vmem:[#allocation2 + $0x118] sm:$0xff] %vm509, %v1140
  %1185 = vst.msk [vmem:[#allocation2 + $0x120] sm:$0xff] %vm509, %v1141
  %1186 = vst.msk [vmem:[#allocation2 + $0x128] sm:$0xff] %vm509, %v1142
  %1187 = vst.msk [vmem:[#allocation2 + $0x130] sm:$0xff] %vm509, %v1143
  %1188 = vst.msk [vmem:[#allocation2 + $0x138] sm:$0xff] %vm509, %v1144
  %1189 = vst.msk [vmem:[#allocation2 + $0x140] sm:$0xff] %vm509, %v1145
  %1190 = vst.msk [vmem:[#allocation2 + $0x148] sm:$0xff] %vm509, %v1146
  %1191 = vst.msk [vmem:[#allocation2 + $0x150] sm:$0xff] %vm509, %v1147
  %1192 = vst.msk [vmem:[#allocation2 + $0x158] sm:$0xff] %vm509, %v1148
  %v1193 = vld [vmem:[#allocation2] sm:$0xff]
  %v1194 = vld [vmem:[#allocation2 + $0x8] sm:$0xff]
  %v1195 = vld [vmem:[#allocation2 + $0x10] sm:$0xff]
  %v1196 = vld [vmem:[#allocation2 + $0x18] sm:$0xff]
  %v1197 = vld [vmem:[#allocation2 + $0x20] sm:$0xff]
  %v1198 = vld [vmem:[#allocation2 + $0x28] sm:$0xff]
  %v1199 = vld [vmem:[#allocation2 + $0x30] sm:$0xff]
  %v1200 = vld [vmem:[#allocation2 + $0x38] sm:$0xff]
  %v1201 = vld [vmem:[#allocation2 + $0x40] sm:$0xff]
  %v1202 = vld [vmem:[#allocation2 + $0x48] sm:$0xff]
  %v1203 = vld [vmem:[#allocation2 + $0x50] sm:$0xff]
  %v1204 = vld [vmem:[#allocation2 + $0x58] sm:$0xff]
  %v1205 = vld [vmem:[#allocation2 + $0x60] sm:$0xff]
  %v1206 = vld [vmem:[#allocation2 + $0x68] sm:$0xff]
  %v1207 = vld [vmem:[#allocation2 + $0x70] sm:$0xff]
  %v1208 = vld [vmem:[#allocation2 + $0x78] sm:$0xff]
  %v1209 = vld [vmem:[#allocation2 + $0x80] sm:$0xff]
  %v1210 = vld [vmem:[#allocation2 + $0x88] sm:$0xff]
  %v1211 = vld [vmem:[#allocation2 + $0x90] sm:$0xff]
  %v1212 = vld [vmem:[#allocation2 + $0x98] sm:$0xff]
  %v1213 = vld [vmem:[#allocation2 + $0xa0] sm:$0xff]
  %v1214 = vld [vmem:[#allocation2 + $0xa8] sm:$0xff]
  %v1215 = vld [vmem:[#allocation2 + $0xb0] sm:$0xff]
  %v1216 = vld [vmem:[#allocation2 + $0xb8] sm:$0xff]
  %v1217 = vld [vmem:[#allocation2 + $0xc0] sm:$0xff]
  %v1218 = vld [vmem:[#allocation2 + $0xc8] sm:$0xff]
  %v1219 = vld [vmem:[#allocation2 + $0xd0] sm:$0xff]
  %v1220 = vld [vmem:[#allocation2 + $0xd8] sm:$0xff]
  %v1221 = vld [vmem:[#allocation2 + $0xe0] sm:$0xff]
  %v1222 = vld [vmem:[#allocation2 + $0xe8] sm:$0xff]
  %v1223 = vld [vmem:[#allocation2 + $0xf0] sm:$0xff]
  %v1224 = vld [vmem:[#allocation2 + $0xf8] sm:$0xff]
  %v1225 = vld [vmem:[#allocation2 + $0x100] sm:$0xff]
  %v1226 = vld [vmem:[#allocation2 + $0x108] sm:$0xff]
  %v1227 = vld [vmem:[#allocation2 + $0x110] sm:$0xff]
  %v1228 = vld [vmem:[#allocation2 + $0x118] sm:$0xff]
  %v1229 = vld [vmem:[#allocation2 + $0x120] sm:$0xff]
  %v1230 = vld [vmem:[#allocation2 + $0x128] sm:$0xff]
  %v1231 = vld [vmem:[#allocation2 + $0x130] sm:$0xff]
  %v1232 = vld [vmem:[#allocation2 + $0x138] sm:$0xff]
  %v1233 = vld [vmem:[#allocation2 + $0x140] sm:$0xff]
  %v1234 = vld [vmem:[#allocation2 + $0x148] sm:$0xff]
  %v1235 = vld [vmem:[#allocation2 + $0x150] sm:$0xff]
  %v1236 = vld [vmem:[#allocation2 + $0x158] sm:$0xff]
  %s1237 = scalar_lea.vmem %s1, 704
  %v1238 = vld [vmem:[%s1237] sm:$0xff]
  %v1239 = vld [vmem:[%s1237 + $0x8] sm:$0xff]
  %v1240 = vld [vmem:[%s1237 + $0x10] sm:$0xff]
  %v1241 = vld [vmem:[%s1237 + $0x18] sm:$0xff]
  %v1242 = vld [vmem:[%s1237 + $0x20] sm:$0xff]
  %v1243 = vld [vmem:[%s1237 + $0x28] sm:$0xff]
  %v1244 = vld [vmem:[%s1237 + $0x30] sm:$0xff]
  %v1245 = vld [vmem:[%s1237 + $0x38] sm:$0xff]
  %v1246 = vld [vmem:[%s1237 + $0x40] sm:$0xff]
  %v1247 = vld [vmem:[%s1237 + $0x48] sm:$0xff]
  %v1248 = vld [vmem:[%s1237 + $0x50] sm:$0xff]
  %v1249 = vld [vmem:[%s1237 + $0x58] sm:$0xff]
  %v1250 = vld [vmem:[%s1237 + $0x60] sm:$0xff]
  %v1251 = vld [vmem:[%s1237 + $0x68] sm:$0xff]
  %v1252 = vld [vmem:[%s1237 + $0x70] sm:$0xff]
  %v1253 = vld [vmem:[%s1237 + $0x78] sm:$0xff]
  %v1254 = vld [vmem:[%s1237 + $0x80] sm:$0xff]
  %v1255 = vld [vmem:[%s1237 + $0x88] sm:$0xff]
  %v1256 = vld [vmem:[%s1237 + $0x90] sm:$0xff]
  %v1257 = vld [vmem:[%s1237 + $0x98] sm:$0xff]
  %v1258 = vld [vmem:[%s1237 + $0xa0] sm:$0xff]
  %v1259 = vld [vmem:[%s1237 + $0xa8] sm:$0xff]
  %v1260 = vld [vmem:[%s1237 + $0xb0] sm:$0xff]
  %v1261 = vld [vmem:[%s1237 + $0xb8] sm:$0xff]
  %v1262 = vld [vmem:[%s1237 + $0xc0] sm:$0xff]
  %v1263 = vld [vmem:[%s1237 + $0xc8] sm:$0xff]
  %v1264 = vld [vmem:[%s1237 + $0xd0] sm:$0xff]
  %v1265 = vld [vmem:[%s1237 + $0xd8] sm:$0xff]
  %v1266 = vld [vmem:[%s1237 + $0xe0] sm:$0xff]
  %v1267 = vld [vmem:[%s1237 + $0xe8] sm:$0xff]
  %v1268 = vld [vmem:[%s1237 + $0xf0] sm:$0xff]
  %v1269 = vld [vmem:[%s1237 + $0xf8] sm:$0xff]
  %v1270 = vld [vmem:[%s1237 + $0x100] sm:$0xff]
  %v1271 = vld [vmem:[%s1237 + $0x108] sm:$0xff]
  %v1272 = vld [vmem:[%s1237 + $0x110] sm:$0xff]
  %v1273 = vld [vmem:[%s1237 + $0x118] sm:$0xff]
  %v1274 = vld [vmem:[%s1237 + $0x120] sm:$0xff]
  %v1275 = vld [vmem:[%s1237 + $0x128] sm:$0xff]
  %v1276 = vld [vmem:[%s1237 + $0x130] sm:$0xff]
  %v1277 = vld [vmem:[%s1237 + $0x138] sm:$0xff]
  %v1278 = vld [vmem:[%s1237 + $0x140] sm:$0xff]
  %v1279 = vld [vmem:[%s1237 + $0x148] sm:$0xff]
  %v1280 = vld [vmem:[%s1237 + $0x150] sm:$0xff]
  %v1281 = vld [vmem:[%s1237 + $0x158] sm:$0xff]
  %v1282 = vld [vmem:[%s0] sm:$0xff]
  %v1283 = vld [vmem:[%s0 + $0x8] sm:$0xff]
  %v1284 = vld [vmem:[%s0 + $0x10] sm:$0xff]
  %v1285 = vld [vmem:[%s0 + $0x18] sm:$0xff]
  %v1286 = vld [vmem:[%s0 + $0x20] sm:$0xff]
  %v1287 = vld [vmem:[%s0 + $0x28] sm:$0xff]
  %v1288 = vld [vmem:[%s0 + $0x30] sm:$0xff]
  %v1289 = vld [vmem:[%s0 + $0x38] sm:$0xff]
  %v1290 = vld [vmem:[%s0 + $0x40] sm:$0xff]
  %1300 = vrot.lane.b32.xlu0 %v1282, 126
  %v1301 = vpop.permute.xlu0 %1300
  %1302 = vrot.lane.b32.xlu0 %v1283, 126
  %v1303 = vpop.permute.xlu0 %1302
  %1304 = vrot.lane.b32.xlu0 %v1284, 126
  %v1305 = vpop.permute.xlu0 %1304
  %1306 = vrot.lane.b32.xlu0 %v1285, 126
  %v1307 = vpop.permute.xlu0 %1306
  %1308 = vrot.lane.b32.xlu0 %v1286, 126
  %v1309 = vpop.permute.xlu0 %1308
  %1310 = vrot.lane.b32.xlu0 %v1287, 126
  %v1311 = vpop.permute.xlu0 %1310
  %1312 = vrot.lane.b32.xlu0 %v1288, 126
  %v1313 = vpop.permute.xlu0 %1312
  %1314 = vrot.lane.b32.xlu0 %v1289, 126
  %v1315 = vpop.permute.xlu0 %1314
  %1316 = vrot.lane.b32.xlu0 %v1290, 126
  %v1317 = vpop.permute.xlu0 %1316
  %v1328 = vsel %vm91, %v1238, 0
  %v1331 = vsel %vm91, %v1239, 0
  %v1334 = vsel %vm91, %v1240, 0
  %v1337 = vsel %vm91, %v1241, 0
  %v1340 = vsel %vm91, %v1242, 0
  %v1343 = vsel %vm91, %v1243, 0
  %v1346 = vsel %vm91, %v1244, 0
  %v1349 = vsel %vm91, %v1245, 0
  %v1352 = vsel %vm91, %v1246, 0
  %v1355 = vsel %vm91, %v1247, 0
  %v1358 = vsel %vm91, %v1248, 0
  %v1361 = vsel %vm91, %v1249, 0
  %v1364 = vsel %vm91, %v1250, 0
  %v1367 = vsel %vm91, %v1251, 0
  %v1370 = vsel %vm91, %v1252, 0
  %v1373 = vsel %vm91, %v1253, 0
  %v1376 = vsel %vm91, %v1254, 0
  %v1379 = vsel %vm91, %v1255, 0
  %v1382 = vsel %vm91, %v1256, 0
  %v1385 = vsel %vm91, %v1257, 0
  %v1388 = vsel %vm91, %v1258, 0
  %v1391 = vsel %vm91, %v1259, 0
  %v1394 = vsel %vm91, %v1260, 0
  %v1397 = vsel %vm91, %v1261, 0
  %v1400 = vsel %vm91, %v1262, 0
  %v1403 = vsel %vm91, %v1263, 0
  %v1406 = vsel %vm91, %v1264, 0
  %v1409 = vsel %vm91, %v1265, 0
  %v1412 = vsel %vm91, %v1266, 0
  %v1415 = vsel %vm91, %v1267, 0
  %v1418 = vsel %vm91, %v1268, 0
  %v1421 = vsel %vm91, %v1269, 0
  %v1424 = vsel %vm91, %v1270, 0
  %v1427 = vsel %vm91, %v1271, 0
  %v1430 = vsel %vm91, %v1272, 0
  %v1433 = vsel %vm91, %v1273, 0
  %v1436 = vsel %vm91, %v1274, 0
  %v1439 = vsel %vm91, %v1275, 0
  %v1442 = vsel %vm91, %v1276, 0
  %v1445 = vsel %vm91, %v1277, 0
  %v1448 = vsel %vm91, %v1278, 0
  %v1451 = vsel %vm91, %v1279, 0
  %v1454 = vsel %vm91, %v1280, 0
  %v1457 = vsel %vm91, %v1281, 0
  %1459 = vmatprep.subr.mxu0 0.0
  %1460 = vmatpush1.msra.mxu0 0.0
  %1461 = vmatprep.subr.mxu0 0.0
  %1462 = vmatpush1.msra.mxu0 0.0
  %1463 = vmatprep.subr.mxu0 0.0
  %1464 = vmatpush1.msra.mxu0 0.0
  %1465 = vmatprep.subr.mxu0 0.0
  %1466 = vmatpush1.msra.mxu0 0.0
  %1467 = vmatprep.subr.mxu0 0.0
  %1468 = vmatpush1.msra.mxu0 0.0
  %1469 = vmatprep.subr.mxu0 0.0
  %1470 = vmatpush1.msra.mxu0 0.0
  %1471 = vmatprep.subr.mxu0 0.0
  %1472 = vmatpush1.msra.mxu0 0.0
  %1473 = vmatprep.subr.mxu0 0.0
  %1474 = vmatpush1.msra.mxu0 %v1317
  %1475 = vmatprep.subr.mxu0 0.0
  %1476 = vmatpush1.msra.mxu0 %v1315
  %1477 = vmatprep.subr.mxu0 0.0
  %1478 = vmatpush1.msra.mxu0 %v1313
  %1479 = vmatprep.subr.mxu0 0.0
  %1480 = vmatpush1.msra.mxu0 %v1311
  %1481 = vmatprep.subr.mxu0 0.0
  %1482 = vmatpush1.msra.mxu0 %v1309
  %1483 = vmatprep.subr.mxu0 0.0
  %1484 = vmatpush1.msra.mxu0 %v1307
  %1485 = vmatprep.subr.mxu0 0.0
  %1486 = vmatpush1.msra.mxu0 %v1305
  %1487 = vmatprep.subr.mxu0 0.0
  %1488 = vmatpush1.msra.mxu0 %v1303
  %1489 = vmatprep.subr.mxu0 0.0
  %1490 = vmatpush1.msra.mxu0 %v1301
  %1491 = vmatprep.subr.mxu0 0.0
  %1492 = vmatpush2.msra.mxu0 0.0
  %1493 = vmatprep.subr.mxu0 0.0
  %1494 = vmatpush2.msra.mxu0 0.0
  %1495 = vmatprep.subr.mxu0 0.0
  %1496 = vmatpush2.msra.mxu0 0.0
  %1497 = vmatprep.subr.mxu0 0.0
  %1498 = vmatpush2.msra.mxu0 0.0
  %1499 = vmatprep.subr.mxu0 0.0
  %1500 = vmatpush2.msra.mxu0 0.0
  %1501 = vmatprep.subr.mxu0 0.0
  %1502 = vmatpush2.msra.mxu0 0.0
  %1503 = vmatprep.subr.mxu0 0.0
  %1504 = vmatpush2.msra.mxu0 0.0
  %1505 = vmatprep.subr.mxu0 0.0
  %1506 = vmatpush2.msra.mxu0 0.0
  %1507 = vmatprep.subr.mxu0 0.0
  %1508 = vmatpush2.msra.mxu0 0.0
  %1509 = vmatprep.subr.mxu0 0.0
  %1510 = vmatpush2.msra.mxu0 0.0
  %1511 = vmatprep.subr.mxu0 0.0
  %1512 = vmatpush2.msra.mxu0 0.0
  %1513 = vmatprep.subr.mxu0 0.0
  %1514 = vmatpush2.msra.mxu0 0.0
  %1515 = vmatprep.subr.mxu0 0.0
  %1516 = vmatpush2.msra.mxu0 0.0
  %1517 = vmatprep.subr.mxu0 0.0
  %1518 = vmatpush2.msra.mxu0 0.0
  %1519 = vmatprep.subr.mxu0 0.0
  %1520 = vmatpush2.msra.mxu0 0.0
  %1521 = vmatprep.subr.mxu0 0.0
  %1522 = vmatpush2.msra.mxu0 0.0
  %1523 = vmatprep.mubr.f32.mxu0 0.0
  %1524 = vmatmul.mubr.f32.gmra.mxu0 %v1328
  %v1525 = vpop.f32.mrf.mxu0
  %v1526 = vadd.f32 0.0, %v1525
  %v1527 = vpop.f32.mrf.mxu0
  %1528 = vmatprep.mubr.f32.mxu0 0.0
  %1529 = vmatmul.mubr.f32.gmra.mxu0 %v1331
  %v1530 = vpop.f32.mrf.mxu0
  %v1531 = vadd.f32 0.0, %v1530
  %v1532 = vpop.f32.mrf.mxu0
  %1533 = vmatprep.mubr.f32.mxu0 0.0
  %1534 = vmatmul.mubr.f32.gmra.mxu0 %v1334
  %v1535 = vpop.f32.mrf.mxu0
  %v1536 = vadd.f32 0.0, %v1535
  %v1537 = vpop.f32.mrf.mxu0
  %1538 = vmatprep.mubr.f32.mxu0 0.0
  %1539 = vmatmul.mubr.f32.gmra.mxu0 %v1337
  %v1540 = vpop.f32.mrf.mxu0
  %v1541 = vadd.f32 0.0, %v1540
  %v1542 = vpop.f32.mrf.mxu0
  %1543 = vmatprep.mubr.f32.mxu0 0.0
  %1544 = vmatmul.mubr.f32.gmra.mxu0 %v1340
  %v1545 = vpop.f32.mrf.mxu0
  %v1546 = vadd.f32 0.0, %v1545
  %v1547 = vpop.f32.mrf.mxu0
  %1548 = vmatprep.mubr.f32.mxu0 0.0
  %1549 = vmatmul.mubr.f32.gmra.mxu0 %v1343
  %v1550 = vpop.f32.mrf.mxu0
  %v1551 = vadd.f32 0.0, %v1550
  %v1552 = vpop.f32.mrf.mxu0
  %1553 = vmatprep.mubr.f32.mxu0 0.0
  %1554 = vmatmul.mubr.f32.gmra.mxu0 %v1346
  %v1555 = vpop.f32.mrf.mxu0
  %v1556 = vadd.f32 0.0, %v1555
  %v1557 = vpop.f32.mrf.mxu0
  %1558 = vmatprep.mubr.f32.mxu0 0.0
  %1559 = vmatmul.mubr.f32.gmra.mxu0 %v1349
  %v1560 = vpop.f32.mrf.mxu0
  %v1561 = vadd.f32 0.0, %v1560
  %v1562 = vpop.f32.mrf.mxu0
  %1563 = vmatprep.mubr.f32.mxu0 0.0
  %1564 = vmatmul.mubr.f32.gmra.mxu0 %v1352
  %v1565 = vpop.f32.mrf.mxu0
  %v1566 = vadd.f32 0.0, %v1565
  %v1567 = vpop.f32.mrf.mxu0
  %1568 = vmatprep.mubr.f32.mxu0 0.0
  %1569 = vmatmul.mubr.f32.gmra.mxu0 %v1355
  %v1570 = vpop.f32.mrf.mxu0
  %v1571 = vadd.f32 0.0, %v1570
  %v1572 = vpop.f32.mrf.mxu0
  %1573 = vmatprep.mubr.f32.mxu0 0.0
  %1574 = vmatmul.mubr.f32.gmra.mxu0 %v1358
  %v1575 = vpop.f32.mrf.mxu0
  %v1576 = vadd.f32 0.0, %v1575
  %v1577 = vpop.f32.mrf.mxu0
  %1578 = vmatprep.mubr.f32.mxu0 0.0
  %1579 = vmatmul.mubr.f32.gmra.mxu0 %v1361
  %v1580 = vpop.f32.mrf.mxu0
  %v1581 = vadd.f32 0.0, %v1580
  %v1582 = vpop.f32.mrf.mxu0
  %1583 = vmatprep.mubr.f32.mxu0 0.0
  %1584 = vmatmul.mubr.f32.gmra.mxu0 %v1364
  %v1585 = vpop.f32.mrf.mxu0
  %v1586 = vadd.f32 0.0, %v1585
  %v1587 = vpop.f32.mrf.mxu0
  %1588 = vmatprep.mubr.f32.mxu0 0.0
  %1589 = vmatmul.mubr.f32.gmra.mxu0 %v1367
  %v1590 = vpop.f32.mrf.mxu0
  %v1591 = vadd.f32 0.0, %v1590
  %v1592 = vpop.f32.mrf.mxu0
  %1593 = vmatprep.mubr.f32.mxu0 0.0
  %1594 = vmatmul.mubr.f32.gmra.mxu0 %v1370
  %v1595 = vpop.f32.mrf.mxu0
  %v1596 = vadd.f32 0.0, %v1595
  %v1597 = vpop.f32.mrf.mxu0
  %1598 = vmatprep.mubr.f32.mxu0 0.0
  %1599 = vmatmul.mubr.f32.gmra.mxu0 %v1373
  %v1600 = vpop.f32.mrf.mxu0
  %v1601 = vadd.f32 0.0, %v1600
  %v1602 = vpop.f32.mrf.mxu0
  %1603 = vmatprep.mubr.f32.mxu0 0.0
  %1604 = vmatmul.mubr.f32.gmra.mxu0 %v1376
  %v1605 = vpop.f32.mrf.mxu0
  %v1606 = vadd.f32 0.0, %v1605
  %v1607 = vpop.f32.mrf.mxu0
  %1608 = vmatprep.mubr.f32.mxu0 0.0
  %1609 = vmatmul.mubr.f32.gmra.mxu0 %v1379
  %v1610 = vpop.f32.mrf.mxu0
  %v1611 = vadd.f32 0.0, %v1610
  %v1612 = vpop.f32.mrf.mxu0
  %1613 = vmatprep.mubr.f32.mxu0 0.0
  %1614 = vmatmul.mubr.f32.gmra.mxu0 %v1382
  %v1615 = vpop.f32.mrf.mxu0
  %v1616 = vadd.f32 0.0, %v1615
  %v1617 = vpop.f32.mrf.mxu0
  %1618 = vmatprep.mubr.f32.mxu0 0.0
  %1619 = vmatmul.mubr.f32.gmra.mxu0 %v1385
  %v1620 = vpop.f32.mrf.mxu0
  %v1621 = vadd.f32 0.0, %v1620
  %v1622 = vpop.f32.mrf.mxu0
  %1623 = vmatprep.mubr.f32.mxu0 0.0
  %1624 = vmatmul.mubr.f32.gmra.mxu0 %v1388
  %v1625 = vpop.f32.mrf.mxu0
  %v1626 = vadd.f32 0.0, %v1625
  %v1627 = vpop.f32.mrf.mxu0
  %1628 = vmatprep.mubr.f32.mxu0 0.0
  %1629 = vmatmul.mubr.f32.gmra.mxu0 %v1391
  %v1630 = vpop.f32.mrf.mxu0
  %v1631 = vadd.f32 0.0, %v1630
  %v1632 = vpop.f32.mrf.mxu0
  %1633 = vmatprep.mubr.f32.mxu0 0.0
  %1634 = vmatmul.mubr.f32.gmra.mxu0 %v1394
  %v1635 = vpop.f32.mrf.mxu0
  %v1636 = vadd.f32 0.0, %v1635
  %v1637 = vpop.f32.mrf.mxu0
  %1638 = vmatprep.mubr.f32.mxu0 0.0
  %1639 = vmatmul.mubr.f32.gmra.mxu0 %v1397
  %v1640 = vpop.f32.mrf.mxu0
  %v1641 = vadd.f32 0.0, %v1640
  %v1642 = vpop.f32.mrf.mxu0
  %1643 = vmatprep.mubr.f32.mxu0 0.0
  %1644 = vmatmul.mubr.f32.gmra.mxu0 %v1400
  %v1645 = vpop.f32.mrf.mxu0
  %v1646 = vadd.f32 0.0, %v1645
  %v1647 = vpop.f32.mrf.mxu0
  %1648 = vmatprep.mubr.f32.mxu0 0.0
  %1649 = vmatmul.mubr.f32.gmra.mxu0 %v1403
  %v1650 = vpop.f32.mrf.mxu0
  %v1651 = vadd.f32 0.0, %v1650
  %v1652 = vpop.f32.mrf.mxu0
  %1653 = vmatprep.mubr.f32.mxu0 0.0
  %1654 = vmatmul.mubr.f32.gmra.mxu0 %v1406
  %v1655 = vpop.f32.mrf.mxu0
  %v1656 = vadd.f32 0.0, %v1655
  %v1657 = vpop.f32.mrf.mxu0
  %1658 = vmatprep.mubr.f32.mxu0 0.0
  %1659 = vmatmul.mubr.f32.gmra.mxu0 %v1409
  %v1660 = vpop.f32.mrf.mxu0
  %v1661 = vadd.f32 0.0, %v1660
  %v1662 = vpop.f32.mrf.mxu0
  %1663 = vmatprep.mubr.f32.mxu0 0.0
  %1664 = vmatmul.mubr.f32.gmra.mxu0 %v1412
  %v1665 = vpop.f32.mrf.mxu0
  %v1666 = vadd.f32 0.0, %v1665
  %v1667 = vpop.f32.mrf.mxu0
  %1668 = vmatprep.mubr.f32.mxu0 0.0
  %1669 = vmatmul.mubr.f32.gmra.mxu0 %v1415
  %v1670 = vpop.f32.mrf.mxu0
  %v1671 = vadd.f32 0.0, %v1670
  %v1672 = vpop.f32.mrf.mxu0
  %1673 = vmatprep.mubr.f32.mxu0 0.0
  %1674 = vmatmul.mubr.f32.gmra.mxu0 %v1418
  %v1675 = vpop.f32.mrf.mxu0
  %v1676 = vadd.f32 0.0, %v1675
  %v1677 = vpop.f32.mrf.mxu0
  %1678 = vmatprep.mubr.f32.mxu0 0.0
  %1679 = vmatmul.mubr.f32.gmra.mxu0 %v1421
  %v1680 = vpop.f32.mrf.mxu0
  %v1681 = vadd.f32 0.0, %v1680
  %v1682 = vpop.f32.mrf.mxu0
  %1683 = vmatprep.mubr.f32.mxu0 0.0
  %1684 = vmatmul.mubr.f32.gmra.mxu0 %v1424
  %v1685 = vpop.f32.mrf.mxu0
  %v1686 = vadd.f32 0.0, %v1685
  %v1687 = vpop.f32.mrf.mxu0
  %1688 = vmatprep.mubr.f32.mxu0 0.0
  %1689 = vmatmul.mubr.f32.gmra.mxu0 %v1427
  %v1690 = vpop.f32.mrf.mxu0
  %v1691 = vadd.f32 0.0, %v1690
  %v1692 = vpop.f32.mrf.mxu0
  %1693 = vmatprep.mubr.f32.mxu0 0.0
  %1694 = vmatmul.mubr.f32.gmra.mxu0 %v1430
  %v1695 = vpop.f32.mrf.mxu0
  %v1696 = vadd.f32 0.0, %v1695
  %v1697 = vpop.f32.mrf.mxu0
  %1698 = vmatprep.mubr.f32.mxu0 0.0
  %1699 = vmatmul.mubr.f32.gmra.mxu0 %v1433
  %v1700 = vpop.f32.mrf.mxu0
  %v1701 = vadd.f32 0.0, %v1700
  %v1702 = vpop.f32.mrf.mxu0
  %1703 = vmatprep.mubr.f32.mxu0 0.0
  %1704 = vmatmul.mubr.f32.gmra.mxu0 %v1436
  %v1705 = vpop.f32.mrf.mxu0
  %v1706 = vadd.f32 0.0, %v1705
  %v1707 = vpop.f32.mrf.mxu0
  %1708 = vmatprep.mubr.f32.mxu0 0.0
  %1709 = vmatmul.mubr.f32.gmra.mxu0 %v1439
  %v1710 = vpop.f32.mrf.mxu0
  %v1711 = vadd.f32 0.0, %v1710
  %v1712 = vpop.f32.mrf.mxu0
  %1713 = vmatprep.mubr.f32.mxu0 0.0
  %1714 = vmatmul.mubr.f32.gmra.mxu0 %v1442
  %v1715 = vpop.f32.mrf.mxu0
  %v1716 = vadd.f32 0.0, %v1715
  %v1717 = vpop.f32.mrf.mxu0
  %1718 = vmatprep.mubr.f32.mxu0 0.0
  %1719 = vmatmul.mubr.f32.gmra.mxu0 %v1445
  %v1720 = vpop.f32.mrf.mxu0
  %v1721 = vadd.f32 0.0, %v1720
  %v1722 = vpop.f32.mrf.mxu0
  %1723 = vmatprep.mubr.f32.mxu0 0.0
  %1724 = vmatmul.mubr.f32.gmra.mxu0 %v1448
  %v1725 = vpop.f32.mrf.mxu0
  %v1726 = vadd.f32 0.0, %v1725
  %v1727 = vpop.f32.mrf.mxu0
  %1728 = vmatprep.mubr.f32.mxu0 0.0
  %1729 = vmatmul.mubr.f32.gmra.mxu0 %v1451
  %v1730 = vpop.f32.mrf.mxu0
  %v1731 = vadd.f32 0.0, %v1730
  %v1732 = vpop.f32.mrf.mxu0
  %1733 = vmatprep.mubr.f32.mxu0 0.0
  %1734 = vmatmul.mubr.f32.gmra.mxu0 %v1454
  %v1735 = vpop.f32.mrf.mxu0
  %v1736 = vadd.f32 0.0, %v1735
  %v1737 = vpop.f32.mrf.mxu0
  %1738 = vmatprep.mubr.f32.mxu0 0.0
  %1739 = vmatmul.mubr.f32.gmra.mxu0 %v1457
  %v1740 = vpop.f32.mrf.mxu0
  %v1741 = vadd.f32 0.0, %v1740
  %v1742 = vpop.f32.mrf.mxu0
  %1743 = vdwg.mxu0
  %v1744 = vadd.f32 %v1193, %v1526
  %v1745 = vadd.f32 %v1194, %v1531
  %v1746 = vadd.f32 %v1195, %v1536
  %v1747 = vadd.f32 %v1196, %v1541
  %v1748 = vadd.f32 %v1197, %v1546
  %v1749 = vadd.f32 %v1198, %v1551
  %v1750 = vadd.f32 %v1199, %v1556
  %v1751 = vadd.f32 %v1200, %v1561
  %v1752 = vadd.f32 %v1201, %v1566
  %v1753 = vadd.f32 %v1202, %v1571
  %v1754 = vadd.f32 %v1203, %v1576
  %v1755 = vadd.f32 %v1204, %v1581
  %v1756 = vadd.f32 %v1205, %v1586
  %v1757 = vadd.f32 %v1206, %v1591
  %v1758 = vadd.f32 %v1207, %v1596
  %v1759 = vadd.f32 %v1208, %v1601
  %v1760 = vadd.f32 %v1209, %v1606
  %v1761 = vadd.f32 %v1210, %v1611
  %v1762 = vadd.f32 %v1211, %v1616
  %v1763 = vadd.f32 %v1212, %v1621
  %v1764 = vadd.f32 %v1213, %v1626
  %v1765 = vadd.f32 %v1214, %v1631
  %v1766 = vadd.f32 %v1215, %v1636
  %v1767 = vadd.f32 %v1216, %v1641
  %v1768 = vadd.f32 %v1217, %v1646
  %v1769 = vadd.f32 %v1218, %v1651
  %v1770 = vadd.f32 %v1219, %v1656
  %v1771 = vadd.f32 %v1220, %v1661
  %v1772 = vadd.f32 %v1221, %v1666
  %v1773 = vadd.f32 %v1222, %v1671
  %v1774 = vadd.f32 %v1223, %v1676
  %v1775 = vadd.f32 %v1224, %v1681
  %v1776 = vadd.f32 %v1225, %v1686
  %v1777 = vadd.f32 %v1226, %v1691
  %v1778 = vadd.f32 %v1227, %v1696
  %v1779 = vadd.f32 %v1228, %v1701
  %v1780 = vadd.f32 %v1229, %v1706
  %v1781 = vadd.f32 %v1230, %v1711
  %v1782 = vadd.f32 %v1231, %v1716
  %v1783 = vadd.f32 %v1232, %v1721
  %v1784 = vadd.f32 %v1233, %v1726
  %v1785 = vadd.f32 %v1234, %v1731
  %v1786 = vadd.f32 %v1235, %v1736
  %v1787 = vadd.f32 %v1236, %v1741
  %1788 = vst.msk [vmem:[#allocation2] sm:$0xff] %vm509, %v1744
  %1789 = vst.msk [vmem:[#allocation2 + $0x8] sm:$0xff] %vm509, %v1745
  %1790 = vst.msk [vmem:[#allocation2 + $0x10] sm:$0xff] %vm509, %v1746
  %1791 = vst.msk [vmem:[#allocation2 + $0x18] sm:$0xff] %vm509, %v1747
  %1792 = vst.msk [vmem:[#allocation2 + $0x20] sm:$0xff] %vm509, %v1748
  %1793 = vst.msk [vmem:[#allocation2 + $0x28] sm:$0xff] %vm509, %v1749
  %1794 = vst.msk [vmem:[#allocation2 + $0x30] sm:$0xff] %vm509, %v1750
  %1795 = vst.msk [vmem:[#allocation2 + $0x38] sm:$0xff] %vm509, %v1751
  %1796 = vst.msk [vmem:[#allocation2 + $0x40] sm:$0xff] %vm509, %v1752
  %1797 = vst.msk [vmem:[#allocation2 + $0x48] sm:$0xff] %vm509, %v1753
  %1798 = vst.msk [vmem:[#allocation2 + $0x50] sm:$0xff] %vm509, %v1754
  %1799 = vst.msk [vmem:[#allocation2 + $0x58] sm:$0xff] %vm509, %v1755
  %1800 = vst.msk [vmem:[#allocation2 + $0x60] sm:$0xff] %vm509, %v1756
  %1801 = vst.msk [vmem:[#allocation2 + $0x68] sm:$0xff] %vm509, %v1757
  %1802 = vst.msk [vmem:[#allocation2 + $0x70] sm:$0xff] %vm509, %v1758
  %1803 = vst.msk [vmem:[#allocation2 + $0x78] sm:$0xff] %vm509, %v1759
  %1804 = vst.msk [vmem:[#allocation2 + $0x80] sm:$0xff] %vm509, %v1760
  %1805 = vst.msk [vmem:[#allocation2 + $0x88] sm:$0xff] %vm509, %v1761
  %1806 = vst.msk [vmem:[#allocation2 + $0x90] sm:$0xff] %vm509, %v1762
  %1807 = vst.msk [vmem:[#allocation2 + $0x98] sm:$0xff] %vm509, %v1763
  %1808 = vst.msk [vmem:[#allocation2 + $0xa0] sm:$0xff] %vm509, %v1764
  %1809 = vst.msk [vmem:[#allocation2 + $0xa8] sm:$0xff] %vm509, %v1765
  %1810 = vst.msk [vmem:[#allocation2 + $0xb0] sm:$0xff] %vm509, %v1766
  %1811 = vst.msk [vmem:[#allocation2 + $0xb8] sm:$0xff] %vm509, %v1767
  %1812 = vst.msk [vmem:[#allocation2 + $0xc0] sm:$0xff] %vm509, %v1768
  %1813 = vst.msk [vmem:[#allocation2 + $0xc8] sm:$0xff] %vm509, %v1769
  %1814 = vst.msk [vmem:[#allocation2 + $0xd0] sm:$0xff] %vm509, %v1770
  %1815 = vst.msk [vmem:[#allocation2 + $0xd8] sm:$0xff] %vm509, %v1771
  %1816 = vst.msk [vmem:[#allocation2 + $0xe0] sm:$0xff] %vm509, %v1772
  %1817 = vst.msk [vmem:[#allocation2 + $0xe8] sm:$0xff] %vm509, %v1773
  %1818 = vst.msk [vmem:[#allocation2 + $0xf0] sm:$0xff] %vm509, %v1774
  %1819 = vst.msk [vmem:[#allocation2 + $0xf8] sm:$0xff] %vm509, %v1775
  %1820 = vst.msk [vmem:[#allocation2 + $0x100] sm:$0xff] %vm509, %v1776
  %1821 = vst.msk [vmem:[#allocation2 + $0x108] sm:$0xff] %vm509, %v1777
  %1822 = vst.msk [vmem:[#allocation2 + $0x110] sm:$0xff] %vm509, %v1778
  %1823 = vst.msk [vmem:[#allocation2 + $0x118] sm:$0xff] %vm509, %v1779
  %1824 = vst.msk [vmem:[#allocation2 + $0x120] sm:$0xff] %vm509, %v1780
  %1825 = vst.msk [vmem:[#allocation2 + $0x128] sm:$0xff] %vm509, %v1781
  %1826 = vst.msk [vmem:[#allocation2 + $0x130] sm:$0xff] %vm509, %v1782
  %1827 = vst.msk [vmem:[#allocation2 + $0x138] sm:$0xff] %vm509, %v1783
  %1828 = vst.msk [vmem:[#allocation2 + $0x140] sm:$0xff] %vm509, %v1784
  %1829 = vst.msk [vmem:[#allocation2 + $0x148] sm:$0xff] %vm509, %v1785
  %1830 = vst.msk [vmem:[#allocation2 + $0x150] sm:$0xff] %vm509, %v1786
  %1831 = vst.msk [vmem:[#allocation2 + $0x158] sm:$0xff] %vm509, %v1787
  %v1832 = vld [vmem:[#allocation2] sm:$0xff]
  %v1833 = vld [vmem:[#allocation2 + $0x8] sm:$0xff]
  %v1834 = vld [vmem:[#allocation2 + $0x10] sm:$0xff]
  %v1835 = vld [vmem:[#allocation2 + $0x18] sm:$0xff]
  %v1836 = vld [vmem:[#allocation2 + $0x20] sm:$0xff]
  %v1837 = vld [vmem:[#allocation2 + $0x28] sm:$0xff]
  %v1838 = vld [vmem:[#allocation2 + $0x30] sm:$0xff]
  %v1839 = vld [vmem:[#allocation2 + $0x38] sm:$0xff]
  %v1840 = vld [vmem:[#allocation2 + $0x40] sm:$0xff]
  %v1841 = vld [vmem:[#allocation2 + $0x48] sm:$0xff]
  %v1842 = vld [vmem:[#allocation2 + $0x50] sm:$0xff]
  %v1843 = vld [vmem:[#allocation2 + $0x58] sm:$0xff]
  %v1844 = vld [vmem:[#allocation2 + $0x60] sm:$0xff]
  %v1845 = vld [vmem:[#allocation2 + $0x68] sm:$0xff]
  %v1846 = vld [vmem:[#allocation2 + $0x70] sm:$0xff]
  %v1847 = vld [vmem:[#allocation2 + $0x78] sm:$0xff]
  %v1848 = vld [vmem:[#allocation2 + $0x80] sm:$0xff]
  %v1849 = vld [vmem:[#allocation2 + $0x88] sm:$0xff]
  %v1850 = vld [vmem:[#allocation2 + $0x90] sm:$0xff]
  %v1851 = vld [vmem:[#allocation2 + $0x98] sm:$0xff]
  %v1852 = vld [vmem:[#allocation2 + $0xa0] sm:$0xff]
  %v1853 = vld [vmem:[#allocation2 + $0xa8] sm:$0xff]
  %v1854 = vld [vmem:[#allocation2 + $0xb0] sm:$0xff]
  %v1855 = vld [vmem:[#allocation2 + $0xb8] sm:$0xff]
  %v1856 = vld [vmem:[#allocation2 + $0xc0] sm:$0xff]
  %v1857 = vld [vmem:[#allocation2 + $0xc8] sm:$0xff]
  %v1858 = vld [vmem:[#allocation2 + $0xd0] sm:$0xff]
  %v1859 = vld [vmem:[#allocation2 + $0xd8] sm:$0xff]
  %v1860 = vld [vmem:[#allocation2 + $0xe0] sm:$0xff]
  %v1861 = vld [vmem:[#allocation2 + $0xe8] sm:$0xff]
  %v1862 = vld [vmem:[#allocation2 + $0xf0] sm:$0xff]
  %v1863 = vld [vmem:[#allocation2 + $0xf8] sm:$0xff]
  %v1864 = vld [vmem:[#allocation2 + $0x100] sm:$0xff]
  %v1865 = vld [vmem:[#allocation2 + $0x108] sm:$0xff]
  %v1866 = vld [vmem:[#allocation2 + $0x110] sm:$0xff]
  %v1867 = vld [vmem:[#allocation2 + $0x118] sm:$0xff]
  %v1868 = vld [vmem:[#allocation2 + $0x120] sm:$0xff]
  %v1869 = vld [vmem:[#allocation2 + $0x128] sm:$0xff]
  %v1870 = vld [vmem:[#allocation2 + $0x130] sm:$0xff]
  %v1871 = vld [vmem:[#allocation2 + $0x138] sm:$0xff]
  %v1872 = vld [vmem:[#allocation2 + $0x140] sm:$0xff]
  %v1873 = vld [vmem:[#allocation2 + $0x148] sm:$0xff]
  %v1874 = vld [vmem:[#allocation2 + $0x150] sm:$0xff]
  %v1875 = vld [vmem:[#allocation2 + $0x158] sm:$0xff]
  %v1876 = vld [vmem:[%s2] sm:$0xff]
  %v1877 = vld [vmem:[%s2 + $0x8] sm:$0xff]
  %v1878 = vld [vmem:[%s2 + $0x10] sm:$0xff]
  %v1879 = vld [vmem:[%s2 + $0x18] sm:$0xff]
  %v1880 = vld [vmem:[%s2 + $0x20] sm:$0xff]
  %v1881 = vld [vmem:[%s2 + $0x28] sm:$0xff]
  %v1882 = vld [vmem:[%s2 + $0x30] sm:$0xff]
  %v1883 = vld [vmem:[%s2 + $0x38] sm:$0xff]
  %v1884 = vld [vmem:[%s2 + $0x40] sm:$0xff]
  %v1885 = vld [vmem:[%s2 + $0x48] sm:$0xff]
  %v1886 = vld [vmem:[%s2 + $0x50] sm:$0xff]
  %v1887 = vld [vmem:[%s2 + $0x58] sm:$0xff]
  %v1888 = vld [vmem:[%s2 + $0x60] sm:$0xff]
  %v1889 = vld [vmem:[%s2 + $0x68] sm:$0xff]
  %v1890 = vld [vmem:[%s2 + $0x70] sm:$0xff]
  %v1891 = vld [vmem:[%s2 + $0x78] sm:$0xff]
  %v1892 = vld [vmem:[%s2 + $0x80] sm:$0xff]
  %v1893 = vld [vmem:[%s2 + $0x88] sm:$0xff]
  %v1894 = vld [vmem:[%s2 + $0x90] sm:$0xff]
  %v1895 = vld [vmem:[%s2 + $0x98] sm:$0xff]
  %v1896 = vld [vmem:[%s2 + $0xa0] sm:$0xff]
  %v1897 = vld [vmem:[%s2 + $0xa8] sm:$0xff]
  %v1898 = vld [vmem:[%s2 + $0xb0] sm:$0xff]
  %v1899 = vld [vmem:[%s2 + $0xb8] sm:$0xff]
  %v1900 = vld [vmem:[%s2 + $0xc0] sm:$0xff]
  %v1901 = vld [vmem:[%s2 + $0xc8] sm:$0xff]
  %v1902 = vld [vmem:[%s2 + $0xd0] sm:$0xff]
  %v1903 = vld [vmem:[%s2 + $0xd8] sm:$0xff]
  %v1904 = vld [vmem:[%s2 + $0xe0] sm:$0xff]
  %v1905 = vld [vmem:[%s2 + $0xe8] sm:$0xff]
  %v1906 = vld [vmem:[%s2 + $0xf0] sm:$0xff]
  %v1907 = vld [vmem:[%s2 + $0xf8] sm:$0xff]
  %v1908 = vld [vmem:[%s2 + $0x100] sm:$0xff]
  %v1909 = vld [vmem:[%s2 + $0x108] sm:$0xff]
  %v1910 = vld [vmem:[%s2 + $0x110] sm:$0xff]
  %v1911 = vld [vmem:[%s2 + $0x118] sm:$0xff]
  %v1912 = vld [vmem:[%s2 + $0x120] sm:$0xff]
  %v1913 = vld [vmem:[%s2 + $0x128] sm:$0xff]
  %v1914 = vld [vmem:[%s2 + $0x130] sm:$0xff]
  %v1915 = vld [vmem:[%s2 + $0x138] sm:$0xff]
  %v1916 = vld [vmem:[%s2 + $0x140] sm:$0xff]
  %v1917 = vld [vmem:[%s2 + $0x148] sm:$0xff]
  %v1918 = vld [vmem:[%s2 + $0x150] sm:$0xff]
  %v1919 = vld [vmem:[%s2 + $0x158] sm:$0xff]
  %1921 = vset.pattern.permute.xlu0 0
  %1922 = vperm.xlu0 %1921, %v1876
  %v1923 = vpop.permute.xlu0 %1922
  %1926 = vset.pattern.permute.xlu0 0
  %1927 = vperm.xlu0 %1926, %v1877
  %v1928 = vpop.permute.xlu0 %1927
  %1931 = vset.pattern.permute.xlu0 0
  %1932 = vperm.xlu0 %1931, %v1878
  %v1933 = vpop.permute.xlu0 %1932
  %1936 = vset.pattern.permute.xlu0 0
  %1937 = vperm.xlu0 %1936, %v1879
  %v1938 = vpop.permute.xlu0 %1937
  %1941 = vset.pattern.permute.xlu0 0
  %1942 = vperm.xlu0 %1941, %v1880
  %v1943 = vpop.permute.xlu0 %1942
  %1946 = vset.pattern.permute.xlu0 0
  %1947 = vperm.xlu0 %1946, %v1881
  %v1948 = vpop.permute.xlu0 %1947
  %1951 = vset.pattern.permute.xlu0 0
  %1952 = vperm.xlu0 %1951, %v1882
  %v1953 = vpop.permute.xlu0 %1952
  %1956 = vset.pattern.permute.xlu0 0
  %1957 = vperm.xlu0 %1956, %v1883
  %v1958 = vpop.permute.xlu0 %1957
  %1961 = vset.pattern.permute.xlu0 0
  %1962 = vperm.xlu0 %1961, %v1884
  %v1963 = vpop.permute.xlu0 %1962
  %1966 = vset.pattern.permute.xlu0 0
  %1967 = vperm.xlu0 %1966, %v1885
  %v1968 = vpop.permute.xlu0 %1967
  %1971 = vset.pattern.permute.xlu0 0
  %1972 = vperm.xlu0 %1971, %v1886
  %v1973 = vpop.permute.xlu0 %1972
  %1976 = vset.pattern.permute.xlu0 0
  %1977 = vperm.xlu0 %1976, %v1887
  %v1978 = vpop.permute.xlu0 %1977
  %1981 = vset.pattern.permute.xlu0 0
  %1982 = vperm.xlu0 %1981, %v1888
  %v1983 = vpop.permute.xlu0 %1982
  %1986 = vset.pattern.permute.xlu0 0
  %1987 = vperm.xlu0 %1986, %v1889
  %v1988 = vpop.permute.xlu0 %1987
  %1991 = vset.pattern.permute.xlu0 0
  %1992 = vperm.xlu0 %1991, %v1890
  %v1993 = vpop.permute.xlu0 %1992
  %1996 = vset.pattern.permute.xlu0 0
  %1997 = vperm.xlu0 %1996, %v1891
  %v1998 = vpop.permute.xlu0 %1997
  %2001 = vset.pattern.permute.xlu0 0
  %2002 = vperm.xlu0 %2001, %v1892
  %v2003 = vpop.permute.xlu0 %2002
  %2006 = vset.pattern.permute.xlu0 0
  %2007 = vperm.xlu0 %2006, %v1893
  %v2008 = vpop.permute.xlu0 %2007
  %2011 = vset.pattern.permute.xlu0 0
  %2012 = vperm.xlu0 %2011, %v1894
  %v2013 = vpop.permute.xlu0 %2012
  %2016 = vset.pattern.permute.xlu0 0
  %2017 = vperm.xlu0 %2016, %v1895
  %v2018 = vpop.permute.xlu0 %2017
  %2021 = vset.pattern.permute.xlu0 0
  %2022 = vperm.xlu0 %2021, %v1896
  %v2023 = vpop.permute.xlu0 %2022
  %2026 = vset.pattern.permute.xlu0 0
  %2027 = vperm.xlu0 %2026, %v1897
  %v2028 = vpop.permute.xlu0 %2027
  %2031 = vset.pattern.permute.xlu0 0
  %2032 = vperm.xlu0 %2031, %v1898
  %v2033 = vpop.permute.xlu0 %2032
  %2036 = vset.pattern.permute.xlu0 0
  %2037 = vperm.xlu0 %2036, %v1899
  %v2038 = vpop.permute.xlu0 %2037
  %2041 = vset.pattern.permute.xlu0 0
  %2042 = vperm.xlu0 %2041, %v1900
  %v2043 = vpop.permute.xlu0 %2042
  %2046 = vset.pattern.permute.xlu0 0
  %2047 = vperm.xlu0 %2046, %v1901
  %v2048 = vpop.permute.xlu0 %2047
  %2051 = vset.pattern.permute.xlu0 0
  %2052 = vperm.xlu0 %2051, %v1902
  %v2053 = vpop.permute.xlu0 %2052
  %2056 = vset.pattern.permute.xlu0 0
  %2057 = vperm.xlu0 %2056, %v1903
  %v2058 = vpop.permute.xlu0 %2057
  %2061 = vset.pattern.permute.xlu0 0
  %2062 = vperm.xlu0 %2061, %v1904
  %v2063 = vpop.permute.xlu0 %2062
  %2066 = vset.pattern.permute.xlu0 0
  %2067 = vperm.xlu0 %2066, %v1905
  %v2068 = vpop.permute.xlu0 %2067
  %2071 = vset.pattern.permute.xlu0 0
  %2072 = vperm.xlu0 %2071, %v1906
  %v2073 = vpop.permute.xlu0 %2072
  %2076 = vset.pattern.permute.xlu0 0
  %2077 = vperm.xlu0 %2076, %v1907
  %v2078 = vpop.permute.xlu0 %2077
  %2081 = vset.pattern.permute.xlu0 0
  %2082 = vperm.xlu0 %2081, %v1908
  %v2083 = vpop.permute.xlu0 %2082
  %2086 = vset.pattern.permute.xlu0 0
  %2087 = vperm.xlu0 %2086, %v1909
  %v2088 = vpop.permute.xlu0 %2087
  %2091 = vset.pattern.permute.xlu0 0
  %2092 = vperm.xlu0 %2091, %v1910
  %v2093 = vpop.permute.xlu0 %2092
  %2096 = vset.pattern.permute.xlu0 0
  %2097 = vperm.xlu0 %2096, %v1911
  %v2098 = vpop.permute.xlu0 %2097
  %2101 = vset.pattern.permute.xlu0 0
  %2102 = vperm.xlu0 %2101, %v1912
  %v2103 = vpop.permute.xlu0 %2102
  %2106 = vset.pattern.permute.xlu0 0
  %2107 = vperm.xlu0 %2106, %v1913
  %v2108 = vpop.permute.xlu0 %2107
  %2111 = vset.pattern.permute.xlu0 0
  %2112 = vperm.xlu0 %2111, %v1914
  %v2113 = vpop.permute.xlu0 %2112
  %2116 = vset.pattern.permute.xlu0 0
  %2117 = vperm.xlu0 %2116, %v1915
  %v2118 = vpop.permute.xlu0 %2117
  %2121 = vset.pattern.permute.xlu0 0
  %2122 = vperm.xlu0 %2121, %v1916
  %v2123 = vpop.permute.xlu0 %2122
  %2126 = vset.pattern.permute.xlu0 0
  %2127 = vperm.xlu0 %2126, %v1917
  %v2128 = vpop.permute.xlu0 %2127
  %2131 = vset.pattern.permute.xlu0 0
  %2132 = vperm.xlu0 %2131, %v1918
  %v2133 = vpop.permute.xlu0 %2132
  %2136 = vset.pattern.permute.xlu0 0
  %2137 = vperm.xlu0 %2136, %v1919
  %v2138 = vpop.permute.xlu0 %2137
  %v2140 = vadd.f32 %v1832, %v1923
  %v2141 = vadd.f32 %v1833, %v1928
  %v2142 = vadd.f32 %v1834, %v1933
  %v2143 = vadd.f32 %v1835, %v1938
  %v2144 = vadd.f32 %v1836, %v1943
  %v2145 = vadd.f32 %v1837, %v1948
  %v2146 = vadd.f32 %v1838, %v1953
  %v2147 = vadd.f32 %v1839, %v1958
  %v2148 = vadd.f32 %v1840, %v1963
  %v2149 = vadd.f32 %v1841, %v1968
  %v2150 = vadd.f32 %v1842, %v1973
  %v2151 = vadd.f32 %v1843, %v1978
  %v2152 = vadd.f32 %v1844, %v1983
  %v2153 = vadd.f32 %v1845, %v1988
  %v2154 = vadd.f32 %v1846, %v1993
  %v2155 = vadd.f32 %v1847, %v1998
  %v2156 = vadd.f32 %v1848, %v2003
  %v2157 = vadd.f32 %v1849, %v2008
  %v2158 = vadd.f32 %v1850, %v2013
  %v2159 = vadd.f32 %v1851, %v2018
  %v2160 = vadd.f32 %v1852, %v2023
  %v2161 = vadd.f32 %v1853, %v2028
  %v2162 = vadd.f32 %v1854, %v2033
  %v2163 = vadd.f32 %v1855, %v2038
  %v2164 = vadd.f32 %v1856, %v2043
  %v2165 = vadd.f32 %v1857, %v2048
  %v2166 = vadd.f32 %v1858, %v2053
  %v2167 = vadd.f32 %v1859, %v2058
  %v2168 = vadd.f32 %v1860, %v2063
  %v2169 = vadd.f32 %v1861, %v2068
  %v2170 = vadd.f32 %v1862, %v2073
  %v2171 = vadd.f32 %v1863, %v2078
  %v2172 = vadd.f32 %v1864, %v2083
  %v2173 = vadd.f32 %v1865, %v2088
  %v2174 = vadd.f32 %v1866, %v2093
  %v2175 = vadd.f32 %v1867, %v2098
  %v2176 = vadd.f32 %v1868, %v2103
  %v2177 = vadd.f32 %v1869, %v2108
  %v2178 = vadd.f32 %v1870, %v2113
  %v2179 = vadd.f32 %v1871, %v2118
  %v2180 = vadd.f32 %v1872, %v2123
  %v2181 = vadd.f32 %v1873, %v2128
  %v2182 = vadd.f32 %v1874, %v2133
  %v2183 = vadd.f32 %v1875, %v2138
  %v2184 = vmax.f32 %v2140, 0.0
  %v2185 = vmax.f32 %v2141, 0.0
  %v2186 = vmax.f32 %v2142, 0.0
  %v2187 = vmax.f32 %v2143, 0.0
  %v2188 = vmax.f32 %v2144, 0.0
  %v2189 = vmax.f32 %v2145, 0.0
  %v2190 = vmax.f32 %v2146, 0.0
  %v2191 = vmax.f32 %v2147, 0.0
  %v2192 = vmax.f32 %v2148, 0.0
  %v2193 = vmax.f32 %v2149, 0.0
  %v2194 = vmax.f32 %v2150, 0.0
  %v2195 = vmax.f32 %v2151, 0.0
  %v2196 = vmax.f32 %v2152, 0.0
  %v2197 = vmax.f32 %v2153, 0.0
  %v2198 = vmax.f32 %v2154, 0.0
  %v2199 = vmax.f32 %v2155, 0.0
  %v2200 = vmax.f32 %v2156, 0.0
  %v2201 = vmax.f32 %v2157, 0.0
  %v2202 = vmax.f32 %v2158, 0.0
  %v2203 = vmax.f32 %v2159, 0.0
  %v2204 = vmax.f32 %v2160, 0.0
  %v2205 = vmax.f32 %v2161, 0.0
  %v2206 = vmax.f32 %v2162, 0.0
  %v2207 = vmax.f32 %v2163, 0.0
  %v2208 = vmax.f32 %v2164, 0.0
  %v2209 = vmax.f32 %v2165, 0.0
  %v2210 = vmax.f32 %v2166, 0.0
  %v2211 = vmax.f32 %v2167, 0.0
  %v2212 = vmax.f32 %v2168, 0.0
  %v2213 = vmax.f32 %v2169, 0.0
  %v2214 = vmax.f32 %v2170, 0.0
  %v2215 = vmax.f32 %v2171, 0.0
  %v2216 = vmax.f32 %v2172, 0.0
  %v2217 = vmax.f32 %v2173, 0.0
  %v2218 = vmax.f32 %v2174, 0.0
  %v2219 = vmax.f32 %v2175, 0.0
  %v2220 = vmax.f32 %v2176, 0.0
  %v2221 = vmax.f32 %v2177, 0.0
  %v2222 = vmax.f32 %v2178, 0.0
  %v2223 = vmax.f32 %v2179, 0.0
  %v2224 = vmax.f32 %v2180, 0.0
  %v2225 = vmax.f32 %v2181, 0.0
  %v2226 = vmax.f32 %v2182, 0.0
  %v2227 = vmax.f32 %v2183, 0.0
  %v2228 = vmax.f32 %v2184, %v2186
  %v2229 = vmax.f32 %v2185, %v2187
  %v2230 = vmax.f32 %v2188, %v2190
  %v2231 = vmax.f32 %v2189, %v2191
  %v2232 = vmax.f32 %v2192, %v2194
  %v2233 = vmax.f32 %v2193, %v2195
  %v2234 = vmax.f32 %v2196, %v2198
  %v2235 = vmax.f32 %v2197, %v2199
  %v2236 = vmax.f32 %v2200, %v2202
  %v2237 = vmax.f32 %v2201, %v2203
  %v2238 = vmax.f32 %v2204, %v2206
  %v2239 = vmax.f32 %v2205, %v2207
  %v2240 = vmax.f32 %v2208, %v2210
  %v2241 = vmax.f32 %v2209, %v2211
  %v2242 = vmax.f32 %v2212, %v2214
  %v2243 = vmax.f32 %v2213, %v2215
  %v2244 = vmax.f32 %v2216, %v2218
  %v2245 = vmax.f32 %v2217, %v2219
  %v2246 = vmax.f32 %v2220, %v2222
  %v2247 = vmax.f32 %v2221, %v2223
  %v2248 = vmax.f32 %v2224, %v2226
  %v2249 = vmax.f32 %v2225, %v2227
  %v2250 = vld [vmem:[%s3] sm:$0xff]
  %v2251 = vld [vmem:[%s3 + $0x8] sm:$0xff]
  %v2252 = vld [vmem:[%s3 + $0x10] sm:$0x3f]
  %v2254 = vsel %vm509, %v2228, 0
  %v2257 = vsel %vm509, %v2229, 0
  %v2260 = vsel %vm509, %v2230, 0
  %v2263 = vsel %vm509, %v2231, 0
  %v2266 = vsel %vm509, %v2232, 0
  %v2269 = vsel %vm509, %v2233, 0
  %v2272 = vsel %vm509, %v2234, 0
  %v2275 = vsel %vm509, %v2235, 0
  %v2278 = vsel %vm509, %v2236, 0
  %v2281 = vsel %vm509, %v2237, 0
  %v2284 = vsel %vm509, %v2238, 0
  %v2287 = vsel %vm509, %v2239, 0
  %v2290 = vsel %vm509, %v2240, 0
  %v2293 = vsel %vm509, %v2241, 0
  %v2296 = vsel %vm509, %v2242, 0
  %v2299 = vsel %vm509, %v2243, 0
  %v2302 = vsel %vm509, %v2244, 0
  %v2305 = vsel %vm509, %v2245, 0
  %v2308 = vsel %vm509, %v2246, 0
  %v2311 = vsel %vm509, %v2247, 0
  %v2314 = vsel %vm509, %v2248, 0
  %v2317 = vsel %vm509, %v2249, 0
  %vm2319 = vcmask 1045504
  %v2321 = vsel %vm2319, %v2252, 0
  %2323 = vmatprep.subr.mxu0 0.0
  %2324 = vmatpush1.msra.mxu0 0.0
  %2325 = vmatprep.subr.mxu0 0.0
  %2326 = vmatpush1.msra.mxu0 0.0
  %2327 = vmatprep.subr.mxu0 0.0
  %2328 = vmatpush1.msra.mxu0 0.0
  %2329 = vmatprep.subr.mxu0 0.0
  %2330 = vmatpush1.msra.mxu0 0.0
  %2331 = vmatprep.subr.mxu0 0.0
  %2332 = vmatpush1.msra.mxu0 0.0
  %2333 = vmatprep.subr.mxu0 0.0
  %2334 = vmatpush1.msra.mxu0 0.0
  %2335 = vmatprep.subr.mxu0 0.0
  %2336 = vmatpush1.msra.mxu0 0.0
  %2337 = vmatprep.subr.mxu0 0.0
  %2338 = vmatpush1.msra.mxu0 0.0
  %2339 = vmatprep.subr.mxu0 0.0
  %2340 = vmatpush1.msra.mxu0 0.0
  %2341 = vmatprep.subr.mxu0 0.0
  %2342 = vmatpush1.msra.mxu0 0.0
  %2343 = vmatprep.subr.mxu0 0.0
  %2344 = vmatpush1.msra.mxu0 0.0
  %2345 = vmatprep.subr.mxu0 0.0
  %2346 = vmatpush1.msra.mxu0 0.0
  %2347 = vmatprep.subr.mxu0 0.0
  %2348 = vmatpush1.msra.mxu0 0.0
  %2349 = vmatprep.subr.mxu0 0.0
  %2350 = vmatpush1.msra.mxu0 %v2321
  %2351 = vmatprep.subr.mxu0 0.0
  %2352 = vmatpush1.msra.mxu0 %v2251
  %2353 = vmatprep.subr.mxu0 0.0
  %2354 = vmatpush1.msra.mxu0 %v2250
  %2355 = vmatprep.subr.mxu0 0.0
  %2356 = vmatpush2.msra.mxu0 0.0
  %2357 = vmatprep.subr.mxu0 0.0
  %2358 = vmatpush2.msra.mxu0 0.0
  %2359 = vmatprep.subr.mxu0 0.0
  %2360 = vmatpush2.msra.mxu0 0.0
  %2361 = vmatprep.subr.mxu0 0.0
  %2362 = vmatpush2.msra.mxu0 0.0
  %2363 = vmatprep.subr.mxu0 0.0
  %2364 = vmatpush2.msra.mxu0 0.0
  %2365 = vmatprep.subr.mxu0 0.0
  %2366 = vmatpush2.msra.mxu0 0.0
  %2367 = vmatprep.subr.mxu0 0.0
  %2368 = vmatpush2.msra.mxu0 0.0
  %2369 = vmatprep.subr.mxu0 0.0
  %2370 = vmatpush2.msra.mxu0 0.0
  %2371 = vmatprep.subr.mxu0 0.0
  %2372 = vmatpush2.msra.mxu0 0.0
  %2373 = vmatprep.subr.mxu0 0.0
  %2374 = vmatpush2.msra.mxu0 0.0
  %2375 = vmatprep.subr.mxu0 0.0
  %2376 = vmatpush2.msra.mxu0 0.0
  %2377 = vmatprep.subr.mxu0 0.0
  %2378 = vmatpush2.msra.mxu0 0.0
  %2379 = vmatprep.subr.mxu0 0.0
  %2380 = vmatpush2.msra.mxu0 0.0
  %2381 = vmatprep.subr.mxu0 0.0
  %2382 = vmatpush2.msra.mxu0 0.0
  %2383 = vmatprep.subr.mxu0 0.0
  %2384 = vmatpush2.msra.mxu0 0.0
  %2385 = vmatprep.subr.mxu0 0.0
  %2386 = vmatpush2.msra.mxu0 0.0
  %2387 = vmatprep.mubr.f32.mxu0 0.0
  %2388 = vmatmul.mubr.f32.gmra.mxu0 %v2254
  %v2389 = vpop.f32.mrf.mxu0
  %v2390 = vadd.f32 0.0, %v2389
  %v2391 = vpop.f32.mrf.mxu0
  %2392 = vmatprep.mubr.f32.mxu0 0.0
  %2393 = vmatmul.mubr.f32.gmra.mxu0 %v2257
  %v2394 = vpop.f32.mrf.mxu0
  %v2395 = vadd.f32 0.0, %v2394
  %v2396 = vpop.f32.mrf.mxu0
  %2397 = vmatprep.mubr.f32.mxu0 0.0
  %2398 = vmatmul.mubr.f32.gmra.mxu0 %v2260
  %v2399 = vpop.f32.mrf.mxu0
  %v2400 = vadd.f32 0.0, %v2399
  %v2401 = vpop.f32.mrf.mxu0
  %2402 = vmatprep.mubr.f32.mxu0 0.0
  %2403 = vmatmul.mubr.f32.gmra.mxu0 %v2263
  %v2404 = vpop.f32.mrf.mxu0
  %v2405 = vadd.f32 0.0, %v2404
  %v2406 = vpop.f32.mrf.mxu0
  %2407 = vmatprep.mubr.f32.mxu0 0.0
  %2408 = vmatmul.mubr.f32.gmra.mxu0 %v2266
  %v2409 = vpop.f32.mrf.mxu0
  %v2410 = vadd.f32 0.0, %v2409
  %v2411 = vpop.f32.mrf.mxu0
  %2412 = vmatprep.mubr.f32.mxu0 0.0
  %2413 = vmatmul.mubr.f32.gmra.mxu0 %v2269
  %v2414 = vpop.f32.mrf.mxu0
  %v2415 = vadd.f32 0.0, %v2414
  %v2416 = vpop.f32.mrf.mxu0
  %2417 = vmatprep.mubr.f32.mxu0 0.0
  %2418 = vmatmul.mubr.f32.gmra.mxu0 %v2272
  %v2419 = vpop.f32.mrf.mxu0
  %v2420 = vadd.f32 0.0, %v2419
  %v2421 = vpop.f32.mrf.mxu0
  %2422 = vmatprep.mubr.f32.mxu0 0.0
  %2423 = vmatmul.mubr.f32.gmra.mxu0 %v2275
  %v2424 = vpop.f32.mrf.mxu0
  %v2425 = vadd.f32 0.0, %v2424
  %v2426 = vpop.f32.mrf.mxu0
  %2427 = vmatprep.mubr.f32.mxu0 0.0
  %2428 = vmatmul.mubr.f32.gmra.mxu0 %v2278
  %v2429 = vpop.f32.mrf.mxu0
  %v2430 = vadd.f32 0.0, %v2429
  %v2431 = vpop.f32.mrf.mxu0
  %2432 = vmatprep.mubr.f32.mxu0 0.0
  %2433 = vmatmul.mubr.f32.gmra.mxu0 %v2281
  %v2434 = vpop.f32.mrf.mxu0
  %v2435 = vadd.f32 0.0, %v2434
  %v2436 = vpop.f32.mrf.mxu0
  %2437 = vmatprep.mubr.f32.mxu0 0.0
  %2438 = vmatmul.mubr.f32.gmra.mxu0 %v2284
  %v2439 = vpop.f32.mrf.mxu0
  %v2440 = vadd.f32 0.0, %v2439
  %v2441 = vpop.f32.mrf.mxu0
  %2442 = vmatprep.mubr.f32.mxu0 0.0
  %2443 = vmatmul.mubr.f32.gmra.mxu0 %v2287
  %v2444 = vpop.f32.mrf.mxu0
  %v2445 = vadd.f32 0.0, %v2444
  %v2446 = vpop.f32.mrf.mxu0
  %2447 = vmatprep.mubr.f32.mxu0 0.0
  %2448 = vmatmul.mubr.f32.gmra.mxu0 %v2290
  %v2449 = vpop.f32.mrf.mxu0
  %v2450 = vadd.f32 0.0, %v2449
  %v2451 = vpop.f32.mrf.mxu0
  %2452 = vmatprep.mubr.f32.mxu0 0.0
  %2453 = vmatmul.mubr.f32.gmra.mxu0 %v2293
  %v2454 = vpop.f32.mrf.mxu0
  %v2455 = vadd.f32 0.0, %v2454
  %v2456 = vpop.f32.mrf.mxu0
  %2457 = vmatprep.mubr.f32.mxu0 0.0
  %2458 = vmatmul.mubr.f32.gmra.mxu0 %v2296
  %v2459 = vpop.f32.mrf.mxu0
  %v2460 = vadd.f32 0.0, %v2459
  %v2461 = vpop.f32.mrf.mxu0
  %2462 = vmatprep.mubr.f32.mxu0 0.0
  %2463 = vmatmul.mubr.f32.gmra.mxu0 %v2299
  %v2464 = vpop.f32.mrf.mxu0
  %v2465 = vadd.f32 0.0, %v2464
  %v2466 = vpop.f32.mrf.mxu0
  %2467 = vmatprep.mubr.f32.mxu0 0.0
  %2468 = vmatmul.mubr.f32.gmra.mxu0 %v2302
  %v2469 = vpop.f32.mrf.mxu0
  %v2470 = vadd.f32 0.0, %v2469
  %v2471 = vpop.f32.mrf.mxu0
  %2472 = vmatprep.mubr.f32.mxu0 0.0
  %2473 = vmatmul.mubr.f32.gmra.mxu0 %v2305
  %v2474 = vpop.f32.mrf.mxu0
  %v2475 = vadd.f32 0.0, %v2474
  %v2476 = vpop.f32.mrf.mxu0
  %2477 = vmatprep.mubr.f32.mxu0 0.0
  %2478 = vmatmul.mubr.f32.gmra.mxu0 %v2308
  %v2479 = vpop.f32.mrf.mxu0
  %v2480 = vadd.f32 0.0, %v2479
  %v2481 = vpop.f32.mrf.mxu0
  %2482 = vmatprep.mubr.f32.mxu0 0.0
  %2483 = vmatmul.mubr.f32.gmra.mxu0 %v2311
  %v2484 = vpop.f32.mrf.mxu0
  %v2485 = vadd.f32 0.0, %v2484
  %v2486 = vpop.f32.mrf.mxu0
  %2487 = vmatprep.mubr.f32.mxu0 0.0
  %2488 = vmatmul.mubr.f32.gmra.mxu0 %v2314
  %v2489 = vpop.f32.mrf.mxu0
  %v2490 = vadd.f32 0.0, %v2489
  %v2491 = vpop.f32.mrf.mxu0
  %2492 = vmatprep.mubr.f32.mxu0 0.0
  %2493 = vmatmul.mubr.f32.gmra.mxu0 %v2317
  %v2494 = vpop.f32.mrf.mxu0
  %v2495 = vadd.f32 0.0, %v2494
  %v2496 = vpop.f32.mrf.mxu0
  %2497 = vdwg.mxu0
  %2520 = vrot.lane.b32.xlu0 %v2390, 117
  %v2521 = vpop.permute.xlu0 %2520
  %2522 = vrot.lane.b32.xlu0 %v2395, 117
  %v2523 = vpop.permute.xlu0 %2522
  %2524 = vrot.lane.b32.xlu0 %v2400, 117
  %v2525 = vpop.permute.xlu0 %2524
  %2526 = vrot.lane.b32.xlu0 %v2405, 117
  %v2527 = vpop.permute.xlu0 %2526
  %2528 = vrot.lane.b32.xlu0 %v2410, 117
  %v2529 = vpop.permute.xlu0 %2528
  %2530 = vrot.lane.b32.xlu0 %v2415, 117
  %v2531 = vpop.permute.xlu0 %2530
  %2532 = vrot.lane.b32.xlu0 %v2420, 117
  %v2533 = vpop.permute.xlu0 %2532
  %2534 = vrot.lane.b32.xlu0 %v2425, 117
  %v2535 = vpop.permute.xlu0 %2534
  %2536 = vrot.lane.b32.xlu0 %v2430, 117
  %v2537 = vpop.permute.xlu0 %2536
  %2538 = vrot.lane.b32.xlu0 %v2435, 117
  %v2539 = vpop.permute.xlu0 %2538
  %2540 = vrot.lane.b32.xlu0 %v2440, 117
  %v2541 = vpop.permute.xlu0 %2540
  %2542 = vrot.lane.b32.xlu0 %v2445, 117
  %v2543 = vpop.permute.xlu0 %2542
  %2544 = vrot.lane.b32.xlu0 %v2450, 117
  %v2545 = vpop.permute.xlu0 %2544
  %2546 = vrot.lane.b32.xlu0 %v2455, 117
  %v2547 = vpop.permute.xlu0 %2546
  %2548 = vrot.lane.b32.xlu0 %v2460, 117
  %v2549 = vpop.permute.xlu0 %2548
  %2550 = vrot.lane.b32.xlu0 %v2465, 117
  %v2551 = vpop.permute.xlu0 %2550
  %2552 = vrot.lane.b32.xlu0 %v2470, 117
  %v2553 = vpop.permute.xlu0 %2552
  %2554 = vrot.lane.b32.xlu0 %v2475, 117
  %v2555 = vpop.permute.xlu0 %2554
  %2556 = vrot.lane.b32.xlu0 %v2480, 117
  %v2557 = vpop.permute.xlu0 %2556
  %2558 = vrot.lane.b32.xlu0 %v2485, 117
  %v2559 = vpop.permute.xlu0 %2558
  %2560 = vrot.lane.b32.xlu0 %v2490, 117
  %v2561 = vpop.permute.xlu0 %2560
  %2562 = vrot.lane.b32.xlu0 %v2495, 117
  %v2563 = vpop.permute.xlu0 %2562
  %v2586 = vmax.f32 %v2390, %v2521
  %v2587 = vmax.f32 %v2395, %v2523
  %v2588 = vmax.f32 %v2400, %v2525
  %v2589 = vmax.f32 %v2405, %v2527
  %v2590 = vmax.f32 %v2410, %v2529
  %v2591 = vmax.f32 %v2415, %v2531
  %v2592 = vmax.f32 %v2420, %v2533
  %v2593 = vmax.f32 %v2425, %v2535
  %v2594 = vmax.f32 %v2430, %v2537
  %v2595 = vmax.f32 %v2435, %v2539
  %v2596 = vmax.f32 %v2440, %v2541
  %v2597 = vmax.f32 %v2445, %v2543
  %v2598 = vmax.f32 %v2450, %v2545
  %v2599 = vmax.f32 %v2455, %v2547
  %v2600 = vmax.f32 %v2460, %v2549
  %v2601 = vmax.f32 %v2465, %v2551
  %v2602 = vmax.f32 %v2470, %v2553
  %v2603 = vmax.f32 %v2475, %v2555
  %v2604 = vmax.f32 %v2480, %v2557
  %v2605 = vmax.f32 %v2485, %v2559
  %v2606 = vmax.f32 %v2490, %v2561
  %v2607 = vmax.f32 %v2495, %v2563
  %vm2608 = vcmask 121856
  %2609 = vst.msk [vmem:[#allocation3] sm:$0xff] %vm2608, 0.0
  %2610 = vst.msk [vmem:[#allocation3 + $0x8] sm:$0xff] %vm2608, 0.0
  %2611 = vst.msk [vmem:[#allocation3 + $0x10] sm:$0xff] %vm2608, 0.0
  %2612 = vst.msk [vmem:[#allocation3 + $0x18] sm:$0xff] %vm2608, 0.0
  %2613 = vst.msk [vmem:[#allocation3 + $0x20] sm:$0xff] %vm2608, 0.0
  %2614 = vst.msk [vmem:[#allocation3 + $0x28] sm:$0xff] %vm2608, 0.0
  %2615 = vst.msk [vmem:[#allocation3 + $0x30] sm:$0xff] %vm2608, 0.0
  %2616 = vst.msk [vmem:[#allocation3 + $0x38] sm:$0xff] %vm2608, 0.0
  %2617 = vst.msk [vmem:[#allocation3 + $0x40] sm:$0xff] %vm2608, 0.0
  %2618 = vst.msk [vmem:[#allocation3 + $0x48] sm:$0xff] %vm2608, 0.0
  %2619 = vst.msk [vmem:[#allocation3 + $0x50] sm:$0xff] %vm2608, 0.0
  %2620 = vst.msk [vmem:[#allocation3 + $0x58] sm:$0xff] %vm2608, 0.0
  %2621 = vst.msk [vmem:[#allocation3 + $0x60] sm:$0xff] %vm2608, 0.0
  %2622 = vst.msk [vmem:[#allocation3 + $0x68] sm:$0xff] %vm2608, 0.0
  %2623 = vst.msk [vmem:[#allocation3 + $0x70] sm:$0xff] %vm2608, 0.0
  %2624 = vst.msk [vmem:[#allocation3 + $0x78] sm:$0xff] %vm2608, 0.0
  %2625 = vst.msk [vmem:[#allocation3 + $0x80] sm:$0xff] %vm2608, 0.0
  %2626 = vst.msk [vmem:[#allocation3 + $0x88] sm:$0xff] %vm2608, 0.0
  %2627 = vst.msk [vmem:[#allocation3 + $0x90] sm:$0xff] %vm2608, 0.0
  %2628 = vst.msk [vmem:[#allocation3 + $0x98] sm:$0xff] %vm2608, 0.0
  %2629 = vst.msk [vmem:[#allocation3 + $0xa0] sm:$0xff] %vm2608, 0.0
  %2630 = vst.msk [vmem:[#allocation3 + $0xa8] sm:$0xff] %vm2608, 0.0
  %2653 = vrot.lane.b32.xlu0 %v2586, 2
  %v2654 = vpop.permute.xlu0 %2653
  %2655 = vrot.lane.b32.xlu0 %v2587, 2
  %v2656 = vpop.permute.xlu0 %2655
  %2657 = vrot.lane.b32.xlu0 %v2588, 2
  %v2658 = vpop.permute.xlu0 %2657
  %2659 = vrot.lane.b32.xlu0 %v2589, 2
  %v2660 = vpop.permute.xlu0 %2659
  %2661 = vrot.lane.b32.xlu0 %v2590, 2
  %v2662 = vpop.permute.xlu0 %2661
  %2663 = vrot.lane.b32.xlu0 %v2591, 2
  %v2664 = vpop.permute.xlu0 %2663
  %2665 = vrot.lane.b32.xlu0 %v2592, 2
  %v2666 = vpop.permute.xlu0 %2665
  %2667 = vrot.lane.b32.xlu0 %v2593, 2
  %v2668 = vpop.permute.xlu0 %2667
  %2669 = vrot.lane.b32.xlu0 %v2594, 2
  %v2670 = vpop.permute.xlu0 %2669
  %2671 = vrot.lane.b32.xlu0 %v2595, 2
  %v2672 = vpop.permute.xlu0 %2671
  %2673 = vrot.lane.b32.xlu0 %v2596, 2
  %v2674 = vpop.permute.xlu0 %2673
  %2675 = vrot.lane.b32.xlu0 %v2597, 2
  %v2676 = vpop.permute.xlu0 %2675
  %2677 = vrot.lane.b32.xlu0 %v2598, 2
  %v2678 = vpop.permute.xlu0 %2677
  %2679 = vrot.lane.b32.xlu0 %v2599, 2
  %v2680 = vpop.permute.xlu0 %2679
  %2681 = vrot.lane.b32.xlu0 %v2600, 2
  %v2682 = vpop.permute.xlu0 %2681
  %2683 = vrot.lane.b32.xlu0 %v2601, 2
  %v2684 = vpop.permute.xlu0 %2683
  %2685 = vrot.lane.b32.xlu0 %v2602, 2
  %v2686 = vpop.permute.xlu0 %2685
  %2687 = vrot.lane.b32.xlu0 %v2603, 2
  %v2688 = vpop.permute.xlu0 %2687
  %2689 = vrot.lane.b32.xlu0 %v2604, 2
  %v2690 = vpop.permute.xlu0 %2689
  %2691 = vrot.lane.b32.xlu0 %v2605, 2
  %v2692 = vpop.permute.xlu0 %2691
  %2693 = vrot.lane.b32.xlu0 %v2606, 2
  %v2694 = vpop.permute.xlu0 %2693
  %2695 = vrot.lane.b32.xlu0 %v2607, 2
  %v2696 = vpop.permute.xlu0 %2695
  %vm2719 = vcmask 105488
  %2720 = vst.msk [vmem:[#allocation3] sm:$0xff] %vm2719, %v2654
  %2721 = vst.msk [vmem:[#allocation3 + $0x8] sm:$0xff] %vm2719, %v2656
  %2722 = vst.msk [vmem:[#allocation3 + $0x10] sm:$0xff] %vm2719, %v2658
  %2723 = vst.msk [vmem:[#allocation3 + $0x18] sm:$0xff] %vm2719, %v2660
  %2724 = vst.msk [vmem:[#allocation3 + $0x20] sm:$0xff] %vm2719, %v2662
  %2725 = vst.msk [vmem:[#allocation3 + $0x28] sm:$0xff] %vm2719, %v2664
  %2726 = vst.msk [vmem:[#allocation3 + $0x30] sm:$0xff] %vm2719, %v2666
  %2727 = vst.msk [vmem:[#allocation3 + $0x38] sm:$0xff] %vm2719, %v2668
  %2728 = vst.msk [vmem:[#allocation3 + $0x40] sm:$0xff] %vm2719, %v2670
  %2729 = vst.msk [vmem:[#allocation3 + $0x48] sm:$0xff] %vm2719, %v2672
  %2730 = vst.msk [vmem:[#allocation3 + $0x50] sm:$0xff] %vm2719, %v2674
  %2731 = vst.msk [vmem:[#allocation3 + $0x58] sm:$0xff] %vm2719, %v2676
  %2732 = vst.msk [vmem:[#allocation3 + $0x60] sm:$0xff] %vm2719, %v2678
  %2733 = vst.msk [vmem:[#allocation3 + $0x68] sm:$0xff] %vm2719, %v2680
  %2734 = vst.msk [vmem:[#allocation3 + $0x70] sm:$0xff] %vm2719, %v2682
  %2735 = vst.msk [vmem:[#allocation3 + $0x78] sm:$0xff] %vm2719, %v2684
  %2736 = vst.msk [vmem:[#allocation3 + $0x80] sm:$0xff] %vm2719, %v2686
  %2737 = vst.msk [vmem:[#allocation3 + $0x88] sm:$0xff] %vm2719, %v2688
  %2738 = vst.msk [vmem:[#allocation3 + $0x90] sm:$0xff] %vm2719, %v2690
  %2739 = vst.msk [vmem:[#allocation3 + $0x98] sm:$0xff] %vm2719, %v2692
  %2740 = vst.msk [vmem:[#allocation3 + $0xa0] sm:$0xff] %vm2719, %v2694
  %2741 = vst.msk [vmem:[#allocation3 + $0xa8] sm:$0xff] %vm2719, %v2696
  %v2742 = vld [vmem:[%s4] sm:$0xff]
  %v2743 = vld [vmem:[%s4 + $0x8] sm:$0xff]
  %v2744 = vld [vmem:[%s4 + $0x10] sm:$0xff]
  %v2745 = vld [vmem:[%s4 + $0x18] sm:$0xff]
  %v2746 = vld [vmem:[%s4 + $0x20] sm:$0xff]
  %v2747 = vld [vmem:[%s4 + $0x28] sm:$0xff]
  %v2748 = vld [vmem:[%s4 + $0x30] sm:$0xff]
  %v2749 = vld [vmem:[%s4 + $0x38] sm:$0xff]
  %v2750 = vld [vmem:[%s4 + $0x40] sm:$0xff]
  %v2751 = vld [vmem:[%s4 + $0x48] sm:$0xff]
  %v2752 = vld [vmem:[%s4 + $0x50] sm:$0xff]
  %v2753 = vld [vmem:[%s4 + $0x58] sm:$0xff]
  %v2754 = vld [vmem:[%s4 + $0x60] sm:$0xff]
  %v2755 = vld [vmem:[%s4 + $0x68] sm:$0xff]
  %v2756 = vld [vmem:[%s4 + $0x70] sm:$0xff]
  %v2757 = vld [vmem:[%s4 + $0x78] sm:$0xff]
  %v2758 = vld [vmem:[%s4 + $0x80] sm:$0xff]
  %v2759 = vld [vmem:[%s4 + $0x88] sm:$0xff]
  %v2760 = vld [vmem:[%s4 + $0x90] sm:$0xff]
  %v2761 = vld [vmem:[%s4 + $0x98] sm:$0xff]
  %v2762 = vld [vmem:[%s4 + $0xa0] sm:$0xff]
  %v2763 = vld [vmem:[%s4 + $0xa8] sm:$0xff]
  %v2764 = vld [vmem:[%s4 + $0xb0] sm:$0xff]
  %v2765 = vld [vmem:[%s4 + $0xb8] sm:$0xff]
  %v2766 = vld [vmem:[%s4 + $0xc0] sm:$0xff]
  %v2767 = vld [vmem:[%s4 + $0xc8] sm:$0xff]
  %v2768 = vld [vmem:[#allocation3] sm:$0xff]
  %v2769 = vld [vmem:[#allocation3 + $0x8] sm:$0xff]
  %v2770 = vld [vmem:[#allocation3 + $0x10] sm:$0xff]
  %v2771 = vld [vmem:[#allocation3 + $0x18] sm:$0xff]
  %v2772 = vld [vmem:[#allocation3 + $0x20] sm:$0xff]
  %v2773 = vld [vmem:[#allocation3 + $0x28] sm:$0xff]
  %v2774 = vld [vmem:[#allocation3 + $0x30] sm:$0xff]
  %v2775 = vld [vmem:[#allocation3 + $0x38] sm:$0xff]
  %v2776 = vld [vmem:[#allocation3 + $0x40] sm:$0xff]
  %v2777 = vld [vmem:[#allocation3 + $0x48] sm:$0xff]
  %v2778 = vld [vmem:[#allocation3 + $0x50] sm:$0xff]
  %v2779 = vld [vmem:[#allocation3 + $0x58] sm:$0xff]
  %v2780 = vld [vmem:[#allocation3 + $0x60] sm:$0xff]
  %v2781 = vld [vmem:[#allocation3 + $0x68] sm:$0xff]
  %v2782 = vld [vmem:[#allocation3 + $0x70] sm:$0xff]
  %v2783 = vld [vmem:[#allocation3 + $0x78] sm:$0xff]
  %v2784 = vld [vmem:[#allocation3 + $0x80] sm:$0xff]
  %v2785 = vld [vmem:[#allocation3 + $0x88] sm:$0xff]
  %v2786 = vld [vmem:[#allocation3 + $0x90] sm:$0xff]
  %v2787 = vld [vmem:[#allocation3 + $0x98] sm:$0xff]
  %v2788 = vld [vmem:[#allocation3 + $0xa0] sm:$0xff]
  %v2789 = vld [vmem:[#allocation3 + $0xa8] sm:$0xff]
  %s2790 = scalar_lea.vmem %s4, 208
  %v2791 = vld [vmem:[%s2790] sm:$0xff]
  %v2792 = vld [vmem:[%s2790 + $0x8] sm:$0xff]
  %v2793 = vld [vmem:[%s2790 + $0x10] sm:$0xff]
  %v2794 = vld [vmem:[%s2790 + $0x18] sm:$0xff]
  %v2795 = vld [vmem:[%s2790 + $0x20] sm:$0xff]
  %v2796 = vld [vmem:[%s2790 + $0x28] sm:$0xff]
  %v2797 = vld [vmem:[%s2790 + $0x30] sm:$0xff]
  %v2798 = vld [vmem:[%s2790 + $0x38] sm:$0xff]
  %v2799 = vld [vmem:[%s2790 + $0x40] sm:$0xff]
  %v2800 = vld [vmem:[%s2790 + $0x48] sm:$0xff]
  %v2801 = vld [vmem:[%s2790 + $0x50] sm:$0xff]
  %v2802 = vld [vmem:[%s2790 + $0x58] sm:$0xff]
  %v2803 = vld [vmem:[%s2790 + $0x60] sm:$0xff]
  %v2804 = vld [vmem:[%s2790 + $0x68] sm:$0xff]
  %v2805 = vld [vmem:[%s2790 + $0x70] sm:$0xff]
  %v2806 = vld [vmem:[%s2790 + $0x78] sm:$0xff]
  %v2807 = vld [vmem:[%s2790 + $0x80] sm:$0xff]
  %v2808 = vld [vmem:[%s2790 + $0x88] sm:$0xff]
  %v2809 = vld [vmem:[%s2790 + $0x90] sm:$0xff]
  %v2810 = vld [vmem:[%s2790 + $0x98] sm:$0xff]
  %v2811 = vld [vmem:[%s2790 + $0xa0] sm:$0xff]
  %v2812 = vld [vmem:[%s2790 + $0xa8] sm:$0xff]
  %v2813 = vld [vmem:[%s2790 + $0xb0] sm:$0xff]
  %v2814 = vld [vmem:[%s2790 + $0xb8] sm:$0xff]
  %v2815 = vld [vmem:[%s2790 + $0xc0] sm:$0xff]
  %v2816 = vld [vmem:[%s2790 + $0xc8] sm:$0xff]
  %2839 = vrot.lane.b32.xlu0 %v2768, 127
  %v2840 = vpop.permute.xlu0 %2839
  %2841 = vrot.lane.b32.xlu0 %v2769, 127
  %v2842 = vpop.permute.xlu0 %2841
  %2843 = vrot.lane.b32.xlu0 %v2770, 127
  %v2844 = vpop.permute.xlu0 %2843
  %2845 = vrot.lane.b32.xlu0 %v2771, 127
  %v2846 = vpop.permute.xlu0 %2845
  %2847 = vrot.lane.b32.xlu0 %v2772, 127
  %v2848 = vpop.permute.xlu0 %2847
  %2849 = vrot.lane.b32.xlu0 %v2773, 127
  %v2850 = vpop.permute.xlu0 %2849
  %2851 = vrot.lane.b32.xlu0 %v2774, 127
  %v2852 = vpop.permute.xlu0 %2851
  %2853 = vrot.lane.b32.xlu0 %v2775, 127
  %v2854 = vpop.permute.xlu0 %2853
  %2855 = vrot.lane.b32.xlu0 %v2776, 127
  %v2856 = vpop.permute.xlu0 %2855
  %2857 = vrot.lane.b32.xlu0 %v2777, 127
  %v2858 = vpop.permute.xlu0 %2857
  %2859 = vrot.lane.b32.xlu0 %v2778, 127
  %v2860 = vpop.permute.xlu0 %2859
  %2861 = vrot.lane.b32.xlu0 %v2779, 127
  %v2862 = vpop.permute.xlu0 %2861
  %2863 = vrot.lane.b32.xlu0 %v2780, 127
  %v2864 = vpop.permute.xlu0 %2863
  %2865 = vrot.lane.b32.xlu0 %v2781, 127
  %v2866 = vpop.permute.xlu0 %2865
  %2867 = vrot.lane.b32.xlu0 %v2782, 127
  %v2868 = vpop.permute.xlu0 %2867
  %2869 = vrot.lane.b32.xlu0 %v2783, 127
  %v2870 = vpop.permute.xlu0 %2869
  %2871 = vrot.lane.b32.xlu0 %v2784, 127
  %v2872 = vpop.permute.xlu0 %2871
  %2873 = vrot.lane.b32.xlu0 %v2785, 127
  %v2874 = vpop.permute.xlu0 %2873
  %2875 = vrot.lane.b32.xlu0 %v2786, 127
  %v2876 = vpop.permute.xlu0 %2875
  %2877 = vrot.lane.b32.xlu0 %v2787, 127
  %v2878 = vpop.permute.xlu0 %2877
  %2879 = vrot.lane.b32.xlu0 %v2788, 127
  %v2880 = vpop.permute.xlu0 %2879
  %2881 = vrot.lane.b32.xlu0 %v2789, 127
  %v2882 = vpop.permute.xlu0 %2881
  %vm2905 = vcmask 392192
  %v2907 = vsel %vm2905, %v2792, 0
  %v2910 = vsel %vm2905, %v2794, 0
  %v2913 = vsel %vm2905, %v2796, 0
  %v2916 = vsel %vm2905, %v2798, 0
  %v2919 = vsel %vm2905, %v2800, 0
  %v2922 = vsel %vm2905, %v2802, 0
  %v2925 = vsel %vm2905, %v2804, 0
  %v2928 = vsel %vm2905, %v2806, 0
  %v2931 = vsel %vm2905, %v2808, 0
  %v2934 = vsel %vm2905, %v2810, 0
  %v2937 = vsel %vm2905, %v2812, 0
  %v2940 = vsel %vm2905, %v2814, 0
  %v2943 = vsel %vm2905, %v2816, 0
  %2945 = vmatprep.subr.mxu0 0.0
  %2946 = vmatpush1.msra.mxu0 %v2870
  %2947 = vmatprep.subr.mxu0 0.0
  %2948 = vmatpush1.msra.mxu0 %v2868
  %2949 = vmatprep.subr.mxu0 0.0
  %2950 = vmatpush1.msra.mxu0 %v2866
  %2951 = vmatprep.subr.mxu0 0.0
  %2952 = vmatpush1.msra.mxu0 %v2864
  %2953 = vmatprep.subr.mxu0 0.0
  %2954 = vmatpush1.msra.mxu0 %v2862
  %2955 = vmatprep.subr.mxu0 0.0
  %2956 = vmatpush1.msra.mxu0 %v2860
  %2957 = vmatprep.subr.mxu0 0.0
  %2958 = vmatpush1.msra.mxu0 %v2858
  %2959 = vmatprep.subr.mxu0 0.0
  %2960 = vmatpush1.msra.mxu0 %v2856
  %2961 = vmatprep.subr.mxu0 0.0
  %2962 = vmatpush1.msra.mxu0 %v2854
  %2963 = vmatprep.subr.mxu0 0.0
  %2964 = vmatpush1.msra.mxu0 %v2852
  %2965 = vmatprep.subr.mxu0 0.0
  %2966 = vmatpush1.msra.mxu0 %v2850
  %2967 = vmatprep.subr.mxu0 0.0
  %2968 = vmatpush1.msra.mxu0 %v2848
  %2969 = vmatprep.subr.mxu0 0.0
  %2970 = vmatpush1.msra.mxu0 %v2846
  %2971 = vmatprep.subr.mxu0 0.0
  %2972 = vmatpush1.msra.mxu0 %v2844
  %2973 = vmatprep.subr.mxu0 0.0
  %2974 = vmatpush1.msra.mxu0 %v2842
  %2975 = vmatprep.subr.mxu0 0.0
  %2976 = vmatpush1.msra.mxu0 %v2840
  %2977 = vmatprep.subr.mxu0 0.0
  %2978 = vmatpush2.msra.mxu0 0.0
  %2979 = vmatprep.subr.mxu0 0.0
  %2980 = vmatpush2.msra.mxu0 0.0
  %2981 = vmatprep.subr.mxu0 0.0
  %2982 = vmatpush2.msra.mxu0 0.0
  %2983 = vmatprep.subr.mxu0 0.0
  %2984 = vmatpush2.msra.mxu0 0.0
  %2985 = vmatprep.subr.mxu0 0.0
  %2986 = vmatpush2.msra.mxu0 0.0
  %2987 = vmatprep.subr.mxu0 0.0
  %2988 = vmatpush2.msra.mxu0 0.0
  %2989 = vmatprep.subr.mxu0 0.0
  %2990 = vmatpush2.msra.mxu0 0.0
  %2991 = vmatprep.subr.mxu0 0.0
  %2992 = vmatpush2.msra.mxu0 0.0
  %2993 = vmatprep.subr.mxu0 0.0
  %2994 = vmatpush2.msra.mxu0 0.0
  %2995 = vmatprep.subr.mxu0 0.0
  %2996 = vmatpush2.msra.mxu0 0.0
  %2997 = vmatprep.subr.mxu0 0.0
  %2998 = vmatpush2.msra.mxu0 %v2882
  %2999 = vmatprep.subr.mxu0 0.0
  %3000 = vmatpush2.msra.mxu0 %v2880
  %3001 = vmatprep.subr.mxu0 0.0
  %3002 = vmatpush2.msra.mxu0 %v2878
  %3003 = vmatprep.subr.mxu0 0.0
  %3004 = vmatpush2.msra.mxu0 %v2876
  %3005 = vmatprep.subr.mxu0 0.0
  %3006 = vmatpush2.msra.mxu0 %v2874
  %3007 = vmatprep.subr.mxu0 0.0
  %3008 = vmatpush2.msra.mxu0 %v2872
  %3009 = vmatprep.mubr.f32.mxu0 %v2907
  %3010 = vmatmul.mubr.f32.gmra.mxu0 %v2791
  %v3011 = vpop.f32.mrf.mxu0
  %v3012 = vadd.f32 0.0, %v3011
  %v3013 = vpop.f32.mrf.mxu0
  %3014 = vmatprep.mubr.f32.mxu0 %v2910
  %3015 = vmatmul.mubr.f32.gmra.mxu0 %v2793
  %v3016 = vpop.f32.mrf.mxu0
  %v3017 = vadd.f32 0.0, %v3016
  %v3018 = vpop.f32.mrf.mxu0
  %3019 = vmatprep.mubr.f32.mxu0 %v2913
  %3020 = vmatmul.mubr.f32.gmra.mxu0 %v2795
  %v3021 = vpop.f32.mrf.mxu0
  %v3022 = vadd.f32 0.0, %v3021
  %v3023 = vpop.f32.mrf.mxu0
  %3024 = vmatprep.mubr.f32.mxu0 %v2916
  %3025 = vmatmul.mubr.f32.gmra.mxu0 %v2797
  %v3026 = vpop.f32.mrf.mxu0
  %v3027 = vadd.f32 0.0, %v3026
  %v3028 = vpop.f32.mrf.mxu0
  %3029 = vmatprep.mubr.f32.mxu0 %v2919
  %3030 = vmatmul.mubr.f32.gmra.mxu0 %v2799
  %v3031 = vpop.f32.mrf.mxu0
  %v3032 = vadd.f32 0.0, %v3031
  %v3033 = vpop.f32.mrf.mxu0
  %3034 = vmatprep.mubr.f32.mxu0 %v2922
  %3035 = vmatmul.mubr.f32.gmra.mxu0 %v2801
  %v3036 = vpop.f32.mrf.mxu0
  %v3037 = vadd.f32 0.0, %v3036
  %v3038 = vpop.f32.mrf.mxu0
  %3039 = vmatprep.mubr.f32.mxu0 %v2925
  %3040 = vmatmul.mubr.f32.gmra.mxu0 %v2803
  %v3041 = vpop.f32.mrf.mxu0
  %v3042 = vadd.f32 0.0, %v3041
  %v3043 = vpop.f32.mrf.mxu0
  %3044 = vmatprep.mubr.f32.mxu0 %v2928
  %3045 = vmatmul.mubr.f32.gmra.mxu0 %v2805
  %v3046 = vpop.f32.mrf.mxu0
  %v3047 = vadd.f32 0.0, %v3046
  %v3048 = vpop.f32.mrf.mxu0
  %3049 = vmatprep.mubr.f32.mxu0 %v2931
  %3050 = vmatmul.mubr.f32.gmra.mxu0 %v2807
  %v3051 = vpop.f32.mrf.mxu0
  %v3052 = vadd.f32 0.0, %v3051
  %v3053 = vpop.f32.mrf.mxu0
  %3054 = vmatprep.mubr.f32.mxu0 %v2934
  %3055 = vmatmul.mubr.f32.gmra.mxu0 %v2809
  %v3056 = vpop.f32.mrf.mxu0
  %v3057 = vadd.f32 0.0, %v3056
  %v3058 = vpop.f32.mrf.mxu0
  %3059 = vmatprep.mubr.f32.mxu0 %v2937
  %3060 = vmatmul.mubr.f32.gmra.mxu0 %v2811
  %v3061 = vpop.f32.mrf.mxu0
  %v3062 = vadd.f32 0.0, %v3061
  %v3063 = vpop.f32.mrf.mxu0
  %3064 = vmatprep.mubr.f32.mxu0 %v2940
  %3065 = vmatmul.mubr.f32.gmra.mxu0 %v2813
  %v3066 = vpop.f32.mrf.mxu0
  %v3067 = vadd.f32 0.0, %v3066
  %v3068 = vpop.f32.mrf.mxu0
  %3069 = vmatprep.mubr.f32.mxu0 %v2943
  %3070 = vmatmul.mubr.f32.gmra.mxu0 %v2815
  %v3071 = vpop.f32.mrf.mxu0
  %v3072 = vadd.f32 0.0, %v3071
  %v3073 = vpop.f32.mrf.mxu0
  %3074 = vdwg.mxu0
  %v3076 = vsel %vm2905, %v2743, 0
  %v3079 = vsel %vm2905, %v2745, 0
  %v3082 = vsel %vm2905, %v2747, 0
  %v3085 = vsel %vm2905, %v2749, 0
  %v3088 = vsel %vm2905, %v2751, 0
  %v3091 = vsel %vm2905, %v2753, 0
  %v3094 = vsel %vm2905, %v2755, 0
  %v3097 = vsel %vm2905, %v2757, 0
  %v3100 = vsel %vm2905, %v2759, 0
  %v3103 = vsel %vm2905, %v2761, 0
  %v3106 = vsel %vm2905, %v2763, 0
  %v3109 = vsel %vm2905, %v2765, 0
  %v3112 = vsel %vm2905, %v2767, 0
  %3114 = vmatprep.subr.mxu0 0.0
  %3115 = vmatpush1.msra.mxu0 %v2783
  %3116 = vmatprep.subr.mxu0 0.0
  %3117 = vmatpush1.msra.mxu0 %v2782
  %3118 = vmatprep.subr.mxu0 0.0
  %3119 = vmatpush1.msra.mxu0 %v2781
  %3120 = vmatprep.subr.mxu0 0.0
  %3121 = vmatpush1.msra.mxu0 %v2780
  %3122 = vmatprep.subr.mxu0 0.0
  %3123 = vmatpush1.msra.mxu0 %v2779
  %3124 = vmatprep.subr.mxu0 0.0
  %3125 = vmatpush1.msra.mxu0 %v2778
  %3126 = vmatprep.subr.mxu0 0.0
  %3127 = vmatpush1.msra.mxu0 %v2777
  %3128 = vmatprep.subr.mxu0 0.0
  %3129 = vmatpush1.msra.mxu0 %v2776
  %3130 = vmatprep.subr.mxu0 0.0
  %3131 = vmatpush1.msra.mxu0 %v2775
  %3132 = vmatprep.subr.mxu0 0.0
  %3133 = vmatpush1.msra.mxu0 %v2774
  %3134 = vmatprep.subr.mxu0 0.0
  %3135 = vmatpush1.msra.mxu0 %v2773
  %3136 = vmatprep.subr.mxu0 0.0
  %3137 = vmatpush1.msra.mxu0 %v2772
  %3138 = vmatprep.subr.mxu0 0.0
  %3139 = vmatpush1.msra.mxu0 %v2771
  %3140 = vmatprep.subr.mxu0 0.0
  %3141 = vmatpush1.msra.mxu0 %v2770
  %3142 = vmatprep.subr.mxu0 0.0
  %3143 = vmatpush1.msra.mxu0 %v2769
  %3144 = vmatprep.subr.mxu0 0.0
  %3145 = vmatpush1.msra.mxu0 %v2768
  %3146 = vmatprep.subr.mxu0 0.0
  %3147 = vmatpush2.msra.mxu0 0.0
  %3148 = vmatprep.subr.mxu0 0.0
  %3149 = vmatpush2.msra.mxu0 0.0
  %3150 = vmatprep.subr.mxu0 0.0
  %3151 = vmatpush2.msra.mxu0 0.0
  %3152 = vmatprep.subr.mxu0 0.0
  %3153 = vmatpush2.msra.mxu0 0.0
  %3154 = vmatprep.subr.mxu0 0.0
  %3155 = vmatpush2.msra.mxu0 0.0
  %3156 = vmatprep.subr.mxu0 0.0
  %3157 = vmatpush2.msra.mxu0 0.0
  %3158 = vmatprep.subr.mxu0 0.0
  %3159 = vmatpush2.msra.mxu0 0.0
  %3160 = vmatprep.subr.mxu0 0.0
  %3161 = vmatpush2.msra.mxu0 0.0
  %3162 = vmatprep.subr.mxu0 0.0
  %3163 = vmatpush2.msra.mxu0 0.0
  %3164 = vmatprep.subr.mxu0 0.0
  %3165 = vmatpush2.msra.mxu0 0.0
  %3166 = vmatprep.subr.mxu0 0.0
  %3167 = vmatpush2.msra.mxu0 %v2789
  %3168 = vmatprep.subr.mxu0 0.0
  %3169 = vmatpush2.msra.mxu0 %v2788
  %3170 = vmatprep.subr.mxu0 0.0
  %3171 = vmatpush2.msra.mxu0 %v2787
  %3172 = vmatprep.subr.mxu0 0.0
  %3173 = vmatpush2.msra.mxu0 %v2786
  %3174 = vmatprep.subr.mxu0 0.0
  %3175 = vmatpush2.msra.mxu0 %v2785
  %3176 = vmatprep.subr.mxu0 0.0
  %3177 = vmatpush2.msra.mxu0 %v2784
  %3178 = vmatprep.mubr.f32.mxu0 %v3076
  %3179 = vmatmul.mubr.f32.gmra.mxu0 %v2742
  %v3180 = vpop.f32.mrf.mxu0
  %v3181 = vadd.f32 %v3012, %v3180
  %v3182 = vpop.f32.mrf.mxu0
  %3183 = vmatprep.mubr.f32.mxu0 %v3079
  %3184 = vmatmul.mubr.f32.gmra.mxu0 %v2744
  %v3185 = vpop.f32.mrf.mxu0
  %v3186 = vadd.f32 %v3017, %v3185
  %v3187 = vpop.f32.mrf.mxu0
  %3188 = vmatprep.mubr.f32.mxu0 %v3082
  %3189 = vmatmul.mubr.f32.gmra.mxu0 %v2746
  %v3190 = vpop.f32.mrf.mxu0
  %v3191 = vadd.f32 %v3022, %v3190
  %v3192 = vpop.f32.mrf.mxu0
  %3193 = vmatprep.mubr.f32.mxu0 %v3085
  %3194 = vmatmul.mubr.f32.gmra.mxu0 %v2748
  %v3195 = vpop.f32.mrf.mxu0
  %v3196 = vadd.f32 %v3027, %v3195
  %v3197 = vpop.f32.mrf.mxu0
  %3198 = vmatprep.mubr.f32.mxu0 %v3088
  %3199 = vmatmul.mubr.f32.gmra.mxu0 %v2750
  %v3200 = vpop.f32.mrf.mxu0
  %v3201 = vadd.f32 %v3032, %v3200
  %v3202 = vpop.f32.mrf.mxu0
  %3203 = vmatprep.mubr.f32.mxu0 %v3091
  %3204 = vmatmul.mubr.f32.gmra.mxu0 %v2752
  %v3205 = vpop.f32.mrf.mxu0
  %v3206 = vadd.f32 %v3037, %v3205
  %v3207 = vpop.f32.mrf.mxu0
  %3208 = vmatprep.mubr.f32.mxu0 %v3094
  %3209 = vmatmul.mubr.f32.gmra.mxu0 %v2754
  %v3210 = vpop.f32.mrf.mxu0
  %v3211 = vadd.f32 %v3042, %v3210
  %v3212 = vpop.f32.mrf.mxu0
  %3213 = vmatprep.mubr.f32.mxu0 %v3097
  %3214 = vmatmul.mubr.f32.gmra.mxu0 %v2756
  %v3215 = vpop.f32.mrf.mxu0
  %v3216 = vadd.f32 %v3047, %v3215
  %v3217 = vpop.f32.mrf.mxu0
  %3218 = vmatprep.mubr.f32.mxu0 %v3100
  %3219 = vmatmul.mubr.f32.gmra.mxu0 %v2758
  %v3220 = vpop.f32.mrf.mxu0
  %v3221 = vadd.f32 %v3052, %v3220
  %v3222 = vpop.f32.mrf.mxu0
  %3223 = vmatprep.mubr.f32.mxu0 %v3103
  %3224 = vmatmul.mubr.f32.gmra.mxu0 %v2760
  %v3225 = vpop.f32.mrf.mxu0
  %v3226 = vadd.f32 %v3057, %v3225
  %v3227 = vpop.f32.mrf.mxu0
  %3228 = vmatprep.mubr.f32.mxu0 %v3106
  %3229 = vmatmul.mubr.f32.gmra.mxu0 %v2762
  %v3230 = vpop.f32.mrf.mxu0
  %v3231 = vadd.f32 %v3062, %v3230
  %v3232 = vpop.f32.mrf.mxu0
  %3233 = vmatprep.mubr.f32.mxu0 %v3109
  %3234 = vmatmul.mubr.f32.gmra.mxu0 %v2764
  %v3235 = vpop.f32.mrf.mxu0
  %v3236 = vadd.f32 %v3067, %v3235
  %v3237 = vpop.f32.mrf.mxu0
  %3238 = vmatprep.mubr.f32.mxu0 %v3112
  %3239 = vmatmul.mubr.f32.gmra.mxu0 %v2766
  %v3240 = vpop.f32.mrf.mxu0
  %v3241 = vadd.f32 %v3072, %v3240
  %v3242 = vpop.f32.mrf.mxu0
  %3243 = vdwg.mxu0
  %s3244 = scalar_lea.vmem %s4, 416
  %v3245 = vld [vmem:[%s3244] sm:$0xff]
  %v3246 = vld [vmem:[%s3244 + $0x8] sm:$0xff]
  %v3247 = vld [vmem:[%s3244 + $0x10] sm:$0xff]
  %v3248 = vld [vmem:[%s3244 + $0x18] sm:$0xff]
  %v3249 = vld [vmem:[%s3244 + $0x20] sm:$0xff]
  %v3250 = vld [vmem:[%s3244 + $0x28] sm:$0xff]
  %v3251 = vld [vmem:[%s3244 + $0x30] sm:$0xff]
  %v3252 = vld [vmem:[%s3244 + $0x38] sm:$0xff]
  %v3253 = vld [vmem:[%s3244 + $0x40] sm:$0xff]
  %v3254 = vld [vmem:[%s3244 + $0x48] sm:$0xff]
  %v3255 = vld [vmem:[%s3244 + $0x50] sm:$0xff]
  %v3256 = vld [vmem:[%s3244 + $0x58] sm:$0xff]
  %v3257 = vld [vmem:[%s3244 + $0x60] sm:$0xff]
  %v3258 = vld [vmem:[%s3244 + $0x68] sm:$0xff]
  %v3259 = vld [vmem:[%s3244 + $0x70] sm:$0xff]
  %v3260 = vld [vmem:[%s3244 + $0x78] sm:$0xff]
  %v3261 = vld [vmem:[%s3244 + $0x80] sm:$0xff]
  %v3262 = vld [vmem:[%s3244 + $0x88] sm:$0xff]
  %v3263 = vld [vmem:[%s3244 + $0x90] sm:$0xff]
  %v3264 = vld [vmem:[%s3244 + $0x98] sm:$0xff]
  %v3265 = vld [vmem:[%s3244 + $0xa0] sm:$0xff]
  %v3266 = vld [vmem:[%s3244 + $0xa8] sm:$0xff]
  %v3267 = vld [vmem:[%s3244 + $0xb0] sm:$0xff]
  %v3268 = vld [vmem:[%s3244 + $0xb8] sm:$0xff]
  %v3269 = vld [vmem:[%s3244 + $0xc0] sm:$0xff]
  %v3270 = vld [vmem:[%s3244 + $0xc8] sm:$0xff]
  %3271 = vrot.lane.b32.xlu0 %v2768, 126
  %v3272 = vpop.permute.xlu0 %3271
  %3273 = vrot.lane.b32.xlu0 %v2769, 126
  %v3274 = vpop.permute.xlu0 %3273
  %3275 = vrot.lane.b32.xlu0 %v2770, 126
  %v3276 = vpop.permute.xlu0 %3275
  %3277 = vrot.lane.b32.xlu0 %v2771, 126
  %v3278 = vpop.permute.xlu0 %3277
  %3279 = vrot.lane.b32.xlu0 %v2772, 126
  %v3280 = vpop.permute.xlu0 %3279
  %3281 = vrot.lane.b32.xlu0 %v2773, 126
  %v3282 = vpop.permute.xlu0 %3281
  %3283 = vrot.lane.b32.xlu0 %v2774, 126
  %v3284 = vpop.permute.xlu0 %3283
  %3285 = vrot.lane.b32.xlu0 %v2775, 126
  %v3286 = vpop.permute.xlu0 %3285
  %3287 = vrot.lane.b32.xlu0 %v2776, 126
  %v3288 = vpop.permute.xlu0 %3287
  %3289 = vrot.lane.b32.xlu0 %v2777, 126
  %v3290 = vpop.permute.xlu0 %3289
  %3291 = vrot.lane.b32.xlu0 %v2778, 126
  %v3292 = vpop.permute.xlu0 %3291
  %3293 = vrot.lane.b32.xlu0 %v2779, 126
  %v3294 = vpop.permute.xlu0 %3293
  %3295 = vrot.lane.b32.xlu0 %v2780, 126
  %v3296 = vpop.permute.xlu0 %3295
  %3297 = vrot.lane.b32.xlu0 %v2781, 126
  %v3298 = vpop.permute.xlu0 %3297
  %3299 = vrot.lane.b32.xlu0 %v2782, 126
  %v3300 = vpop.permute.xlu0 %3299
  %3301 = vrot.lane.b32.xlu0 %v2783, 126
  %v3302 = vpop.permute.xlu0 %3301
  %3303 = vrot.lane.b32.xlu0 %v2784, 126
  %v3304 = vpop.permute.xlu0 %3303
  %3305 = vrot.lane.b32.xlu0 %v2785, 126
  %v3306 = vpop.permute.xlu0 %3305
  %3307 = vrot.lane.b32.xlu0 %v2786, 126
  %v3308 = vpop.permute.xlu0 %3307
  %3309 = vrot.lane.b32.xlu0 %v2787, 126
  %v3310 = vpop.permute.xlu0 %3309
  %3311 = vrot.lane.b32.xlu0 %v2788, 126
  %v3312 = vpop.permute.xlu0 %3311
  %3313 = vrot.lane.b32.xlu0 %v2789, 126
  %v3314 = vpop.permute.xlu0 %3313
  %v3338 = vsel %vm2905, %v3246, 0
  %v3341 = vsel %vm2905, %v3248, 0
  %v3344 = vsel %vm2905, %v3250, 0
  %v3347 = vsel %vm2905, %v3252, 0
  %v3350 = vsel %vm2905, %v3254, 0
  %v3353 = vsel %vm2905, %v3256, 0
  %v3356 = vsel %vm2905, %v3258, 0
  %v3359 = vsel %vm2905, %v3260, 0
  %v3362 = vsel %vm2905, %v3262, 0
  %v3365 = vsel %vm2905, %v3264, 0
  %v3368 = vsel %vm2905, %v3266, 0
  %v3371 = vsel %vm2905, %v3268, 0
  %v3374 = vsel %vm2905, %v3270, 0
  %3376 = vmatprep.subr.mxu0 0.0
  %3377 = vmatpush1.msra.mxu0 %v3302
  %3378 = vmatprep.subr.mxu0 0.0
  %3379 = vmatpush1.msra.mxu0 %v3300
  %3380 = vmatprep.subr.mxu0 0.0
  %3381 = vmatpush1.msra.mxu0 %v3298
  %3382 = vmatprep.subr.mxu0 0.0
  %3383 = vmatpush1.msra.mxu0 %v3296
  %3384 = vmatprep.subr.mxu0 0.0
  %3385 = vmatpush1.msra.mxu0 %v3294
  %3386 = vmatprep.subr.mxu0 0.0
  %3387 = vmatpush1.msra.mxu0 %v3292
  %3388 = vmatprep.subr.mxu0 0.0
  %3389 = vmatpush1.msra.mxu0 %v3290
  %3390 = vmatprep.subr.mxu0 0.0
  %3391 = vmatpush1.msra.mxu0 %v3288
  %3392 = vmatprep.subr.mxu0 0.0
  %3393 = vmatpush1.msra.mxu0 %v3286
  %3394 = vmatprep.subr.mxu0 0.0
  %3395 = vmatpush1.msra.mxu0 %v3284
  %3396 = vmatprep.subr.mxu0 0.0
  %3397 = vmatpush1.msra.mxu0 %v3282
  %3398 = vmatprep.subr.mxu0 0.0
  %3399 = vmatpush1.msra.mxu0 %v3280
  %3400 = vmatprep.subr.mxu0 0.0
  %3401 = vmatpush1.msra.mxu0 %v3278
  %3402 = vmatprep.subr.mxu0 0.0
  %3403 = vmatpush1.msra.mxu0 %v3276
  %3404 = vmatprep.subr.mxu0 0.0
  %3405 = vmatpush1.msra.mxu0 %v3274
  %3406 = vmatprep.subr.mxu0 0.0
  %3407 = vmatpush1.msra.mxu0 %v3272
  %3408 = vmatprep.subr.mxu0 0.0
  %3409 = vmatpush2.msra.mxu0 0.0
  %3410 = vmatprep.subr.mxu0 0.0
  %3411 = vmatpush2.msra.mxu0 0.0
  %3412 = vmatprep.subr.mxu0 0.0
  %3413 = vmatpush2.msra.mxu0 0.0
  %3414 = vmatprep.subr.mxu0 0.0
  %3415 = vmatpush2.msra.mxu0 0.0
  %3416 = vmatprep.subr.mxu0 0.0
  %3417 = vmatpush2.msra.mxu0 0.0
  %3418 = vmatprep.subr.mxu0 0.0
  %3419 = vmatpush2.msra.mxu0 0.0
  %3420 = vmatprep.subr.mxu0 0.0
  %3421 = vmatpush2.msra.mxu0 0.0
  %3422 = vmatprep.subr.mxu0 0.0
  %3423 = vmatpush2.msra.mxu0 0.0
  %3424 = vmatprep.subr.mxu0 0.0
  %3425 = vmatpush2.msra.mxu0 0.0
  %3426 = vmatprep.subr.mxu0 0.0
  %3427 = vmatpush2.msra.mxu0 0.0
  %3428 = vmatprep.subr.mxu0 0.0
  %3429 = vmatpush2.msra.mxu0 %v3314
  %3430 = vmatprep.subr.mxu0 0.0
  %3431 = vmatpush2.msra.mxu0 %v3312
  %3432 = vmatprep.subr.mxu0 0.0
  %3433 = vmatpush2.msra.mxu0 %v3310
  %3434 = vmatprep.subr.mxu0 0.0
  %3435 = vmatpush2.msra.mxu0 %v3308
  %3436 = vmatprep.subr.mxu0 0.0
  %3437 = vmatpush2.msra.mxu0 %v3306
  %3438 = vmatprep.subr.mxu0 0.0
  %3439 = vmatpush2.msra.mxu0 %v3304
  %3440 = vmatprep.mubr.f32.mxu0 %v3338
  %3441 = vmatmul.mubr.f32.gmra.mxu0 %v3245
  %v3442 = vpop.f32.mrf.mxu0
  %v3443 = vadd.f32 0.0, %v3442
  %v3444 = vpop.f32.mrf.mxu0
  %3445 = vmatprep.mubr.f32.mxu0 %v3341
  %3446 = vmatmul.mubr.f32.gmra.mxu0 %v3247
  %v3447 = vpop.f32.mrf.mxu0
  %v3448 = vadd.f32 0.0, %v3447
  %v3449 = vpop.f32.mrf.mxu0
  %3450 = vmatprep.mubr.f32.mxu0 %v3344
  %3451 = vmatmul.mubr.f32.gmra.mxu0 %v3249
  %v3452 = vpop.f32.mrf.mxu0
  %v3453 = vadd.f32 0.0, %v3452
  %v3454 = vpop.f32.mrf.mxu0
  %3455 = vmatprep.mubr.f32.mxu0 %v3347
  %3456 = vmatmul.mubr.f32.gmra.mxu0 %v3251
  %v3457 = vpop.f32.mrf.mxu0
  %v3458 = vadd.f32 0.0, %v3457
  %v3459 = vpop.f32.mrf.mxu0
  %3460 = vmatprep.mubr.f32.mxu0 %v3350
  %3461 = vmatmul.mubr.f32.gmra.mxu0 %v3253
  %v3462 = vpop.f32.mrf.mxu0
  %v3463 = vadd.f32 0.0, %v3462
  %v3464 = vpop.f32.mrf.mxu0
  %3465 = vmatprep.mubr.f32.mxu0 %v3353
  %3466 = vmatmul.mubr.f32.gmra.mxu0 %v3255
  %v3467 = vpop.f32.mrf.mxu0
  %v3468 = vadd.f32 0.0, %v3467
  %v3469 = vpop.f32.mrf.mxu0
  %3470 = vmatprep.mubr.f32.mxu0 %v3356
  %3471 = vmatmul.mubr.f32.gmra.mxu0 %v3257
  %v3472 = vpop.f32.mrf.mxu0
  %v3473 = vadd.f32 0.0, %v3472
  %v3474 = vpop.f32.mrf.mxu0
  %3475 = vmatprep.mubr.f32.mxu0 %v3359
  %3476 = vmatmul.mubr.f32.gmra.mxu0 %v3259
  %v3477 = vpop.f32.mrf.mxu0
  %v3478 = vadd.f32 0.0, %v3477
  %v3479 = vpop.f32.mrf.mxu0
  %3480 = vmatprep.mubr.f32.mxu0 %v3362
  %3481 = vmatmul.mubr.f32.gmra.mxu0 %v3261
  %v3482 = vpop.f32.mrf.mxu0
  %v3483 = vadd.f32 0.0, %v3482
  %v3484 = vpop.f32.mrf.mxu0
  %3485 = vmatprep.mubr.f32.mxu0 %v3365
  %3486 = vmatmul.mubr.f32.gmra.mxu0 %v3263
  %v3487 = vpop.f32.mrf.mxu0
  %v3488 = vadd.f32 0.0, %v3487
  %v3489 = vpop.f32.mrf.mxu0
  %3490 = vmatprep.mubr.f32.mxu0 %v3368
  %3491 = vmatmul.mubr.f32.gmra.mxu0 %v3265
  %v3492 = vpop.f32.mrf.mxu0
  %v3493 = vadd.f32 0.0, %v3492
  %v3494 = vpop.f32.mrf.mxu0
  %3495 = vmatprep.mubr.f32.mxu0 %v3371
  %3496 = vmatmul.mubr.f32.gmra.mxu0 %v3267
  %v3497 = vpop.f32.mrf.mxu0
  %v3498 = vadd.f32 0.0, %v3497
  %v3499 = vpop.f32.mrf.mxu0
  %3500 = vmatprep.mubr.f32.mxu0 %v3374
  %3501 = vmatmul.mubr.f32.gmra.mxu0 %v3269
  %v3502 = vpop.f32.mrf.mxu0
  %v3503 = vadd.f32 0.0, %v3502
  %v3504 = vpop.f32.mrf.mxu0
  %3505 = vdwg.mxu0
  %v3506 = vadd.f32 %v3181, %v3443
  %v3507 = vadd.f32 %v3186, %v3448
  %v3508 = vadd.f32 %v3191, %v3453
  %v3509 = vadd.f32 %v3196, %v3458
  %v3510 = vadd.f32 %v3201, %v3463
  %v3511 = vadd.f32 %v3206, %v3468
  %v3512 = vadd.f32 %v3211, %v3473
  %v3513 = vadd.f32 %v3216, %v3478
  %v3514 = vadd.f32 %v3221, %v3483
  %v3515 = vadd.f32 %v3226, %v3488
  %v3516 = vadd.f32 %v3231, %v3493
  %v3517 = vadd.f32 %v3236, %v3498
  %v3518 = vadd.f32 %v3241, %v3503
  %v3519 = vmul.f32 %v3506, 2.0
  %v3520 = vmul.f32 %v3507, 2.0
  %v3521 = vmul.f32 %v3508, 2.0
  %v3522 = vmul.f32 %v3509, 2.0
  %v3523 = vmul.f32 %v3510, 2.0
  %v3524 = vmul.f32 %v3511, 2.0
  %v3525 = vmul.f32 %v3512, 2.0
  %v3526 = vmul.f32 %v3513, 2.0
  %v3527 = vmul.f32 %v3514, 2.0
  %v3528 = vmul.f32 %v3515, 2.0
  %v3529 = vmul.f32 %v3516, 2.0
  %v3530 = vmul.f32 %v3517, 2.0
  %v3531 = vmul.f32 %v3518, 2.0
  %v3532 = vld [vmem:[%s5] sm:$0xff]
  %v3533 = vld [vmem:[%s5 + $0x8] sm:$0xff]
  %v3534 = vld [vmem:[%s5 + $0x10] sm:$0xff]
  %v3535 = vld [vmem:[%s5 + $0x18] sm:$0xff]
  %v3536 = vld [vmem:[%s5 + $0x20] sm:$0xff]
  %v3537 = vld [vmem:[%s5 + $0x28] sm:$0xff]
  %v3538 = vld [vmem:[%s5 + $0x30] sm:$0xff]
  %v3539 = vld [vmem:[%s5 + $0x38] sm:$0xff]
  %v3540 = vld [vmem:[%s5 + $0x40] sm:$0xff]
  %v3541 = vld [vmem:[%s5 + $0x48] sm:$0xff]
  %v3542 = vld [vmem:[%s5 + $0x50] sm:$0xff]
  %v3543 = vld [vmem:[%s5 + $0x58] sm:$0xff]
  %v3544 = vld [vmem:[%s5 + $0x60] sm:$0xff]
  %3546 = vset.pattern.permute.xlu0 0
  %3547 = vperm.xlu0 %3546, %v3532
  %v3548 = vpop.permute.xlu0 %3547
  %3551 = vset.pattern.permute.xlu0 0
  %3552 = vperm.xlu0 %3551, %v3533
  %v3553 = vpop.permute.xlu0 %3552
  %3556 = vset.pattern.permute.xlu0 0
  %3557 = vperm.xlu0 %3556, %v3534
  %v3558 = vpop.permute.xlu0 %3557
  %3561 = vset.pattern.permute.xlu0 0
  %3562 = vperm.xlu0 %3561, %v3535
  %v3563 = vpop.permute.xlu0 %3562
  %3566 = vset.pattern.permute.xlu0 0
  %3567 = vperm.xlu0 %3566, %v3536
  %v3568 = vpop.permute.xlu0 %3567
  %3571 = vset.pattern.permute.xlu0 0
  %3572 = vperm.xlu0 %3571, %v3537
  %v3573 = vpop.permute.xlu0 %3572
  %3576 = vset.pattern.permute.xlu0 0
  %3577 = vperm.xlu0 %3576, %v3538
  %v3578 = vpop.permute.xlu0 %3577
  %3581 = vset.pattern.permute.xlu0 0
  %3582 = vperm.xlu0 %3581, %v3539
  %v3583 = vpop.permute.xlu0 %3582
  %3586 = vset.pattern.permute.xlu0 0
  %3587 = vperm.xlu0 %3586, %v3540
  %v3588 = vpop.permute.xlu0 %3587
  %3591 = vset.pattern.permute.xlu0 0
  %3592 = vperm.xlu0 %3591, %v3541
  %v3593 = vpop.permute.xlu0 %3592
  %3596 = vset.pattern.permute.xlu0 0
  %3597 = vperm.xlu0 %3596, %v3542
  %v3598 = vpop.permute.xlu0 %3597
  %3601 = vset.pattern.permute.xlu0 0
  %3602 = vperm.xlu0 %3601, %v3543
  %v3603 = vpop.permute.xlu0 %3602
  %3606 = vset.pattern.permute.xlu0 0
  %3607 = vperm.xlu0 %3606, %v3544
  %v3608 = vpop.permute.xlu0 %3607
  %v3610 = vadd.f32 %v3519, %v3548
  %v3611 = vadd.f32 %v3520, %v3553
  %v3612 = vadd.f32 %v3521, %v3558
  %v3613 = vadd.f32 %v3522, %v3563
  %v3614 = vadd.f32 %v3523, %v3568
  %v3615 = vadd.f32 %v3524, %v3573
  %v3616 = vadd.f32 %v3525, %v3578
  %v3617 = vadd.f32 %v3526, %v3583
  %v3618 = vadd.f32 %v3527, %v3588
  %v3619 = vadd.f32 %v3528, %v3593
  %v3620 = vadd.f32 %v3529, %v3598
  %v3621 = vadd.f32 %v3530, %v3603
  %v3622 = vadd.f32 %v3531, %v3608
  %vm3623 = vcmask 105472
  %3624 = vst.msk [vmem:[#allocation4] sm:$0xff] %vm3623, %v3610
  %3625 = vst.msk [vmem:[#allocation4 + $0x8] sm:$0xff] %vm3623, %v3611
  %3626 = vst.msk [vmem:[#allocation4 + $0x10] sm:$0xff] %vm3623, %v3612
  %3627 = vst.msk [vmem:[#allocation4 + $0x18] sm:$0xff] %vm3623, %v3613
  %3628 = vst.msk [vmem:[#allocation4 + $0x20] sm:$0xff] %vm3623, %v3614
  %3629 = vst.msk [vmem:[#allocation4 + $0x28] sm:$0xff] %vm3623, %v3615
  %3630 = vst.msk [vmem:[#allocation4 + $0x30] sm:$0xff] %vm3623, %v3616
  %3631 = vst.msk [vmem:[#allocation4 + $0x38] sm:$0xff] %vm3623, %v3617
  %3632 = vst.msk [vmem:[#allocation4 + $0x40] sm:$0xff] %vm3623, %v3618
  %3633 = vst.msk [vmem:[#allocation4 + $0x48] sm:$0xff] %vm3623, %v3619
  %3634 = vst.msk [vmem:[#allocation4 + $0x50] sm:$0xff] %vm3623, %v3620
  %3635 = vst.msk [vmem:[#allocation4 + $0x58] sm:$0xff] %vm3623, %v3621
  %3636 = vst.msk [vmem:[#allocation4 + $0x60] sm:$0xff] %vm3623, %v3622
  %v3637 = vld [vmem:[%s6] sm:$0xff]
  %v3638 = vld [vmem:[%s6 + $0x8] sm:$0xff]
  %v3639 = vld [vmem:[%s6 + $0x10] sm:$0xff]
  %v3640 = vld [vmem:[%s6 + $0x18] sm:$0xff]
  %v3641 = vld [vmem:[%s6 + $0x20] sm:$0xff]
  %v3642 = vld [vmem:[%s6 + $0x28] sm:$0xff]
  %v3643 = vld [vmem:[%s6 + $0x30] sm:$0xff]
  %v3644 = vld [vmem:[%s6 + $0x38] sm:$0xff]
  %v3645 = vld [vmem:[%s6 + $0x40] sm:$0xff]
  %v3646 = vld [vmem:[#allocation4] sm:$0xff]
  %v3647 = vld [vmem:[#allocation4 + $0x8] sm:$0xff]
  %v3648 = vld [vmem:[#allocation4 + $0x10] sm:$0xff]
  %v3649 = vld [vmem:[#allocation4 + $0x18] sm:$0xff]
  %v3650 = vld [vmem:[#allocation4 + $0x20] sm:$0xff]
  %v3651 = vld [vmem:[#allocation4 + $0x28] sm:$0xff]
  %v3652 = vld [vmem:[#allocation4 + $0x30] sm:$0xff]
  %v3653 = vld [vmem:[#allocation4 + $0x38] sm:$0xff]
  %v3654 = vld [vmem:[#allocation4 + $0x40] sm:$0xff]
  %v3655 = vld [vmem:[#allocation4 + $0x48] sm:$0xff]
  %v3656 = vld [vmem:[#allocation4 + $0x50] sm:$0xff]
  %v3657 = vld [vmem:[#allocation4 + $0x58] sm:$0xff]
  %v3658 = vld [vmem:[#allocation4 + $0x60] sm:$0xff]
  %s3659 = scalar_lea.vmem %s6, 72
  %v3660 = vld [vmem:[%s3659] sm:$0xff]
  %v3661 = vld [vmem:[%s3659 + $0x8] sm:$0xff]
  %v3662 = vld [vmem:[%s3659 + $0x10] sm:$0xff]
  %v3663 = vld [vmem:[%s3659 + $0x18] sm:$0xff]
  %v3664 = vld [vmem:[%s3659 + $0x20] sm:$0xff]
  %v3665 = vld [vmem:[%s3659 + $0x28] sm:$0xff]
  %v3666 = vld [vmem:[%s3659 + $0x30] sm:$0xff]
  %v3667 = vld [vmem:[%s3659 + $0x38] sm:$0xff]
  %v3668 = vld [vmem:[%s3659 + $0x40] sm:$0xff]
  %3682 = vrot.lane.b32.xlu0 %v3646, 127
  %v3683 = vpop.permute.xlu0 %3682
  %3684 = vrot.lane.b32.xlu0 %v3647, 127
  %v3685 = vpop.permute.xlu0 %3684
  %3686 = vrot.lane.b32.xlu0 %v3648, 127
  %v3687 = vpop.permute.xlu0 %3686
  %3688 = vrot.lane.b32.xlu0 %v3649, 127
  %v3689 = vpop.permute.xlu0 %3688
  %3690 = vrot.lane.b32.xlu0 %v3650, 127
  %v3691 = vpop.permute.xlu0 %3690
  %3692 = vrot.lane.b32.xlu0 %v3651, 127
  %v3693 = vpop.permute.xlu0 %3692
  %3694 = vrot.lane.b32.xlu0 %v3652, 127
  %v3695 = vpop.permute.xlu0 %3694
  %3696 = vrot.lane.b32.xlu0 %v3653, 127
  %v3697 = vpop.permute.xlu0 %3696
  %3698 = vrot.lane.b32.xlu0 %v3654, 127
  %v3699 = vpop.permute.xlu0 %3698
  %3700 = vrot.lane.b32.xlu0 %v3655, 127
  %v3701 = vpop.permute.xlu0 %3700
  %3702 = vrot.lane.b32.xlu0 %v3656, 127
  %v3703 = vpop.permute.xlu0 %3702
  %3704 = vrot.lane.b32.xlu0 %v3657, 127
  %v3705 = vpop.permute.xlu0 %3704
  %3706 = vrot.lane.b32.xlu0 %v3658, 127
  %v3707 = vpop.permute.xlu0 %3706
  %vm3721 = vcmask 850944
  %v3723 = vsel %vm3721, %v3660, 0
  %v3726 = vsel %vm3721, %v3661, 0
  %v3729 = vsel %vm3721, %v3662, 0
  %v3732 = vsel %vm3721, %v3663, 0
  %v3735 = vsel %vm3721, %v3664, 0
  %v3738 = vsel %vm3721, %v3665, 0
  %v3741 = vsel %vm3721, %v3666, 0
  %v3744 = vsel %vm3721, %v3667, 0
  %v3747 = vsel %vm3721, %v3668, 0
  %3749 = vmatprep.subr.mxu0 0.0
  %3750 = vmatpush1.msra.mxu0 0.0
  %3751 = vmatprep.subr.mxu0 0.0
  %3752 = vmatpush1.msra.mxu0 0.0
  %3753 = vmatprep.subr.mxu0 0.0
  %3754 = vmatpush1.msra.mxu0 0.0
  %3755 = vmatprep.subr.mxu0 0.0
  %3756 = vmatpush1.msra.mxu0 %v3707
  %3757 = vmatprep.subr.mxu0 0.0
  %3758 = vmatpush1.msra.mxu0 %v3705
  %3759 = vmatprep.subr.mxu0 0.0
  %3760 = vmatpush1.msra.mxu0 %v3703
  %3761 = vmatprep.subr.mxu0 0.0
  %3762 = vmatpush1.msra.mxu0 %v3701
  %3763 = vmatprep.subr.mxu0 0.0
  %3764 = vmatpush1.msra.mxu0 %v3699
  %3765 = vmatprep.subr.mxu0 0.0
  %3766 = vmatpush1.msra.mxu0 %v3697
  %3767 = vmatprep.subr.mxu0 0.0
  %3768 = vmatpush1.msra.mxu0 %v3695
  %3769 = vmatprep.subr.mxu0 0.0
  %3770 = vmatpush1.msra.mxu0 %v3693
  %3771 = vmatprep.subr.mxu0 0.0
  %3772 = vmatpush1.msra.mxu0 %v3691
  %3773 = vmatprep.subr.mxu0 0.0
  %3774 = vmatpush1.msra.mxu0 %v3689
  %3775 = vmatprep.subr.mxu0 0.0
  %3776 = vmatpush1.msra.mxu0 %v3687
  %3777 = vmatprep.subr.mxu0 0.0
  %3778 = vmatpush1.msra.mxu0 %v3685
  %3779 = vmatprep.subr.mxu0 0.0
  %3780 = vmatpush1.msra.mxu0 %v3683
  %3781 = vmatprep.subr.mxu0 0.0
  %3782 = vmatpush2.msra.mxu0 0.0
  %3783 = vmatprep.subr.mxu0 0.0
  %3784 = vmatpush2.msra.mxu0 0.0
  %3785 = vmatprep.subr.mxu0 0.0
  %3786 = vmatpush2.msra.mxu0 0.0
  %3787 = vmatprep.subr.mxu0 0.0
  %3788 = vmatpush2.msra.mxu0 0.0
  %3789 = vmatprep.subr.mxu0 0.0
  %3790 = vmatpush2.msra.mxu0 0.0
  %3791 = vmatprep.subr.mxu0 0.0
  %3792 = vmatpush2.msra.mxu0 0.0
  %3793 = vmatprep.subr.mxu0 0.0
  %3794 = vmatpush2.msra.mxu0 0.0
  %3795 = vmatprep.subr.mxu0 0.0
  %3796 = vmatpush2.msra.mxu0 0.0
  %3797 = vmatprep.subr.mxu0 0.0
  %3798 = vmatpush2.msra.mxu0 0.0
  %3799 = vmatprep.subr.mxu0 0.0
  %3800 = vmatpush2.msra.mxu0 0.0
  %3801 = vmatprep.subr.mxu0 0.0
  %3802 = vmatpush2.msra.mxu0 0.0
  %3803 = vmatprep.subr.mxu0 0.0
  %3804 = vmatpush2.msra.mxu0 0.0
  %3805 = vmatprep.subr.mxu0 0.0
  %3806 = vmatpush2.msra.mxu0 0.0
  %3807 = vmatprep.subr.mxu0 0.0
  %3808 = vmatpush2.msra.mxu0 0.0
  %3809 = vmatprep.subr.mxu0 0.0
  %3810 = vmatpush2.msra.mxu0 0.0
  %3811 = vmatprep.subr.mxu0 0.0
  %3812 = vmatpush2.msra.mxu0 0.0
  %3813 = vmatprep.mubr.f32.mxu0 0.0
  %3814 = vmatmul.mubr.f32.gmra.mxu0 %v3723
  %v3815 = vpop.f32.mrf.mxu0
  %v3816 = vadd.f32 0.0, %v3815
  %v3817 = vpop.f32.mrf.mxu0
  %3818 = vmatprep.mubr.f32.mxu0 0.0
  %3819 = vmatmul.mubr.f32.gmra.mxu0 %v3726
  %v3820 = vpop.f32.mrf.mxu0
  %v3821 = vadd.f32 0.0, %v3820
  %v3822 = vpop.f32.mrf.mxu0
  %3823 = vmatprep.mubr.f32.mxu0 0.0
  %3824 = vmatmul.mubr.f32.gmra.mxu0 %v3729
  %v3825 = vpop.f32.mrf.mxu0
  %v3826 = vadd.f32 0.0, %v3825
  %v3827 = vpop.f32.mrf.mxu0
  %3828 = vmatprep.mubr.f32.mxu0 0.0
  %3829 = vmatmul.mubr.f32.gmra.mxu0 %v3732
  %v3830 = vpop.f32.mrf.mxu0
  %v3831 = vadd.f32 0.0, %v3830
  %v3832 = vpop.f32.mrf.mxu0
  %3833 = vmatprep.mubr.f32.mxu0 0.0
  %3834 = vmatmul.mubr.f32.gmra.mxu0 %v3735
  %v3835 = vpop.f32.mrf.mxu0
  %v3836 = vadd.f32 0.0, %v3835
  %v3837 = vpop.f32.mrf.mxu0
  %3838 = vmatprep.mubr.f32.mxu0 0.0
  %3839 = vmatmul.mubr.f32.gmra.mxu0 %v3738
  %v3840 = vpop.f32.mrf.mxu0
  %v3841 = vadd.f32 0.0, %v3840
  %v3842 = vpop.f32.mrf.mxu0
  %3843 = vmatprep.mubr.f32.mxu0 0.0
  %3844 = vmatmul.mubr.f32.gmra.mxu0 %v3741
  %v3845 = vpop.f32.mrf.mxu0
  %v3846 = vadd.f32 0.0, %v3845
  %v3847 = vpop.f32.mrf.mxu0
  %3848 = vmatprep.mubr.f32.mxu0 0.0
  %3849 = vmatmul.mubr.f32.gmra.mxu0 %v3744
  %v3850 = vpop.f32.mrf.mxu0
  %v3851 = vadd.f32 0.0, %v3850
  %v3852 = vpop.f32.mrf.mxu0
  %3853 = vmatprep.mubr.f32.mxu0 0.0
  %3854 = vmatmul.mubr.f32.gmra.mxu0 %v3747
  %v3855 = vpop.f32.mrf.mxu0
  %v3856 = vadd.f32 0.0, %v3855
  %v3857 = vpop.f32.mrf.mxu0
  %3858 = vdwg.mxu0
  %v3860 = vsel %vm3721, %v3637, 0
  %v3863 = vsel %vm3721, %v3638, 0
  %v3866 = vsel %vm3721, %v3639, 0
  %v3869 = vsel %vm3721, %v3640, 0
  %v3872 = vsel %vm3721, %v3641, 0
  %v3875 = vsel %vm3721, %v3642, 0
  %v3878 = vsel %vm3721, %v3643, 0
  %v3881 = vsel %vm3721, %v3644, 0
  %v3884 = vsel %vm3721, %v3645, 0
  %3886 = vmatprep.subr.mxu0 0.0
  %3887 = vmatpush1.msra.mxu0 0.0
  %3888 = vmatprep.subr.mxu0 0.0
  %3889 = vmatpush1.msra.mxu0 0.0
  %3890 = vmatprep.subr.mxu0 0.0
  %3891 = vmatpush1.msra.mxu0 0.0
  %3892 = vmatprep.subr.mxu0 0.0
  %3893 = vmatpush1.msra.mxu0 %v3658
  %3894 = vmatprep.subr.mxu0 0.0
  %3895 = vmatpush1.msra.mxu0 %v3657
  %3896 = vmatprep.subr.mxu0 0.0
  %3897 = vmatpush1.msra.mxu0 %v3656
  %3898 = vmatprep.subr.mxu0 0.0
  %3899 = vmatpush1.msra.mxu0 %v3655
  %3900 = vmatprep.subr.mxu0 0.0
  %3901 = vmatpush1.msra.mxu0 %v3654
  %3902 = vmatprep.subr.mxu0 0.0
  %3903 = vmatpush1.msra.mxu0 %v3653
  %3904 = vmatprep.subr.mxu0 0.0
  %3905 = vmatpush1.msra.mxu0 %v3652
  %3906 = vmatprep.subr.mxu0 0.0
  %3907 = vmatpush1.msra.mxu0 %v3651
  %3908 = vmatprep.subr.mxu0 0.0
  %3909 = vmatpush1.msra.mxu0 %v3650
  %3910 = vmatprep.subr.mxu0 0.0
  %3911 = vmatpush1.msra.mxu0 %v3649
  %3912 = vmatprep.subr.mxu0 0.0
  %3913 = vmatpush1.msra.mxu0 %v3648
  %3914 = vmatprep.subr.mxu0 0.0
  %3915 = vmatpush1.msra.mxu0 %v3647
  %3916 = vmatprep.subr.mxu0 0.0
  %3917 = vmatpush1.msra.mxu0 %v3646
  %3918 = vmatprep.subr.mxu0 0.0
  %3919 = vmatpush2.msra.mxu0 0.0
  %3920 = vmatprep.subr.mxu0 0.0
  %3921 = vmatpush2.msra.mxu0 0.0
  %3922 = vmatprep.subr.mxu0 0.0
  %3923 = vmatpush2.msra.mxu0 0.0
  %3924 = vmatprep.subr.mxu0 0.0
  %3925 = vmatpush2.msra.mxu0 0.0
  %3926 = vmatprep.subr.mxu0 0.0
  %3927 = vmatpush2.msra.mxu0 0.0
  %3928 = vmatprep.subr.mxu0 0.0
  %3929 = vmatpush2.msra.mxu0 0.0
  %3930 = vmatprep.subr.mxu0 0.0
  %3931 = vmatpush2.msra.mxu0 0.0
  %3932 = vmatprep.subr.mxu0 0.0
  %3933 = vmatpush2.msra.mxu0 0.0
  %3934 = vmatprep.subr.mxu0 0.0
  %3935 = vmatpush2.msra.mxu0 0.0
  %3936 = vmatprep.subr.mxu0 0.0
  %3937 = vmatpush2.msra.mxu0 0.0
  %3938 = vmatprep.subr.mxu0 0.0
  %3939 = vmatpush2.msra.mxu0 0.0
  %3940 = vmatprep.subr.mxu0 0.0
  %3941 = vmatpush2.msra.mxu0 0.0
  %3942 = vmatprep.subr.mxu0 0.0
  %3943 = vmatpush2.msra.mxu0 0.0
  %3944 = vmatprep.subr.mxu0 0.0
  %3945 = vmatpush2.msra.mxu0 0.0
  %3946 = vmatprep.subr.mxu0 0.0
  %3947 = vmatpush2.msra.mxu0 0.0
  %3948 = vmatprep.subr.mxu0 0.0
  %3949 = vmatpush2.msra.mxu0 0.0
  %3950 = vmatprep.mubr.f32.mxu0 0.0
  %3951 = vmatmul.mubr.f32.gmra.mxu0 %v3860
  %v3952 = vpop.f32.mrf.mxu0
  %v3953 = vadd.f32 %v3816, %v3952
  %v3954 = vpop.f32.mrf.mxu0
  %3955 = vmatprep.mubr.f32.mxu0 0.0
  %3956 = vmatmul.mubr.f32.gmra.mxu0 %v3863
  %v3957 = vpop.f32.mrf.mxu0
  %v3958 = vadd.f32 %v3821, %v3957
  %v3959 = vpop.f32.mrf.mxu0
  %3960 = vmatprep.mubr.f32.mxu0 0.0
  %3961 = vmatmul.mubr.f32.gmra.mxu0 %v3866
  %v3962 = vpop.f32.mrf.mxu0
  %v3963 = vadd.f32 %v3826, %v3962
  %v3964 = vpop.f32.mrf.mxu0
  %3965 = vmatprep.mubr.f32.mxu0 0.0
  %3966 = vmatmul.mubr.f32.gmra.mxu0 %v3869
  %v3967 = vpop.f32.mrf.mxu0
  %v3968 = vadd.f32 %v3831, %v3967
  %v3969 = vpop.f32.mrf.mxu0
  %3970 = vmatprep.mubr.f32.mxu0 0.0
  %3971 = vmatmul.mubr.f32.gmra.mxu0 %v3872
  %v3972 = vpop.f32.mrf.mxu0
  %v3973 = vadd.f32 %v3836, %v3972
  %v3974 = vpop.f32.mrf.mxu0
  %3975 = vmatprep.mubr.f32.mxu0 0.0
  %3976 = vmatmul.mubr.f32.gmra.mxu0 %v3875
  %v3977 = vpop.f32.mrf.mxu0
  %v3978 = vadd.f32 %v3841, %v3977
  %v3979 = vpop.f32.mrf.mxu0
  %3980 = vmatprep.mubr.f32.mxu0 0.0
  %3981 = vmatmul.mubr.f32.gmra.mxu0 %v3878
  %v3982 = vpop.f32.mrf.mxu0
  %v3983 = vadd.f32 %v3846, %v3982
  %v3984 = vpop.f32.mrf.mxu0
  %3985 = vmatprep.mubr.f32.mxu0 0.0
  %3986 = vmatmul.mubr.f32.gmra.mxu0 %v3881
  %v3987 = vpop.f32.mrf.mxu0
  %v3988 = vadd.f32 %v3851, %v3987
  %v3989 = vpop.f32.mrf.mxu0
  %3990 = vmatprep.mubr.f32.mxu0 0.0
  %3991 = vmatmul.mubr.f32.gmra.mxu0 %v3884
  %v3992 = vpop.f32.mrf.mxu0
  %v3993 = vadd.f32 %v3856, %v3992
  %v3994 = vpop.f32.mrf.mxu0
  %3995 = vdwg.mxu0
  %s3996 = scalar_lea.vmem %s6, 144
  %v3997 = vld [vmem:[%s3996] sm:$0xff]
  %v3998 = vld [vmem:[%s3996 + $0x8] sm:$0xff]
  %v3999 = vld [vmem:[%s3996 + $0x10] sm:$0xff]
  %v4000 = vld [vmem:[%s3996 + $0x18] sm:$0xff]
  %v4001 = vld [vmem:[%s3996 + $0x20] sm:$0xff]
  %v4002 = vld [vmem:[%s3996 + $0x28] sm:$0xff]
  %v4003 = vld [vmem:[%s3996 + $0x30] sm:$0xff]
  %v4004 = vld [vmem:[%s3996 + $0x38] sm:$0xff]
  %v4005 = vld [vmem:[%s3996 + $0x40] sm:$0xff]
  %4006 = vrot.lane.b32.xlu0 %v3646, 126
  %v4007 = vpop.permute.xlu0 %4006
  %4008 = vrot.lane.b32.xlu0 %v3647, 126
  %v4009 = vpop.permute.xlu0 %4008
  %4010 = vrot.lane.b32.xlu0 %v3648, 126
  %v4011 = vpop.permute.xlu0 %4010
  %4012 = vrot.lane.b32.xlu0 %v3649, 126
  %v4013 = vpop.permute.xlu0 %4012
  %4014 = vrot.lane.b32.xlu0 %v3650, 126
  %v4015 = vpop.permute.xlu0 %4014
  %4016 = vrot.lane.b32.xlu0 %v3651, 126
  %v4017 = vpop.permute.xlu0 %4016
  %4018 = vrot.lane.b32.xlu0 %v3652, 126
  %v4019 = vpop.permute.xlu0 %4018
  %4020 = vrot.lane.b32.xlu0 %v3653, 126
  %v4021 = vpop.permute.xlu0 %4020
  %4022 = vrot.lane.b32.xlu0 %v3654, 126
  %v4023 = vpop.permute.xlu0 %4022
  %4024 = vrot.lane.b32.xlu0 %v3655, 126
  %v4025 = vpop.permute.xlu0 %4024
  %4026 = vrot.lane.b32.xlu0 %v3656, 126
  %v4027 = vpop.permute.xlu0 %4026
  %4028 = vrot.lane.b32.xlu0 %v3657, 126
  %v4029 = vpop.permute.xlu0 %4028
  %4030 = vrot.lane.b32.xlu0 %v3658, 126
  %v4031 = vpop.permute.xlu0 %4030
  %v4046 = vsel %vm3721, %v3997, 0
  %v4049 = vsel %vm3721, %v3998, 0
  %v4052 = vsel %vm3721, %v3999, 0
  %v4055 = vsel %vm3721, %v4000, 0
  %v4058 = vsel %vm3721, %v4001, 0
  %v4061 = vsel %vm3721, %v4002, 0
  %v4064 = vsel %vm3721, %v4003, 0
  %v4067 = vsel %vm3721, %v4004, 0
  %v4070 = vsel %vm3721, %v4005, 0
  %4072 = vmatprep.subr.mxu0 0.0
  %4073 = vmatpush1.msra.mxu0 0.0
  %4074 = vmatprep.subr.mxu0 0.0
  %4075 = vmatpush1.msra.mxu0 0.0
  %4076 = vmatprep.subr.mxu0 0.0
  %4077 = vmatpush1.msra.mxu0 0.0
  %4078 = vmatprep.subr.mxu0 0.0
  %4079 = vmatpush1.msra.mxu0 %v4031
  %4080 = vmatprep.subr.mxu0 0.0
  %4081 = vmatpush1.msra.mxu0 %v4029
  %4082 = vmatprep.subr.mxu0 0.0
  %4083 = vmatpush1.msra.mxu0 %v4027
  %4084 = vmatprep.subr.mxu0 0.0
  %4085 = vmatpush1.msra.mxu0 %v4025
  %4086 = vmatprep.subr.mxu0 0.0
  %4087 = vmatpush1.msra.mxu0 %v4023
  %4088 = vmatprep.subr.mxu0 0.0
  %4089 = vmatpush1.msra.mxu0 %v4021
  %4090 = vmatprep.subr.mxu0 0.0
  %4091 = vmatpush1.msra.mxu0 %v4019
  %4092 = vmatprep.subr.mxu0 0.0
  %4093 = vmatpush1.msra.mxu0 %v4017
  %4094 = vmatprep.subr.mxu0 0.0
  %4095 = vmatpush1.msra.mxu0 %v4015
  %4096 = vmatprep.subr.mxu0 0.0
  %4097 = vmatpush1.msra.mxu0 %v4013
  %4098 = vmatprep.subr.mxu0 0.0
  %4099 = vmatpush1.msra.mxu0 %v4011
  %4100 = vmatprep.subr.mxu0 0.0
  %4101 = vmatpush1.msra.mxu0 %v4009
  %4102 = vmatprep.subr.mxu0 0.0
  %4103 = vmatpush1.msra.mxu0 %v4007
  %4104 = vmatprep.subr.mxu0 0.0
  %4105 = vmatpush2.msra.mxu0 0.0
  %4106 = vmatprep.subr.mxu0 0.0
  %4107 = vmatpush2.msra.mxu0 0.0
  %4108 = vmatprep.subr.mxu0 0.0
  %4109 = vmatpush2.msra.mxu0 0.0
  %4110 = vmatprep.subr.mxu0 0.0
  %4111 = vmatpush2.msra.mxu0 0.0
  %4112 = vmatprep.subr.mxu0 0.0
  %4113 = vmatpush2.msra.mxu0 0.0
  %4114 = vmatprep.subr.mxu0 0.0
  %4115 = vmatpush2.msra.mxu0 0.0
  %4116 = vmatprep.subr.mxu0 0.0
  %4117 = vmatpush2.msra.mxu0 0.0
  %4118 = vmatprep.subr.mxu0 0.0
  %4119 = vmatpush2.msra.mxu0 0.0
  %4120 = vmatprep.subr.mxu0 0.0
  %4121 = vmatpush2.msra.mxu0 0.0
  %4122 = vmatprep.subr.mxu0 0.0
  %4123 = vmatpush2.msra.mxu0 0.0
  %4124 = vmatprep.subr.mxu0 0.0
  %4125 = vmatpush2.msra.mxu0 0.0
  %4126 = vmatprep.subr.mxu0 0.0
  %4127 = vmatpush2.msra.mxu0 0.0
  %4128 = vmatprep.subr.mxu0 0.0
  %4129 = vmatpush2.msra.mxu0 0.0
  %4130 = vmatprep.subr.mxu0 0.0
  %4131 = vmatpush2.msra.mxu0 0.0
  %4132 = vmatprep.subr.mxu0 0.0
  %4133 = vmatpush2.msra.mxu0 0.0
  %4134 = vmatprep.subr.mxu0 0.0
  %4135 = vmatpush2.msra.mxu0 0.0
  %4136 = vmatprep.mubr.f32.mxu0 0.0
  %4137 = vmatmul.mubr.f32.gmra.mxu0 %v4046
  %v4138 = vpop.f32.mrf.mxu0
  %v4139 = vadd.f32 0.0, %v4138
  %v4140 = vpop.f32.mrf.mxu0
  %4141 = vmatprep.mubr.f32.mxu0 0.0
  %4142 = vmatmul.mubr.f32.gmra.mxu0 %v4049
  %v4143 = vpop.f32.mrf.mxu0
  %v4144 = vadd.f32 0.0, %v4143
  %v4145 = vpop.f32.mrf.mxu0
  %4146 = vmatprep.mubr.f32.mxu0 0.0
  %4147 = vmatmul.mubr.f32.gmra.mxu0 %v4052
  %v4148 = vpop.f32.mrf.mxu0
  %v4149 = vadd.f32 0.0, %v4148
  %v4150 = vpop.f32.mrf.mxu0
  %4151 = vmatprep.mubr.f32.mxu0 0.0
  %4152 = vmatmul.mubr.f32.gmra.mxu0 %v4055
  %v4153 = vpop.f32.mrf.mxu0
  %v4154 = vadd.f32 0.0, %v4153
  %v4155 = vpop.f32.mrf.mxu0
  %4156 = vmatprep.mubr.f32.mxu0 0.0
  %4157 = vmatmul.mubr.f32.gmra.mxu0 %v4058
  %v4158 = vpop.f32.mrf.mxu0
  %v4159 = vadd.f32 0.0, %v4158
  %v4160 = vpop.f32.mrf.mxu0
  %4161 = vmatprep.mubr.f32.mxu0 0.0
  %4162 = vmatmul.mubr.f32.gmra.mxu0 %v4061
  %v4163 = vpop.f32.mrf.mxu0
  %v4164 = vadd.f32 0.0, %v4163
  %v4165 = vpop.f32.mrf.mxu0
  %4166 = vmatprep.mubr.f32.mxu0 0.0
  %4167 = vmatmul.mubr.f32.gmra.mxu0 %v4064
  %v4168 = vpop.f32.mrf.mxu0
  %v4169 = vadd.f32 0.0, %v4168
  %v4170 = vpop.f32.mrf.mxu0
  %4171 = vmatprep.mubr.f32.mxu0 0.0
  %4172 = vmatmul.mubr.f32.gmra.mxu0 %v4067
  %v4173 = vpop.f32.mrf.mxu0
  %v4174 = vadd.f32 0.0, %v4173
  %v4175 = vpop.f32.mrf.mxu0
  %4176 = vmatprep.mubr.f32.mxu0 0.0
  %4177 = vmatmul.mubr.f32.gmra.mxu0 %v4070
  %v4178 = vpop.f32.mrf.mxu0
  %v4179 = vadd.f32 0.0, %v4178
  %v4180 = vpop.f32.mrf.mxu0
  %4181 = vdwg.mxu0
  %v4182 = vadd.f32 %v3953, %v4139
  %v4183 = vadd.f32 %v3958, %v4144
  %v4184 = vadd.f32 %v3963, %v4149
  %v4185 = vadd.f32 %v3968, %v4154
  %v4186 = vadd.f32 %v3973, %v4159
  %v4187 = vadd.f32 %v3978, %v4164
  %v4188 = vadd.f32 %v3983, %v4169
  %v4189 = vadd.f32 %v3988, %v4174
  %v4190 = vadd.f32 %v3993, %v4179
  %s4191 = scalar_lea.vmem %s6, 216
  %v4192 = vld [vmem:[%s4191] sm:$0xff]
  %v4193 = vld [vmem:[%s4191 + $0x8] sm:$0xff]
  %v4194 = vld [vmem:[%s4191 + $0x10] sm:$0xff]
  %v4195 = vld [vmem:[%s4191 + $0x18] sm:$0xff]
  %v4196 = vld [vmem:[%s4191 + $0x20] sm:$0xff]
  %v4197 = vld [vmem:[%s4191 + $0x28] sm:$0xff]
  %v4198 = vld [vmem:[%s4191 + $0x30] sm:$0xff]
  %v4199 = vld [vmem:[%s4191 + $0x38] sm:$0xff]
  %v4200 = vld [vmem:[%s4191 + $0x40] sm:$0xff]
  %4201 = vrot.lane.b32.xlu0 %v3646, 125
  %v4202 = vpop.permute.xlu0 %4201
  %4203 = vrot.lane.b32.xlu0 %v3647, 125
  %v4204 = vpop.permute.xlu0 %4203
  %4205 = vrot.lane.b32.xlu0 %v3648, 125
  %v4206 = vpop.permute.xlu0 %4205
  %4207 = vrot.lane.b32.xlu0 %v3649, 125
  %v4208 = vpop.permute.xlu0 %4207
  %4209 = vrot.lane.b32.xlu0 %v3650, 125
  %v4210 = vpop.permute.xlu0 %4209
  %4211 = vrot.lane.b32.xlu0 %v3651, 125
  %v4212 = vpop.permute.xlu0 %4211
  %4213 = vrot.lane.b32.xlu0 %v3652, 125
  %v4214 = vpop.permute.xlu0 %4213
  %4215 = vrot.lane.b32.xlu0 %v3653, 125
  %v4216 = vpop.permute.xlu0 %4215
  %4217 = vrot.lane.b32.xlu0 %v3654, 125
  %v4218 = vpop.permute.xlu0 %4217
  %4219 = vrot.lane.b32.xlu0 %v3655, 125
  %v4220 = vpop.permute.xlu0 %4219
  %4221 = vrot.lane.b32.xlu0 %v3656, 125
  %v4222 = vpop.permute.xlu0 %4221
  %4223 = vrot.lane.b32.xlu0 %v3657, 125
  %v4224 = vpop.permute.xlu0 %4223
  %4225 = vrot.lane.b32.xlu0 %v3658, 125
  %v4226 = vpop.permute.xlu0 %4225
  %v4241 = vsel %vm3721, %v4192, 0
  %v4244 = vsel %vm3721, %v4193, 0
  %v4247 = vsel %vm3721, %v4194, 0
  %v4250 = vsel %vm3721, %v4195, 0
  %v4253 = vsel %vm3721, %v4196, 0
  %v4256 = vsel %vm3721, %v4197, 0
  %v4259 = vsel %vm3721, %v4198, 0
  %v4262 = vsel %vm3721, %v4199, 0
  %v4265 = vsel %vm3721, %v4200, 0
  %4267 = vmatprep.subr.mxu0 0.0
  %4268 = vmatpush1.msra.mxu0 0.0
  %4269 = vmatprep.subr.mxu0 0.0
  %4270 = vmatpush1.msra.mxu0 0.0
  %4271 = vmatprep.subr.mxu0 0.0
  %4272 = vmatpush1.msra.mxu0 0.0
  %4273 = vmatprep.subr.mxu0 0.0
  %4274 = vmatpush1.msra.mxu0 %v4226
  %4275 = vmatprep.subr.mxu0 0.0
  %4276 = vmatpush1.msra.mxu0 %v4224
  %4277 = vmatprep.subr.mxu0 0.0
  %4278 = vmatpush1.msra.mxu0 %v4222
  %4279 = vmatprep.subr.mxu0 0.0
  %4280 = vmatpush1.msra.mxu0 %v4220
  %4281 = vmatprep.subr.mxu0 0.0
  %4282 = vmatpush1.msra.mxu0 %v4218
  %4283 = vmatprep.subr.mxu0 0.0
  %4284 = vmatpush1.msra.mxu0 %v4216
  %4285 = vmatprep.subr.mxu0 0.0
  %4286 = vmatpush1.msra.mxu0 %v4214
  %4287 = vmatprep.subr.mxu0 0.0
  %4288 = vmatpush1.msra.mxu0 %v4212
  %4289 = vmatprep.subr.mxu0 0.0
  %4290 = vmatpush1.msra.mxu0 %v4210
  %4291 = vmatprep.subr.mxu0 0.0
  %4292 = vmatpush1.msra.mxu0 %v4208
  %4293 = vmatprep.subr.mxu0 0.0
  %4294 = vmatpush1.msra.mxu0 %v4206
  %4295 = vmatprep.subr.mxu0 0.0
  %4296 = vmatpush1.msra.mxu0 %v4204
  %4297 = vmatprep.subr.mxu0 0.0
  %4298 = vmatpush1.msra.mxu0 %v4202
  %4299 = vmatprep.subr.mxu0 0.0
  %4300 = vmatpush2.msra.mxu0 0.0
  %4301 = vmatprep.subr.mxu0 0.0
  %4302 = vmatpush2.msra.mxu0 0.0
  %4303 = vmatprep.subr.mxu0 0.0
  %4304 = vmatpush2.msra.mxu0 0.0
  %4305 = vmatprep.subr.mxu0 0.0
  %4306 = vmatpush2.msra.mxu0 0.0
  %4307 = vmatprep.subr.mxu0 0.0
  %4308 = vmatpush2.msra.mxu0 0.0
  %4309 = vmatprep.subr.mxu0 0.0
  %4310 = vmatpush2.msra.mxu0 0.0
  %4311 = vmatprep.subr.mxu0 0.0
  %4312 = vmatpush2.msra.mxu0 0.0
  %4313 = vmatprep.subr.mxu0 0.0
  %4314 = vmatpush2.msra.mxu0 0.0
  %4315 = vmatprep.subr.mxu0 0.0
  %4316 = vmatpush2.msra.mxu0 0.0
  %4317 = vmatprep.subr.mxu0 0.0
  %4318 = vmatpush2.msra.mxu0 0.0
  %4319 = vmatprep.subr.mxu0 0.0
  %4320 = vmatpush2.msra.mxu0 0.0
  %4321 = vmatprep.subr.mxu0 0.0
  %4322 = vmatpush2.msra.mxu0 0.0
  %4323 = vmatprep.subr.mxu0 0.0
  %4324 = vmatpush2.msra.mxu0 0.0
  %4325 = vmatprep.subr.mxu0 0.0
  %4326 = vmatpush2.msra.mxu0 0.0
  %4327 = vmatprep.subr.mxu0 0.0
  %4328 = vmatpush2.msra.mxu0 0.0
  %4329 = vmatprep.subr.mxu0 0.0
  %4330 = vmatpush2.msra.mxu0 0.0
  %4331 = vmatprep.mubr.f32.mxu0 0.0
  %4332 = vmatmul.mubr.f32.gmra.mxu0 %v4241
  %v4333 = vpop.f32.mrf.mxu0
  %v4334 = vadd.f32 0.0, %v4333
  %v4335 = vpop.f32.mrf.mxu0
  %4336 = vmatprep.mubr.f32.mxu0 0.0
  %4337 = vmatmul.mubr.f32.gmra.mxu0 %v4244
  %v4338 = vpop.f32.mrf.mxu0
  %v4339 = vadd.f32 0.0, %v4338
  %v4340 = vpop.f32.mrf.mxu0
  %4341 = vmatprep.mubr.f32.mxu0 0.0
  %4342 = vmatmul.mubr.f32.gmra.mxu0 %v4247
  %v4343 = vpop.f32.mrf.mxu0
  %v4344 = vadd.f32 0.0, %v4343
  %v4345 = vpop.f32.mrf.mxu0
  %4346 = vmatprep.mubr.f32.mxu0 0.0
  %4347 = vmatmul.mubr.f32.gmra.mxu0 %v4250
  %v4348 = vpop.f32.mrf.mxu0
  %v4349 = vadd.f32 0.0, %v4348
  %v4350 = vpop.f32.mrf.mxu0
  %4351 = vmatprep.mubr.f32.mxu0 0.0
  %4352 = vmatmul.mubr.f32.gmra.mxu0 %v4253
  %v4353 = vpop.f32.mrf.mxu0
  %v4354 = vadd.f32 0.0, %v4353
  %v4355 = vpop.f32.mrf.mxu0
  %4356 = vmatprep.mubr.f32.mxu0 0.0
  %4357 = vmatmul.mubr.f32.gmra.mxu0 %v4256
  %v4358 = vpop.f32.mrf.mxu0
  %v4359 = vadd.f32 0.0, %v4358
  %v4360 = vpop.f32.mrf.mxu0
  %4361 = vmatprep.mubr.f32.mxu0 0.0
  %4362 = vmatmul.mubr.f32.gmra.mxu0 %v4259
  %v4363 = vpop.f32.mrf.mxu0
  %v4364 = vadd.f32 0.0, %v4363
  %v4365 = vpop.f32.mrf.mxu0
  %4366 = vmatprep.mubr.f32.mxu0 0.0
  %4367 = vmatmul.mubr.f32.gmra.mxu0 %v4262
  %v4368 = vpop.f32.mrf.mxu0
  %v4369 = vadd.f32 0.0, %v4368
  %v4370 = vpop.f32.mrf.mxu0
  %4371 = vmatprep.mubr.f32.mxu0 0.0
  %4372 = vmatmul.mubr.f32.gmra.mxu0 %v4265
  %v4373 = vpop.f32.mrf.mxu0
  %v4374 = vadd.f32 0.0, %v4373
  %v4375 = vpop.f32.mrf.mxu0
  %4376 = vdwg.mxu0
  %v4377 = vadd.f32 %v4182, %v4334
  %v4378 = vadd.f32 %v4183, %v4339
  %v4379 = vadd.f32 %v4184, %v4344
  %v4380 = vadd.f32 %v4185, %v4349
  %v4381 = vadd.f32 %v4186, %v4354
  %v4382 = vadd.f32 %v4187, %v4359
  %v4383 = vadd.f32 %v4188, %v4364
  %v4384 = vadd.f32 %v4189, %v4369
  %v4385 = vadd.f32 %v4190, %v4374
  %s4386 = scalar_lea.vmem %s6, 288
  %v4387 = vld [vmem:[%s4386] sm:$0xff]
  %v4388 = vld [vmem:[%s4386 + $0x8] sm:$0xff]
  %v4389 = vld [vmem:[%s4386 + $0x10] sm:$0xff]
  %v4390 = vld [vmem:[%s4386 + $0x18] sm:$0xff]
  %v4391 = vld [vmem:[%s4386 + $0x20] sm:$0xff]
  %v4392 = vld [vmem:[%s4386 + $0x28] sm:$0xff]
  %v4393 = vld [vmem:[%s4386 + $0x30] sm:$0xff]
  %v4394 = vld [vmem:[%s4386 + $0x38] sm:$0xff]
  %v4395 = vld [vmem:[%s4386 + $0x40] sm:$0xff]
  %4396 = vrot.lane.b32.xlu0 %v3646, 124
  %v4397 = vpop.permute.xlu0 %4396
  %4398 = vrot.lane.b32.xlu0 %v3647, 124
  %v4399 = vpop.permute.xlu0 %4398
  %4400 = vrot.lane.b32.xlu0 %v3648, 124
  %v4401 = vpop.permute.xlu0 %4400
  %4402 = vrot.lane.b32.xlu0 %v3649, 124
  %v4403 = vpop.permute.xlu0 %4402
  %4404 = vrot.lane.b32.xlu0 %v3650, 124
  %v4405 = vpop.permute.xlu0 %4404
  %4406 = vrot.lane.b32.xlu0 %v3651, 124
  %v4407 = vpop.permute.xlu0 %4406
  %4408 = vrot.lane.b32.xlu0 %v3652, 124
  %v4409 = vpop.permute.xlu0 %4408
  %4410 = vrot.lane.b32.xlu0 %v3653, 124
  %v4411 = vpop.permute.xlu0 %4410
  %4412 = vrot.lane.b32.xlu0 %v3654, 124
  %v4413 = vpop.permute.xlu0 %4412
  %4414 = vrot.lane.b32.xlu0 %v3655, 124
  %v4415 = vpop.permute.xlu0 %4414
  %4416 = vrot.lane.b32.xlu0 %v3656, 124
  %v4417 = vpop.permute.xlu0 %4416
  %4418 = vrot.lane.b32.xlu0 %v3657, 124
  %v4419 = vpop.permute.xlu0 %4418
  %4420 = vrot.lane.b32.xlu0 %v3658, 124
  %v4421 = vpop.permute.xlu0 %4420
  %v4436 = vsel %vm3721, %v4387, 0
  %v4439 = vsel %vm3721, %v4388, 0
  %v4442 = vsel %vm3721, %v4389, 0
  %v4445 = vsel %vm3721, %v4390, 0
  %v4448 = vsel %vm3721, %v4391, 0
  %v4451 = vsel %vm3721, %v4392, 0
  %v4454 = vsel %vm3721, %v4393, 0
  %v4457 = vsel %vm3721, %v4394, 0
  %v4460 = vsel %vm3721, %v4395, 0
  %4462 = vmatprep.subr.mxu0 0.0
  %4463 = vmatpush1.msra.mxu0 0.0
  %4464 = vmatprep.subr.mxu0 0.0
  %4465 = vmatpush1.msra.mxu0 0.0
  %4466 = vmatprep.subr.mxu0 0.0
  %4467 = vmatpush1.msra.mxu0 0.0
  %4468 = vmatprep.subr.mxu0 0.0
  %4469 = vmatpush1.msra.mxu0 %v4421
  %4470 = vmatprep.subr.mxu0 0.0
  %4471 = vmatpush1.msra.mxu0 %v4419
  %4472 = vmatprep.subr.mxu0 0.0
  %4473 = vmatpush1.msra.mxu0 %v4417
  %4474 = vmatprep.subr.mxu0 0.0
  %4475 = vmatpush1.msra.mxu0 %v4415
  %4476 = vmatprep.subr.mxu0 0.0
  %4477 = vmatpush1.msra.mxu0 %v4413
  %4478 = vmatprep.subr.mxu0 0.0
  %4479 = vmatpush1.msra.mxu0 %v4411
  %4480 = vmatprep.subr.mxu0 0.0
  %4481 = vmatpush1.msra.mxu0 %v4409
  %4482 = vmatprep.subr.mxu0 0.0
  %4483 = vmatpush1.msra.mxu0 %v4407
  %4484 = vmatprep.subr.mxu0 0.0
  %4485 = vmatpush1.msra.mxu0 %v4405
  %4486 = vmatprep.subr.mxu0 0.0
  %4487 = vmatpush1.msra.mxu0 %v4403
  %4488 = vmatprep.subr.mxu0 0.0
  %4489 = vmatpush1.msra.mxu0 %v4401
  %4490 = vmatprep.subr.mxu0 0.0
  %4491 = vmatpush1.msra.mxu0 %v4399
  %4492 = vmatprep.subr.mxu0 0.0
  %4493 = vmatpush1.msra.mxu0 %v4397
  %4494 = vmatprep.subr.mxu0 0.0
  %4495 = vmatpush2.msra.mxu0 0.0
  %4496 = vmatprep.subr.mxu0 0.0
  %4497 = vmatpush2.msra.mxu0 0.0
  %4498 = vmatprep.subr.mxu0 0.0
  %4499 = vmatpush2.msra.mxu0 0.0
  %4500 = vmatprep.subr.mxu0 0.0
  %4501 = vmatpush2.msra.mxu0 0.0
  %4502 = vmatprep.subr.mxu0 0.0
  %4503 = vmatpush2.msra.mxu0 0.0
  %4504 = vmatprep.subr.mxu0 0.0
  %4505 = vmatpush2.msra.mxu0 0.0
  %4506 = vmatprep.subr.mxu0 0.0
  %4507 = vmatpush2.msra.mxu0 0.0
  %4508 = vmatprep.subr.mxu0 0.0
  %4509 = vmatpush2.msra.mxu0 0.0
  %4510 = vmatprep.subr.mxu0 0.0
  %4511 = vmatpush2.msra.mxu0 0.0
  %4512 = vmatprep.subr.mxu0 0.0
  %4513 = vmatpush2.msra.mxu0 0.0
  %4514 = vmatprep.subr.mxu0 0.0
  %4515 = vmatpush2.msra.mxu0 0.0
  %4516 = vmatprep.subr.mxu0 0.0
  %4517 = vmatpush2.msra.mxu0 0.0
  %4518 = vmatprep.subr.mxu0 0.0
  %4519 = vmatpush2.msra.mxu0 0.0
  %4520 = vmatprep.subr.mxu0 0.0
  %4521 = vmatpush2.msra.mxu0 0.0
  %4522 = vmatprep.subr.mxu0 0.0
  %4523 = vmatpush2.msra.mxu0 0.0
  %4524 = vmatprep.subr.mxu0 0.0
  %4525 = vmatpush2.msra.mxu0 0.0
  %4526 = vmatprep.mubr.f32.mxu0 0.0
  %4527 = vmatmul.mubr.f32.gmra.mxu0 %v4436
  %v4528 = vpop.f32.mrf.mxu0
  %v4529 = vadd.f32 0.0, %v4528
  %v4530 = vpop.f32.mrf.mxu0
  %4531 = vmatprep.mubr.f32.mxu0 0.0
  %4532 = vmatmul.mubr.f32.gmra.mxu0 %v4439
  %v4533 = vpop.f32.mrf.mxu0
  %v4534 = vadd.f32 0.0, %v4533
  %v4535 = vpop.f32.mrf.mxu0
  %4536 = vmatprep.mubr.f32.mxu0 0.0
  %4537 = vmatmul.mubr.f32.gmra.mxu0 %v4442
  %v4538 = vpop.f32.mrf.mxu0
  %v4539 = vadd.f32 0.0, %v4538
  %v4540 = vpop.f32.mrf.mxu0
  %4541 = vmatprep.mubr.f32.mxu0 0.0
  %4542 = vmatmul.mubr.f32.gmra.mxu0 %v4445
  %v4543 = vpop.f32.mrf.mxu0
  %v4544 = vadd.f32 0.0, %v4543
  %v4545 = vpop.f32.mrf.mxu0
  %4546 = vmatprep.mubr.f32.mxu0 0.0
  %4547 = vmatmul.mubr.f32.gmra.mxu0 %v4448
  %v4548 = vpop.f32.mrf.mxu0
  %v4549 = vadd.f32 0.0, %v4548
  %v4550 = vpop.f32.mrf.mxu0
  %4551 = vmatprep.mubr.f32.mxu0 0.0
  %4552 = vmatmul.mubr.f32.gmra.mxu0 %v4451
  %v4553 = vpop.f32.mrf.mxu0
  %v4554 = vadd.f32 0.0, %v4553
  %v4555 = vpop.f32.mrf.mxu0
  %4556 = vmatprep.mubr.f32.mxu0 0.0
  %4557 = vmatmul.mubr.f32.gmra.mxu0 %v4454
  %v4558 = vpop.f32.mrf.mxu0
  %v4559 = vadd.f32 0.0, %v4558
  %v4560 = vpop.f32.mrf.mxu0
  %4561 = vmatprep.mubr.f32.mxu0 0.0
  %4562 = vmatmul.mubr.f32.gmra.mxu0 %v4457
  %v4563 = vpop.f32.mrf.mxu0
  %v4564 = vadd.f32 0.0, %v4563
  %v4565 = vpop.f32.mrf.mxu0
  %4566 = vmatprep.mubr.f32.mxu0 0.0
  %4567 = vmatmul.mubr.f32.gmra.mxu0 %v4460
  %v4568 = vpop.f32.mrf.mxu0
  %v4569 = vadd.f32 0.0, %v4568
  %v4570 = vpop.f32.mrf.mxu0
  %4571 = vdwg.mxu0
  %v4572 = vadd.f32 %v4377, %v4529
  %v4573 = vadd.f32 %v4378, %v4534
  %v4574 = vadd.f32 %v4379, %v4539
  %v4575 = vadd.f32 %v4380, %v4544
  %v4576 = vadd.f32 %v4381, %v4549
  %v4577 = vadd.f32 %v4382, %v4554
  %v4578 = vadd.f32 %v4383, %v4559
  %v4579 = vadd.f32 %v4384, %v4564
  %v4580 = vadd.f32 %v4385, %v4569
  %v4581 = vld [vmem:[%s7] sm:$0xff]
  %v4582 = vld [vmem:[%s7 + $0x8] sm:$0xff]
  %v4583 = vld [vmem:[%s7 + $0x10] sm:$0xff]
  %v4584 = vld [vmem:[%s7 + $0x18] sm:$0xff]
  %v4585 = vld [vmem:[%s7 + $0x20] sm:$0xff]
  %v4586 = vld [vmem:[%s7 + $0x28] sm:$0xff]
  %v4587 = vld [vmem:[%s7 + $0x30] sm:$0xff]
  %v4588 = vld [vmem:[%s7 + $0x38] sm:$0xff]
  %v4589 = vld [vmem:[%s7 + $0x40] sm:$0xff]
  %4591 = vset.pattern.permute.xlu0 0
  %4592 = vperm.xlu0 %4591, %v4581
  %v4593 = vpop.permute.xlu0 %4592
  %4596 = vset.pattern.permute.xlu0 0
  %4597 = vperm.xlu0 %4596, %v4582
  %v4598 = vpop.permute.xlu0 %4597
  %4601 = vset.pattern.permute.xlu0 0
  %4602 = vperm.xlu0 %4601, %v4583
  %v4603 = vpop.permute.xlu0 %4602
  %4606 = vset.pattern.permute.xlu0 0
  %4607 = vperm.xlu0 %4606, %v4584
  %v4608 = vpop.permute.xlu0 %4607
  %4611 = vset.pattern.permute.xlu0 0
  %4612 = vperm.xlu0 %4611, %v4585
  %v4613 = vpop.permute.xlu0 %4612
  %4616 = vset.pattern.permute.xlu0 0
  %4617 = vperm.xlu0 %4616, %v4586
  %v4618 = vpop.permute.xlu0 %4617
  %4621 = vset.pattern.permute.xlu0 0
  %4622 = vperm.xlu0 %4621, %v4587
  %v4623 = vpop.permute.xlu0 %4622
  %4626 = vset.pattern.permute.xlu0 0
  %4627 = vperm.xlu0 %4626, %v4588
  %v4628 = vpop.permute.xlu0 %4627
  %4631 = vset.pattern.permute.xlu0 0
  %4632 = vperm.xlu0 %4631, %v4589
  %v4633 = vpop.permute.xlu0 %4632
  %v4635 = vadd.f32 %v4572, %v4593
  %v4636 = vadd.f32 %v4573, %v4598
  %v4637 = vadd.f32 %v4574, %v4603
  %v4638 = vadd.f32 %v4575, %v4608
  %v4639 = vadd.f32 %v4576, %v4613
  %v4640 = vadd.f32 %v4577, %v4618
  %v4641 = vadd.f32 %v4578, %v4623
  %v4642 = vadd.f32 %v4579, %v4628
  %v4643 = vadd.f32 %v4580, %v4633
  %vm4644 = vcmask 72704
  %4645 = vst.msk [vmem:[#allocation5] sm:$0xff] %vm4644, %v4635
  %4646 = vst.msk [vmem:[#allocation5 + $0x8] sm:$0xff] %vm4644, %v4636
  %4647 = vst.msk [vmem:[#allocation5 + $0x10] sm:$0xff] %vm4644, %v4637
  %4648 = vst.msk [vmem:[#allocation5 + $0x18] sm:$0xff] %vm4644, %v4638
  %4649 = vst.msk [vmem:[#allocation5 + $0x20] sm:$0xff] %vm4644, %v4639
  %4650 = vst.msk [vmem:[#allocation5 + $0x28] sm:$0xff] %vm4644, %v4640
  %4651 = vst.msk [vmem:[#allocation5 + $0x30] sm:$0xff] %vm4644, %v4641
  %4652 = vst.msk [vmem:[#allocation5 + $0x38] sm:$0xff] %vm4644, %v4642
  %4653 = vst.msk [vmem:[#allocation5 + $0x40] sm:$0xff] %vm4644, %v4643
  %v4654 = vld [vmem:[%s8] sm:$0xff]
  %v4655 = vld [vmem:[%s8 + $0x8] sm:$0xff]
  %v4656 = vld [vmem:[%s8 + $0x10] sm:$0xff]
  %v4657 = vld [vmem:[%s8 + $0x18] sm:$0xff]
  %v4658 = vld [vmem:[%s8 + $0x20] sm:$0xff]
  %v4659 = vld [vmem:[#allocation5] sm:$0xff]
  %v4660 = vld [vmem:[#allocation5 + $0x8] sm:$0xff]
  %v4661 = vld [vmem:[#allocation5 + $0x10] sm:$0xff]
  %v4662 = vld [vmem:[#allocation5 + $0x18] sm:$0xff]
  %v4663 = vld [vmem:[#allocation5 + $0x20] sm:$0xff]
  %v4664 = vld [vmem:[#allocation5 + $0x28] sm:$0xff]
  %v4665 = vld [vmem:[#allocation5 + $0x30] sm:$0xff]
  %v4666 = vld [vmem:[#allocation5 + $0x38] sm:$0xff]
  %v4667 = vld [vmem:[#allocation5 + $0x40] sm:$0xff]
  %s4668 = scalar_lea.vmem %s8, 40
  %v4669 = vld [vmem:[%s4668] sm:$0xff]
  %v4670 = vld [vmem:[%s4668 + $0x8] sm:$0xff]
  %v4671 = vld [vmem:[%s4668 + $0x10] sm:$0xff]
  %v4672 = vld [vmem:[%s4668 + $0x18] sm:$0xff]
  %v4673 = vld [vmem:[%s4668 + $0x20] sm:$0xff]
  %4683 = vrot.lane.b32.xlu0 %v4659, 127
  %v4684 = vpop.permute.xlu0 %4683
  %4685 = vrot.lane.b32.xlu0 %v4660, 127
  %v4686 = vpop.permute.xlu0 %4685
  %4687 = vrot.lane.b32.xlu0 %v4661, 127
  %v4688 = vpop.permute.xlu0 %4687
  %4689 = vrot.lane.b32.xlu0 %v4662, 127
  %v4690 = vpop.permute.xlu0 %4689
  %4691 = vrot.lane.b32.xlu0 %v4663, 127
  %v4692 = vpop.permute.xlu0 %4691
  %4693 = vrot.lane.b32.xlu0 %v4664, 127
  %v4694 = vpop.permute.xlu0 %4693
  %4695 = vrot.lane.b32.xlu0 %v4665, 127
  %v4696 = vpop.permute.xlu0 %4695
  %4697 = vrot.lane.b32.xlu0 %v4666, 127
  %v4698 = vpop.permute.xlu0 %4697
  %4699 = vrot.lane.b32.xlu0 %v4667, 127
  %v4700 = vpop.permute.xlu0 %4699
  %v4711 = vsel %vm91, %v4669, 0
  %v4714 = vsel %vm91, %v4670, 0
  %v4717 = vsel %vm91, %v4671, 0
  %v4720 = vsel %vm91, %v4672, 0
  %v4723 = vsel %vm91, %v4673, 0
  %4725 = vmatprep.subr.mxu0 0.0
  %4726 = vmatpush1.msra.mxu0 0.0
  %4727 = vmatprep.subr.mxu0 0.0
  %4728 = vmatpush1.msra.mxu0 0.0
  %4729 = vmatprep.subr.mxu0 0.0
  %4730 = vmatpush1.msra.mxu0 0.0
  %4731 = vmatprep.subr.mxu0 0.0
  %4732 = vmatpush1.msra.mxu0 0.0
  %4733 = vmatprep.subr.mxu0 0.0
  %4734 = vmatpush1.msra.mxu0 0.0
  %4735 = vmatprep.subr.mxu0 0.0
  %4736 = vmatpush1.msra.mxu0 0.0
  %4737 = vmatprep.subr.mxu0 0.0
  %4738 = vmatpush1.msra.mxu0 0.0
  %4739 = vmatprep.subr.mxu0 0.0
  %4740 = vmatpush1.msra.mxu0 %v4700
  %4741 = vmatprep.subr.mxu0 0.0
  %4742 = vmatpush1.msra.mxu0 %v4698
  %4743 = vmatprep.subr.mxu0 0.0
  %4744 = vmatpush1.msra.mxu0 %v4696
  %4745 = vmatprep.subr.mxu0 0.0
  %4746 = vmatpush1.msra.mxu0 %v4694
  %4747 = vmatprep.subr.mxu0 0.0
  %4748 = vmatpush1.msra.mxu0 %v4692
  %4749 = vmatprep.subr.mxu0 0.0
  %4750 = vmatpush1.msra.mxu0 %v4690
  %4751 = vmatprep.subr.mxu0 0.0
  %4752 = vmatpush1.msra.mxu0 %v4688
  %4753 = vmatprep.subr.mxu0 0.0
  %4754 = vmatpush1.msra.mxu0 %v4686
  %4755 = vmatprep.subr.mxu0 0.0
  %4756 = vmatpush1.msra.mxu0 %v4684
  %4757 = vmatprep.subr.mxu0 0.0
  %4758 = vmatpush2.msra.mxu0 0.0
  %4759 = vmatprep.subr.mxu0 0.0
  %4760 = vmatpush2.msra.mxu0 0.0
  %4761 = vmatprep.subr.mxu0 0.0
  %4762 = vmatpush2.msra.mxu0 0.0
  %4763 = vmatprep.subr.mxu0 0.0
  %4764 = vmatpush2.msra.mxu0 0.0
  %4765 = vmatprep.subr.mxu0 0.0
  %4766 = vmatpush2.msra.mxu0 0.0
  %4767 = vmatprep.subr.mxu0 0.0
  %4768 = vmatpush2.msra.mxu0 0.0
  %4769 = vmatprep.subr.mxu0 0.0
  %4770 = vmatpush2.msra.mxu0 0.0
  %4771 = vmatprep.subr.mxu0 0.0
  %4772 = vmatpush2.msra.mxu0 0.0
  %4773 = vmatprep.subr.mxu0 0.0
  %4774 = vmatpush2.msra.mxu0 0.0
  %4775 = vmatprep.subr.mxu0 0.0
  %4776 = vmatpush2.msra.mxu0 0.0
  %4777 = vmatprep.subr.mxu0 0.0
  %4778 = vmatpush2.msra.mxu0 0.0
  %4779 = vmatprep.subr.mxu0 0.0
  %4780 = vmatpush2.msra.mxu0 0.0
  %4781 = vmatprep.subr.mxu0 0.0
  %4782 = vmatpush2.msra.mxu0 0.0
  %4783 = vmatprep.subr.mxu0 0.0
  %4784 = vmatpush2.msra.mxu0 0.0
  %4785 = vmatprep.subr.mxu0 0.0
  %4786 = vmatpush2.msra.mxu0 0.0
  %4787 = vmatprep.subr.mxu0 0.0
  %4788 = vmatpush2.msra.mxu0 0.0
  %4789 = vmatprep.mubr.f32.mxu0 0.0
  %4790 = vmatmul.mubr.f32.gmra.mxu0 %v4711
  %v4791 = vpop.f32.mrf.mxu0
  %v4792 = vadd.f32 0.0, %v4791
  %v4793 = vpop.f32.mrf.mxu0
  %4794 = vmatprep.mubr.f32.mxu0 0.0
  %4795 = vmatmul.mubr.f32.gmra.mxu0 %v4714
  %v4796 = vpop.f32.mrf.mxu0
  %v4797 = vadd.f32 0.0, %v4796
  %v4798 = vpop.f32.mrf.mxu0
  %4799 = vmatprep.mubr.f32.mxu0 0.0
  %4800 = vmatmul.mubr.f32.gmra.mxu0 %v4717
  %v4801 = vpop.f32.mrf.mxu0
  %v4802 = vadd.f32 0.0, %v4801
  %v4803 = vpop.f32.mrf.mxu0
  %4804 = vmatprep.mubr.f32.mxu0 0.0
  %4805 = vmatmul.mubr.f32.gmra.mxu0 %v4720
  %v4806 = vpop.f32.mrf.mxu0
  %v4807 = vadd.f32 0.0, %v4806
  %v4808 = vpop.f32.mrf.mxu0
  %4809 = vmatprep.mubr.f32.mxu0 0.0
  %4810 = vmatmul.mubr.f32.gmra.mxu0 %v4723
  %v4811 = vpop.f32.mrf.mxu0
  %v4812 = vadd.f32 0.0, %v4811
  %v4813 = vpop.f32.mrf.mxu0
  %4814 = vdwg.mxu0
  %v4816 = vsel %vm91, %v4654, 0
  %v4819 = vsel %vm91, %v4655, 0
  %v4822 = vsel %vm91, %v4656, 0
  %v4825 = vsel %vm91, %v4657, 0
  %v4828 = vsel %vm91, %v4658, 0
  %4830 = vmatprep.subr.mxu0 0.0
  %4831 = vmatpush1.msra.mxu0 0.0
  %4832 = vmatprep.subr.mxu0 0.0
  %4833 = vmatpush1.msra.mxu0 0.0
  %4834 = vmatprep.subr.mxu0 0.0
  %4835 = vmatpush1.msra.mxu0 0.0
  %4836 = vmatprep.subr.mxu0 0.0
  %4837 = vmatpush1.msra.mxu0 0.0
  %4838 = vmatprep.subr.mxu0 0.0
  %4839 = vmatpush1.msra.mxu0 0.0
  %4840 = vmatprep.subr.mxu0 0.0
  %4841 = vmatpush1.msra.mxu0 0.0
  %4842 = vmatprep.subr.mxu0 0.0
  %4843 = vmatpush1.msra.mxu0 0.0
  %4844 = vmatprep.subr.mxu0 0.0
  %4845 = vmatpush1.msra.mxu0 %v4667
  %4846 = vmatprep.subr.mxu0 0.0
  %4847 = vmatpush1.msra.mxu0 %v4666
  %4848 = vmatprep.subr.mxu0 0.0
  %4849 = vmatpush1.msra.mxu0 %v4665
  %4850 = vmatprep.subr.mxu0 0.0
  %4851 = vmatpush1.msra.mxu0 %v4664
  %4852 = vmatprep.subr.mxu0 0.0
  %4853 = vmatpush1.msra.mxu0 %v4663
  %4854 = vmatprep.subr.mxu0 0.0
  %4855 = vmatpush1.msra.mxu0 %v4662
  %4856 = vmatprep.subr.mxu0 0.0
  %4857 = vmatpush1.msra.mxu0 %v4661
  %4858 = vmatprep.subr.mxu0 0.0
  %4859 = vmatpush1.msra.mxu0 %v4660
  %4860 = vmatprep.subr.mxu0 0.0
  %4861 = vmatpush1.msra.mxu0 %v4659
  %4862 = vmatprep.subr.mxu0 0.0
  %4863 = vmatpush2.msra.mxu0 0.0
  %4864 = vmatprep.subr.mxu0 0.0
  %4865 = vmatpush2.msra.mxu0 0.0
  %4866 = vmatprep.subr.mxu0 0.0
  %4867 = vmatpush2.msra.mxu0 0.0
  %4868 = vmatprep.subr.mxu0 0.0
  %4869 = vmatpush2.msra.mxu0 0.0
  %4870 = vmatprep.subr.mxu0 0.0
  %4871 = vmatpush2.msra.mxu0 0.0
  %4872 = vmatprep.subr.mxu0 0.0
  %4873 = vmatpush2.msra.mxu0 0.0
  %4874 = vmatprep.subr.mxu0 0.0
  %4875 = vmatpush2.msra.mxu0 0.0
  %4876 = vmatprep.subr.mxu0 0.0
  %4877 = vmatpush2.msra.mxu0 0.0
  %4878 = vmatprep.subr.mxu0 0.0
  %4879 = vmatpush2.msra.mxu0 0.0
  %4880 = vmatprep.subr.mxu0 0.0
  %4881 = vmatpush2.msra.mxu0 0.0
  %4882 = vmatprep.subr.mxu0 0.0
  %4883 = vmatpush2.msra.mxu0 0.0
  %4884 = vmatprep.subr.mxu0 0.0
  %4885 = vmatpush2.msra.mxu0 0.0
  %4886 = vmatprep.subr.mxu0 0.0
  %4887 = vmatpush2.msra.mxu0 0.0
  %4888 = vmatprep.subr.mxu0 0.0
  %4889 = vmatpush2.msra.mxu0 0.0
  %4890 = vmatprep.subr.mxu0 0.0
  %4891 = vmatpush2.msra.mxu0 0.0
  %4892 = vmatprep.subr.mxu0 0.0
  %4893 = vmatpush2.msra.mxu0 0.0
  %4894 = vmatprep.mubr.f32.mxu0 0.0
  %4895 = vmatmul.mubr.f32.gmra.mxu0 %v4816
  %v4896 = vpop.f32.mrf.mxu0
  %v4897 = vadd.f32 %v4792, %v4896
  %v4898 = vpop.f32.mrf.mxu0
  %4899 = vmatprep.mubr.f32.mxu0 0.0
  %4900 = vmatmul.mubr.f32.gmra.mxu0 %v4819
  %v4901 = vpop.f32.mrf.mxu0
  %v4902 = vadd.f32 %v4797, %v4901
  %v4903 = vpop.f32.mrf.mxu0
  %4904 = vmatprep.mubr.f32.mxu0 0.0
  %4905 = vmatmul.mubr.f32.gmra.mxu0 %v4822
  %v4906 = vpop.f32.mrf.mxu0
  %v4907 = vadd.f32 %v4802, %v4906
  %v4908 = vpop.f32.mrf.mxu0
  %4909 = vmatprep.mubr.f32.mxu0 0.0
  %4910 = vmatmul.mubr.f32.gmra.mxu0 %v4825
  %v4911 = vpop.f32.mrf.mxu0
  %v4912 = vadd.f32 %v4807, %v4911
  %v4913 = vpop.f32.mrf.mxu0
  %4914 = vmatprep.mubr.f32.mxu0 0.0
  %4915 = vmatmul.mubr.f32.gmra.mxu0 %v4828
  %v4916 = vpop.f32.mrf.mxu0
  %v4917 = vadd.f32 %v4812, %v4916
  %v4918 = vpop.f32.mrf.mxu0
  %4919 = vdwg.mxu0
  %s4920 = scalar_lea.vmem %s8, 80
  %v4921 = vld [vmem:[%s4920] sm:$0xff]
  %v4922 = vld [vmem:[%s4920 + $0x8] sm:$0xff]
  %v4923 = vld [vmem:[%s4920 + $0x10] sm:$0xff]
  %v4924 = vld [vmem:[%s4920 + $0x18] sm:$0xff]
  %v4925 = vld [vmem:[%s4920 + $0x20] sm:$0xff]
  %4926 = vrot.lane.b32.xlu0 %v4659, 126
  %v4927 = vpop.permute.xlu0 %4926
  %4928 = vrot.lane.b32.xlu0 %v4660, 126
  %v4929 = vpop.permute.xlu0 %4928
  %4930 = vrot.lane.b32.xlu0 %v4661, 126
  %v4931 = vpop.permute.xlu0 %4930
  %4932 = vrot.lane.b32.xlu0 %v4662, 126
  %v4933 = vpop.permute.xlu0 %4932
  %4934 = vrot.lane.b32.xlu0 %v4663, 126
  %v4935 = vpop.permute.xlu0 %4934
  %4936 = vrot.lane.b32.xlu0 %v4664, 126
  %v4937 = vpop.permute.xlu0 %4936
  %4938 = vrot.lane.b32.xlu0 %v4665, 126
  %v4939 = vpop.permute.xlu0 %4938
  %4940 = vrot.lane.b32.xlu0 %v4666, 126
  %v4941 = vpop.permute.xlu0 %4940
  %4942 = vrot.lane.b32.xlu0 %v4667, 126
  %v4943 = vpop.permute.xlu0 %4942
  %v4954 = vsel %vm91, %v4921, 0
  %v4957 = vsel %vm91, %v4922, 0
  %v4960 = vsel %vm91, %v4923, 0
  %v4963 = vsel %vm91, %v4924, 0
  %v4966 = vsel %vm91, %v4925, 0
  %4968 = vmatprep.subr.mxu0 0.0
  %4969 = vmatpush1.msra.mxu0 0.0
  %4970 = vmatprep.subr.mxu0 0.0
  %4971 = vmatpush1.msra.mxu0 0.0
  %4972 = vmatprep.subr.mxu0 0.0
  %4973 = vmatpush1.msra.mxu0 0.0
  %4974 = vmatprep.subr.mxu0 0.0
  %4975 = vmatpush1.msra.mxu0 0.0
  %4976 = vmatprep.subr.mxu0 0.0
  %4977 = vmatpush1.msra.mxu0 0.0
  %4978 = vmatprep.subr.mxu0 0.0
  %4979 = vmatpush1.msra.mxu0 0.0
  %4980 = vmatprep.subr.mxu0 0.0
  %4981 = vmatpush1.msra.mxu0 0.0
  %4982 = vmatprep.subr.mxu0 0.0
  %4983 = vmatpush1.msra.mxu0 %v4943
  %4984 = vmatprep.subr.mxu0 0.0
  %4985 = vmatpush1.msra.mxu0 %v4941
  %4986 = vmatprep.subr.mxu0 0.0
  %4987 = vmatpush1.msra.mxu0 %v4939
  %4988 = vmatprep.subr.mxu0 0.0
  %4989 = vmatpush1.msra.mxu0 %v4937
  %4990 = vmatprep.subr.mxu0 0.0
  %4991 = vmatpush1.msra.mxu0 %v4935
  %4992 = vmatprep.subr.mxu0 0.0
  %4993 = vmatpush1.msra.mxu0 %v4933
  %4994 = vmatprep.subr.mxu0 0.0
  %4995 = vmatpush1.msra.mxu0 %v4931
  %4996 = vmatprep.subr.mxu0 0.0
  %4997 = vmatpush1.msra.mxu0 %v4929
  %4998 = vmatprep.subr.mxu0 0.0
  %4999 = vmatpush1.msra.mxu0 %v4927
  %5000 = vmatprep.subr.mxu0 0.0
  %5001 = vmatpush2.msra.mxu0 0.0
  %5002 = vmatprep.subr.mxu0 0.0
  %5003 = vmatpush2.msra.mxu0 0.0
  %5004 = vmatprep.subr.mxu0 0.0
  %5005 = vmatpush2.msra.mxu0 0.0
  %5006 = vmatprep.subr.mxu0 0.0
  %5007 = vmatpush2.msra.mxu0 0.0
  %5008 = vmatprep.subr.mxu0 0.0
  %5009 = vmatpush2.msra.mxu0 0.0
  %5010 = vmatprep.subr.mxu0 0.0
  %5011 = vmatpush2.msra.mxu0 0.0
  %5012 = vmatprep.subr.mxu0 0.0
  %5013 = vmatpush2.msra.mxu0 0.0
  %5014 = vmatprep.subr.mxu0 0.0
  %5015 = vmatpush2.msra.mxu0 0.0
  %5016 = vmatprep.subr.mxu0 0.0
  %5017 = vmatpush2.msra.mxu0 0.0
  %5018 = vmatprep.subr.mxu0 0.0
  %5019 = vmatpush2.msra.mxu0 0.0
  %5020 = vmatprep.subr.mxu0 0.0
  %5021 = vmatpush2.msra.mxu0 0.0
  %5022 = vmatprep.subr.mxu0 0.0
  %5023 = vmatpush2.msra.mxu0 0.0
  %5024 = vmatprep.subr.mxu0 0.0
  %5025 = vmatpush2.msra.mxu0 0.0
  %5026 = vmatprep.subr.mxu0 0.0
  %5027 = vmatpush2.msra.mxu0 0.0
  %5028 = vmatprep.subr.mxu0 0.0
  %5029 = vmatpush2.msra.mxu0 0.0
  %5030 = vmatprep.subr.mxu0 0.0
  %5031 = vmatpush2.msra.mxu0 0.0
  %5032 = vmatprep.mubr.f32.mxu0 0.0
  %5033 = vmatmul.mubr.f32.gmra.mxu0 %v4954
  %v5034 = vpop.f32.mrf.mxu0
  %v5035 = vadd.f32 0.0, %v5034
  %v5036 = vpop.f32.mrf.mxu0
  %5037 = vmatprep.mubr.f32.mxu0 0.0
  %5038 = vmatmul.mubr.f32.gmra.mxu0 %v4957
  %v5039 = vpop.f32.mrf.mxu0
  %v5040 = vadd.f32 0.0, %v5039
  %v5041 = vpop.f32.mrf.mxu0
  %5042 = vmatprep.mubr.f32.mxu0 0.0
  %5043 = vmatmul.mubr.f32.gmra.mxu0 %v4960
  %v5044 = vpop.f32.mrf.mxu0
  %v5045 = vadd.f32 0.0, %v5044
  %v5046 = vpop.f32.mrf.mxu0
  %5047 = vmatprep.mubr.f32.mxu0 0.0
  %5048 = vmatmul.mubr.f32.gmra.mxu0 %v4963
  %v5049 = vpop.f32.mrf.mxu0
  %v5050 = vadd.f32 0.0, %v5049
  %v5051 = vpop.f32.mrf.mxu0
  %5052 = vmatprep.mubr.f32.mxu0 0.0
  %5053 = vmatmul.mubr.f32.gmra.mxu0 %v4966
  %v5054 = vpop.f32.mrf.mxu0
  %v5055 = vadd.f32 0.0, %v5054
  %v5056 = vpop.f32.mrf.mxu0
  %5057 = vdwg.mxu0
  %v5058 = vadd.f32 %v4897, %v5035
  %v5059 = vadd.f32 %v4902, %v5040
  %v5060 = vadd.f32 %v4907, %v5045
  %v5061 = vadd.f32 %v4912, %v5050
  %v5062 = vadd.f32 %v4917, %v5055
  %s5063 = scalar_lea.vmem %s8, 120
  %v5064 = vld [vmem:[%s5063] sm:$0xff]
  %v5065 = vld [vmem:[%s5063 + $0x8] sm:$0xff]
  %v5066 = vld [vmem:[%s5063 + $0x10] sm:$0xff]
  %v5067 = vld [vmem:[%s5063 + $0x18] sm:$0xff]
  %v5068 = vld [vmem:[%s5063 + $0x20] sm:$0xff]
  %5069 = vrot.lane.b32.xlu0 %v4659, 125
  %v5070 = vpop.permute.xlu0 %5069
  %5071 = vrot.lane.b32.xlu0 %v4660, 125
  %v5072 = vpop.permute.xlu0 %5071
  %5073 = vrot.lane.b32.xlu0 %v4661, 125
  %v5074 = vpop.permute.xlu0 %5073
  %5075 = vrot.lane.b32.xlu0 %v4662, 125
  %v5076 = vpop.permute.xlu0 %5075
  %5077 = vrot.lane.b32.xlu0 %v4663, 125
  %v5078 = vpop.permute.xlu0 %5077
  %5079 = vrot.lane.b32.xlu0 %v4664, 125
  %v5080 = vpop.permute.xlu0 %5079
  %5081 = vrot.lane.b32.xlu0 %v4665, 125
  %v5082 = vpop.permute.xlu0 %5081
  %5083 = vrot.lane.b32.xlu0 %v4666, 125
  %v5084 = vpop.permute.xlu0 %5083
  %5085 = vrot.lane.b32.xlu0 %v4667, 125
  %v5086 = vpop.permute.xlu0 %5085
  %v5097 = vsel %vm91, %v5064, 0
  %v5100 = vsel %vm91, %v5065, 0
  %v5103 = vsel %vm91, %v5066, 0
  %v5106 = vsel %vm91, %v5067, 0
  %v5109 = vsel %vm91, %v5068, 0
  %5111 = vmatprep.subr.mxu0 0.0
  %5112 = vmatpush1.msra.mxu0 0.0
  %5113 = vmatprep.subr.mxu0 0.0
  %5114 = vmatpush1.msra.mxu0 0.0
  %5115 = vmatprep.subr.mxu0 0.0
  %5116 = vmatpush1.msra.mxu0 0.0
  %5117 = vmatprep.subr.mxu0 0.0
  %5118 = vmatpush1.msra.mxu0 0.0
  %5119 = vmatprep.subr.mxu0 0.0
  %5120 = vmatpush1.msra.mxu0 0.0
  %5121 = vmatprep.subr.mxu0 0.0
  %5122 = vmatpush1.msra.mxu0 0.0
  %5123 = vmatprep.subr.mxu0 0.0
  %5124 = vmatpush1.msra.mxu0 0.0
  %5125 = vmatprep.subr.mxu0 0.0
  %5126 = vmatpush1.msra.mxu0 %v5086
  %5127 = vmatprep.subr.mxu0 0.0
  %5128 = vmatpush1.msra.mxu0 %v5084
  %5129 = vmatprep.subr.mxu0 0.0
  %5130 = vmatpush1.msra.mxu0 %v5082
  %5131 = vmatprep.subr.mxu0 0.0
  %5132 = vmatpush1.msra.mxu0 %v5080
  %5133 = vmatprep.subr.mxu0 0.0
  %5134 = vmatpush1.msra.mxu0 %v5078
  %5135 = vmatprep.subr.mxu0 0.0
  %5136 = vmatpush1.msra.mxu0 %v5076
  %5137 = vmatprep.subr.mxu0 0.0
  %5138 = vmatpush1.msra.mxu0 %v5074
  %5139 = vmatprep.subr.mxu0 0.0
  %5140 = vmatpush1.msra.mxu0 %v5072
  %5141 = vmatprep.subr.mxu0 0.0
  %5142 = vmatpush1.msra.mxu0 %v5070
  %5143 = vmatprep.subr.mxu0 0.0
  %5144 = vmatpush2.msra.mxu0 0.0
  %5145 = vmatprep.subr.mxu0 0.0
  %5146 = vmatpush2.msra.mxu0 0.0
  %5147 = vmatprep.subr.mxu0 0.0
  %5148 = vmatpush2.msra.mxu0 0.0
  %5149 = vmatprep.subr.mxu0 0.0
  %5150 = vmatpush2.msra.mxu0 0.0
  %5151 = vmatprep.subr.mxu0 0.0
  %5152 = vmatpush2.msra.mxu0 0.0
  %5153 = vmatprep.subr.mxu0 0.0
  %5154 = vmatpush2.msra.mxu0 0.0
  %5155 = vmatprep.subr.mxu0 0.0
  %5156 = vmatpush2.msra.mxu0 0.0
  %5157 = vmatprep.subr.mxu0 0.0
  %5158 = vmatpush2.msra.mxu0 0.0
  %5159 = vmatprep.subr.mxu0 0.0
  %5160 = vmatpush2.msra.mxu0 0.0
  %5161 = vmatprep.subr.mxu0 0.0
  %5162 = vmatpush2.msra.mxu0 0.0
  %5163 = vmatprep.subr.mxu0 0.0
  %5164 = vmatpush2.msra.mxu0 0.0
  %5165 = vmatprep.subr.mxu0 0.0
  %5166 = vmatpush2.msra.mxu0 0.0
  %5167 = vmatprep.subr.mxu0 0.0
  %5168 = vmatpush2.msra.mxu0 0.0
  %5169 = vmatprep.subr.mxu0 0.0
  %5170 = vmatpush2.msra.mxu0 0.0
  %5171 = vmatprep.subr.mxu0 0.0
  %5172 = vmatpush2.msra.mxu0 0.0
  %5173 = vmatprep.subr.mxu0 0.0
  %5174 = vmatpush2.msra.mxu0 0.0
  %5175 = vmatprep.mubr.f32.mxu0 0.0
  %5176 = vmatmul.mubr.f32.gmra.mxu0 %v5097
  %v5177 = vpop.f32.mrf.mxu0
  %v5178 = vadd.f32 0.0, %v5177
  %v5179 = vpop.f32.mrf.mxu0
  %5180 = vmatprep.mubr.f32.mxu0 0.0
  %5181 = vmatmul.mubr.f32.gmra.mxu0 %v5100
  %v5182 = vpop.f32.mrf.mxu0
  %v5183 = vadd.f32 0.0, %v5182
  %v5184 = vpop.f32.mrf.mxu0
  %5185 = vmatprep.mubr.f32.mxu0 0.0
  %5186 = vmatmul.mubr.f32.gmra.mxu0 %v5103
  %v5187 = vpop.f32.mrf.mxu0
  %v5188 = vadd.f32 0.0, %v5187
  %v5189 = vpop.f32.mrf.mxu0
  %5190 = vmatprep.mubr.f32.mxu0 0.0
  %5191 = vmatmul.mubr.f32.gmra.mxu0 %v5106
  %v5192 = vpop.f32.mrf.mxu0
  %v5193 = vadd.f32 0.0, %v5192
  %v5194 = vpop.f32.mrf.mxu0
  %5195 = vmatprep.mubr.f32.mxu0 0.0
  %5196 = vmatmul.mubr.f32.gmra.mxu0 %v5109
  %v5197 = vpop.f32.mrf.mxu0
  %v5198 = vadd.f32 0.0, %v5197
  %v5199 = vpop.f32.mrf.mxu0
  %5200 = vdwg.mxu0
  %v5201 = vadd.f32 %v5058, %v5178
  %v5202 = vadd.f32 %v5059, %v5183
  %v5203 = vadd.f32 %v5060, %v5188
  %v5204 = vadd.f32 %v5061, %v5193
  %v5205 = vadd.f32 %v5062, %v5198
  %s5206 = scalar_lea.vmem %s8, 160
  %v5207 = vld [vmem:[%s5206] sm:$0xff]
  %v5208 = vld [vmem:[%s5206 + $0x8] sm:$0xff]
  %v5209 = vld [vmem:[%s5206 + $0x10] sm:$0xff]
  %v5210 = vld [vmem:[%s5206 + $0x18] sm:$0xff]
  %v5211 = vld [vmem:[%s5206 + $0x20] sm:$0xff]
  %5212 = vrot.lane.b32.xlu0 %v4659, 124
  %v5213 = vpop.permute.xlu0 %5212
  %5214 = vrot.lane.b32.xlu0 %v4660, 124
  %v5215 = vpop.permute.xlu0 %5214
  %5216 = vrot.lane.b32.xlu0 %v4661, 124
  %v5217 = vpop.permute.xlu0 %5216
  %5218 = vrot.lane.b32.xlu0 %v4662, 124
  %v5219 = vpop.permute.xlu0 %5218
  %5220 = vrot.lane.b32.xlu0 %v4663, 124
  %v5221 = vpop.permute.xlu0 %5220
  %5222 = vrot.lane.b32.xlu0 %v4664, 124
  %v5223 = vpop.permute.xlu0 %5222
  %5224 = vrot.lane.b32.xlu0 %v4665, 124
  %v5225 = vpop.permute.xlu0 %5224
  %5226 = vrot.lane.b32.xlu0 %v4666, 124
  %v5227 = vpop.permute.xlu0 %5226
  %5228 = vrot.lane.b32.xlu0 %v4667, 124
  %v5229 = vpop.permute.xlu0 %5228
  %v5240 = vsel %vm91, %v5207, 0
  %v5243 = vsel %vm91, %v5208, 0
  %v5246 = vsel %vm91, %v5209, 0
  %v5249 = vsel %vm91, %v5210, 0
  %v5252 = vsel %vm91, %v5211, 0
  %5254 = vmatprep.subr.mxu0 0.0
  %5255 = vmatpush1.msra.mxu0 0.0
  %5256 = vmatprep.subr.mxu0 0.0
  %5257 = vmatpush1.msra.mxu0 0.0
  %5258 = vmatprep.subr.mxu0 0.0
  %5259 = vmatpush1.msra.mxu0 0.0
  %5260 = vmatprep.subr.mxu0 0.0
  %5261 = vmatpush1.msra.mxu0 0.0
  %5262 = vmatprep.subr.mxu0 0.0
  %5263 = vmatpush1.msra.mxu0 0.0
  %5264 = vmatprep.subr.mxu0 0.0
  %5265 = vmatpush1.msra.mxu0 0.0
  %5266 = vmatprep.subr.mxu0 0.0
  %5267 = vmatpush1.msra.mxu0 0.0
  %5268 = vmatprep.subr.mxu0 0.0
  %5269 = vmatpush1.msra.mxu0 %v5229
  %5270 = vmatprep.subr.mxu0 0.0
  %5271 = vmatpush1.msra.mxu0 %v5227
  %5272 = vmatprep.subr.mxu0 0.0
  %5273 = vmatpush1.msra.mxu0 %v5225
  %5274 = vmatprep.subr.mxu0 0.0
  %5275 = vmatpush1.msra.mxu0 %v5223
  %5276 = vmatprep.subr.mxu0 0.0
  %5277 = vmatpush1.msra.mxu0 %v5221
  %5278 = vmatprep.subr.mxu0 0.0
  %5279 = vmatpush1.msra.mxu0 %v5219
  %5280 = vmatprep.subr.mxu0 0.0
  %5281 = vmatpush1.msra.mxu0 %v5217
  %5282 = vmatprep.subr.mxu0 0.0
  %5283 = vmatpush1.msra.mxu0 %v5215
  %5284 = vmatprep.subr.mxu0 0.0
  %5285 = vmatpush1.msra.mxu0 %v5213
  %5286 = vmatprep.subr.mxu0 0.0
  %5287 = vmatpush2.msra.mxu0 0.0
  %5288 = vmatprep.subr.mxu0 0.0
  %5289 = vmatpush2.msra.mxu0 0.0
  %5290 = vmatprep.subr.mxu0 0.0
  %5291 = vmatpush2.msra.mxu0 0.0
  %5292 = vmatprep.subr.mxu0 0.0
  %5293 = vmatpush2.msra.mxu0 0.0
  %5294 = vmatprep.subr.mxu0 0.0
  %5295 = vmatpush2.msra.mxu0 0.0
  %5296 = vmatprep.subr.mxu0 0.0
  %5297 = vmatpush2.msra.mxu0 0.0
  %5298 = vmatprep.subr.mxu0 0.0
  %5299 = vmatpush2.msra.mxu0 0.0
  %5300 = vmatprep.subr.mxu0 0.0
  %5301 = vmatpush2.msra.mxu0 0.0
  %5302 = vmatprep.subr.mxu0 0.0
  %5303 = vmatpush2.msra.mxu0 0.0
  %5304 = vmatprep.subr.mxu0 0.0
  %5305 = vmatpush2.msra.mxu0 0.0
  %5306 = vmatprep.subr.mxu0 0.0
  %5307 = vmatpush2.msra.mxu0 0.0
  %5308 = vmatprep.subr.mxu0 0.0
  %5309 = vmatpush2.msra.mxu0 0.0
  %5310 = vmatprep.subr.mxu0 0.0
  %5311 = vmatpush2.msra.mxu0 0.0
  %5312 = vmatprep.subr.mxu0 0.0
  %5313 = vmatpush2.msra.mxu0 0.0
  %5314 = vmatprep.subr.mxu0 0.0
  %5315 = vmatpush2.msra.mxu0 0.0
  %5316 = vmatprep.subr.mxu0 0.0
  %5317 = vmatpush2.msra.mxu0 0.0
  %5318 = vmatprep.mubr.f32.mxu0 0.0
  %5319 = vmatmul.mubr.f32.gmra.mxu0 %v5240
  %v5320 = vpop.f32.mrf.mxu0
  %v5321 = vadd.f32 0.0, %v5320
  %v5322 = vpop.f32.mrf.mxu0
  %5323 = vmatprep.mubr.f32.mxu0 0.0
  %5324 = vmatmul.mubr.f32.gmra.mxu0 %v5243
  %v5325 = vpop.f32.mrf.mxu0
  %v5326 = vadd.f32 0.0, %v5325
  %v5327 = vpop.f32.mrf.mxu0
  %5328 = vmatprep.mubr.f32.mxu0 0.0
  %5329 = vmatmul.mubr.f32.gmra.mxu0 %v5246
  %v5330 = vpop.f32.mrf.mxu0
  %v5331 = vadd.f32 0.0, %v5330
  %v5332 = vpop.f32.mrf.mxu0
  %5333 = vmatprep.mubr.f32.mxu0 0.0
  %5334 = vmatmul.mubr.f32.gmra.mxu0 %v5249
  %v5335 = vpop.f32.mrf.mxu0
  %v5336 = vadd.f32 0.0, %v5335
  %v5337 = vpop.f32.mrf.mxu0
  %5338 = vmatprep.mubr.f32.mxu0 0.0
  %5339 = vmatmul.mubr.f32.gmra.mxu0 %v5252
  %v5340 = vpop.f32.mrf.mxu0
  %v5341 = vadd.f32 0.0, %v5340
  %v5342 = vpop.f32.mrf.mxu0
  %5343 = vdwg.mxu0
  %v5344 = vadd.f32 %v5201, %v5321
  %v5345 = vadd.f32 %v5202, %v5326
  %v5346 = vadd.f32 %v5203, %v5331
  %v5347 = vadd.f32 %v5204, %v5336
  %v5348 = vadd.f32 %v5205, %v5341
  %v5349 = vadd.f32 %v5344, 1.0
  %v5350 = vadd.f32 %v5345, 1.0
  %v5351 = vadd.f32 %v5346, 1.0
  %v5352 = vadd.f32 %v5347, 1.0
  %v5353 = vadd.f32 %v5348, 1.0
  %vm5354 = vcmask 39936
  %v5355 = vsel %vm5354, %v5349, 0.0
  %v5356 = vsel %vm5354, %v5350, 0.0
  %v5357 = vadd.f32 %v5355, %v5356
  %v5358 = vsel %vm5354, %v5351, 0.0
  %v5359 = vadd.f32 %v5357, %v5358
  %v5360 = vsel %vm5354, %v5352, 0.0
  %v5361 = vadd.f32 %v5359, %v5360
  %v5362 = vsel %vm5354, %v5353, 0.0
  %v5363 = vadd.f32 %v5361, %v5362
  %v5364 = vsel %vm5354, %v5363, 0.0
  %5365 = vadd.xlane.f32.xlu0 %v5364
  %v5366 = vpop.xlane.xlu0 %5365
  %v5367 = vmul.f32 %v5366, 0.04
  %v5368 = vld [vmem:[%s9] sm:$0xff]
  %v5369 = vld [vmem:[%s10] sm:$0xff]
  %vm5370 = vcmask 64512
  %v5372 = vsel %vm5370, %v5368, 0
  %5374 = vmatprep.subr.mxu0 0.0
  %5375 = vmatpush1.msra.mxu0 0.0
  %5376 = vmatprep.subr.mxu0 0.0
  %5377 = vmatpush1.msra.mxu0 0.0
  %5378 = vmatprep.subr.mxu0 0.0
  %5379 = vmatpush1.msra.mxu0 0.0
  %5380 = vmatprep.subr.mxu0 0.0
  %5381 = vmatpush1.msra.mxu0 0.0
  %5382 = vmatprep.subr.mxu0 0.0
  %5383 = vmatpush1.msra.mxu0 0.0
  %5384 = vmatprep.subr.mxu0 0.0
  %5385 = vmatpush1.msra.mxu0 0.0
  %5386 = vmatprep.subr.mxu0 0.0
  %5387 = vmatpush1.msra.mxu0 0.0
  %5388 = vmatprep.subr.mxu0 0.0
  %5389 = vmatpush1.msra.mxu0 0.0
  %5390 = vmatprep.subr.mxu0 0.0
  %5391 = vmatpush1.msra.mxu0 0.0
  %5392 = vmatprep.subr.mxu0 0.0
  %5393 = vmatpush1.msra.mxu0 0.0
  %5394 = vmatprep.subr.mxu0 0.0
  %5395 = vmatpush1.msra.mxu0 0.0
  %5396 = vmatprep.subr.mxu0 0.0
  %5397 = vmatpush1.msra.mxu0 0.0
  %5398 = vmatprep.subr.mxu0 0.0
  %5399 = vmatpush1.msra.mxu0 0.0
  %5400 = vmatprep.subr.mxu0 0.0
  %5401 = vmatpush1.msra.mxu0 0.0
  %5402 = vmatprep.subr.mxu0 0.0
  %5403 = vmatpush1.msra.mxu0 0.0
  %5404 = vmatprep.subr.mxu0 0.0
  %5405 = vmatpush1.msra.mxu0 %v5367
  %5406 = vmatprep.subr.mxu0 0.0
  %5407 = vmatpush2.msra.mxu0 0.0
  %5408 = vmatprep.subr.mxu0 0.0
  %5409 = vmatpush2.msra.mxu0 0.0
  %5410 = vmatprep.subr.mxu0 0.0
  %5411 = vmatpush2.msra.mxu0 0.0
  %5412 = vmatprep.subr.mxu0 0.0
  %5413 = vmatpush2.msra.mxu0 0.0
  %5414 = vmatprep.subr.mxu0 0.0
  %5415 = vmatpush2.msra.mxu0 0.0
  %5416 = vmatprep.subr.mxu0 0.0
  %5417 = vmatpush2.msra.mxu0 0.0
  %5418 = vmatprep.subr.mxu0 0.0
  %5419 = vmatpush2.msra.mxu0 0.0
  %5420 = vmatprep.subr.mxu0 0.0
  %5421 = vmatpush2.msra.mxu0 0.0
  %5422 = vmatprep.subr.mxu0 0.0
  %5423 = vmatpush2.msra.mxu0 0.0
  %5424 = vmatprep.subr.mxu0 0.0
  %5425 = vmatpush2.msra.mxu0 0.0
  %5426 = vmatprep.subr.mxu0 0.0
  %5427 = vmatpush2.msra.mxu0 0.0
  %5428 = vmatprep.subr.mxu0 0.0
  %5429 = vmatpush2.msra.mxu0 0.0
  %5430 = vmatprep.subr.mxu0 0.0
  %5431 = vmatpush2.msra.mxu0 0.0
  %5432 = vmatprep.subr.mxu0 0.0
  %5433 = vmatpush2.msra.mxu0 0.0
  %5434 = vmatprep.subr.mxu0 0.0
  %5435 = vmatpush2.msra.mxu0 0.0
  %5436 = vmatprep.subr.mxu0 0.0
  %5437 = vmatpush2.msra.mxu0 0.0
  %5438 = vmatprep.mubr.f32.mxu0 0.0
  %5439 = vmatmul.mubr.f32.gmra.mxu0 %v5372
  %v5440 = vpop.f32.mrf.mxu0
  %v5441 = vadd.f32 %v5369, %v5440
  %v5442 = vpop.f32.mrf.mxu0
  %5443 = vdwg.mxu0
  %vm5444 = vcmask 7168
  %5445 = vst.msk [vmem:[%s11] sm:$0xff] %vm5444, %v5441
  // Predicated region
  $region46: #{convolution_model_forward.1} parent=0 // pred_check
    _
  $region47: #{convolution_model_forward.1} parent=0 // pred_check_branch
    %5447 = sbr.rel (0) target = $region49
  $region48: #{convolution_model_forward.1} parent=0 // pred_region
    _
  $region49: #{convolution_model_forward.1} parent=0 // pred_fallthru
    _
  // Predicated region
  $region50: #{convolution_model_forward.1} parent=0 // pred_check
    _
  $region51: #{convolution_model_forward.1} parent=0 // pred_check_branch
    %5449 = sbr.rel (0) target = $region53
  $region52: #{convolution_model_forward.1} parent=0 // pred_region
    _
  $region53: #{convolution_model_forward.1} parent=0 // pred_fallthru
    _

</llo_original>
